<compile_context>
chip_gen: v7x
topology: tpu7x:2x2x1
jax: 0.10.0
libtpu: 0.0.40
codegen_flags: <defaults>
</compile_context>

<pallas_src>
import functools

import jax
import jax.numpy as jnp
from jax.experimental import pallas as pl
from jax.experimental.pallas import tpu as pltpu


# ---------------------------------------------------------------------------
# Helpers
# ---------------------------------------------------------------------------

def _round_up(n, m):
    return ((n + m - 1) // m) * m


def _pad2(a, rows, cols):
    """Zero-pad a 2-D array to (rows, cols)."""
    out = jnp.zeros((rows, cols), a.dtype)
    return out.at[: a.shape[0], : a.shape[1]].set(a)


# ---------------------------------------------------------------------------
# Fused forward kernel (one grid step = one batch tile of TM rows)
# ---------------------------------------------------------------------------

def _cvae_fused_kernel(
    # batch-tiled activations
    x_ref, c_ref, eps_ref,
    # VMEM-resident weights (bf16, zero-padded)
    w_e0x_ref, w_e0c_ref, w_e1_ref, w_e2_ref,
    w_mu_ref, w_lv_ref,
    w_d0z_ref, w_d0c_ref, w_d1_ref, w_d2_ref, w_d3_ref,
    # packed biases (f32)
    b_ref,
    # outputs
    xhat_ref, mu_ref, lv_ref,
    *, h_pad, z_pad, d_pad,
):
    bf16 = jnp.bfloat16

    def mm(a, w_ref):
        # bf16 x bf16 matmul on the MXU with f32 accumulation.
        return jnp.dot(a, w_ref[...], preferred_element_type=jnp.float32)

    x = x_ref[...]            # (TM, D_pad)  bf16
    c = c_ref[...]            # (TM, C_pad)  bf16

    # ---- encoder: Linear+ReLU x3 (concat folded into a split matmul) -------
    h = mm(x, w_e0x_ref) + mm(c, w_e0c_ref) + b_ref[0:1, :h_pad]
    h = jnp.maximum(h, 0.0)
    h = mm(h.astype(bf16), w_e1_ref) + b_ref[1:2, :h_pad]
    h = jnp.maximum(h, 0.0)
    h = mm(h.astype(bf16), w_e2_ref) + b_ref[2:3, :h_pad]
    h = jnp.maximum(h, 0.0)
    h16 = h.astype(bf16)

    # ---- mu / logvar heads + reparameterization (fused, stays in VMEM) -----
    mu = mm(h16, w_mu_ref) + b_ref[3:4, :z_pad]          # (TM, Z_pad) f32
    lv = mm(h16, w_lv_ref) + b_ref[4:5, :z_pad]          # (TM, Z_pad) f32
    mu_ref[...] = mu
    lv_ref[...] = lv
    # z = mu + eps * exp(logvar / 2); padded lanes: mu=0, eps=0 -> z=0.
    z = mu + eps_ref[...] * jnp.exp(lv * 0.5)

    # ---- decoder: Linear+ReLU x3, Linear+Sigmoid ---------------------------
    z16 = z.astype(bf16)
    d = mm(z16, w_d0z_ref) + mm(c, w_d0c_ref) + b_ref[5:6, :h_pad]
    d = jnp.maximum(d, 0.0)
    d = mm(d.astype(bf16), w_d1_ref) + b_ref[6:7, :h_pad]
    d = jnp.maximum(d, 0.0)
    d = mm(d.astype(bf16), w_d2_ref) + b_ref[7:8, :h_pad]
    d = jnp.maximum(d, 0.0)
    xh = mm(d.astype(bf16), w_d3_ref) + b_ref[8:9, :d_pad]
    xhat_ref[...] = jax.nn.sigmoid(xh)                   # f32, lane-dense store


# ---------------------------------------------------------------------------
# Parameter initialization (deterministic; mimics nn.Linear default init on the
# REAL fan_in, then zero-pads to lane/MXU-aligned shapes and casts to bf16)
# ---------------------------------------------------------------------------

def init_cvae_params(key, input_size, num_classes=10, latent_size=15,
                     hidden_dim=400):
    D, C, Z, H = input_size, num_classes, latent_size, hidden_dim
    D_pad = _round_up(D, 128)
    C_pad = _round_up(C, 128)
    Z_pad = _round_up(Z, 128)
    H_pad = _round_up(H, 128)
    bias_w = max(H_pad, D_pad, Z_pad)

    def lin(k, fan_in, shape):
        kw, kb = jax.random.split(k)
        bound = 1.0 / jnp.sqrt(jnp.float32(fan_in))
        w = jax.random.uniform(kw, shape, jnp.float32, -bound, bound)
        b = jax.random.uniform(kb, (shape[1],), jnp.float32, -bound, bound)
        return w, b

    keys = jax.random.split(key, 9)
    w_e0, b_e0 = lin(keys[0], D + C, (D + C, H))
    w_e1, b_e1 = lin(keys[1], H, (H, H))
    w_e2, b_e2 = lin(keys[2], H, (H, H))
    w_mu, b_mu = lin(keys[3], H, (H, Z))
    w_lv, b_lv = lin(keys[4], H, (H, Z))
    w_d0, b_d0 = lin(keys[5], Z + C, (Z + C, H))
    w_d1, b_d1 = lin(keys[6], H, (H, H))
    w_d2, b_d2 = lin(keys[7], H, (H, H))
    w_d3, b_d3 = lin(keys[8], H, (H, D))

    bf16 = jnp.bfloat16
    params = {
        # first encoder layer split into the x-part and the c-part (no concat)
        "w_e0x": _pad2(w_e0[:D], D_pad, H_pad).astype(bf16),
        "w_e0c": _pad2(w_e0[D:], C_pad, H_pad).astype(bf16),
        "w_e1": _pad2(w_e1, H_pad, H_pad).astype(bf16),
        "w_e2": _pad2(w_e2, H_pad, H_pad).astype(bf16),
        "w_mu": _pad2(w_mu, H_pad, Z_pad).astype(bf16),
        "w_lv": _pad2(w_lv, H_pad, Z_pad).astype(bf16),
        # first decoder layer split into the z-part and the c-part (no concat)
        "w_d0z": _pad2(w_d0[:Z], Z_pad, H_pad).astype(bf16),
        "w_d0c": _pad2(w_d0[Z:], C_pad, H_pad).astype(bf16),
        "w_d1": _pad2(w_d1, H_pad, H_pad).astype(bf16),
        "w_d2": _pad2(w_d2, H_pad, H_pad).astype(bf16),
        "w_d3": _pad2(w_d3, H_pad, D_pad).astype(bf16),
    }
    # Packed biases: one VMEM-resident f32 buffer, one row per layer.
    b_pack = jnp.zeros((16, bias_w), jnp.float32)
    for i, b in enumerate([b_e0, b_e1, b_e2, b_mu, b_lv,
                           b_d0, b_d1, b_d2, b_d3]):
        b_pack = b_pack.at[i, : b.shape[0]].set(b)
    params["b_pack"] = b_pack
    return params


# ---------------------------------------------------------------------------
# Forward wrapper (pads/tiles the batch, launches the single fused kernel)
# ---------------------------------------------------------------------------

def cvae_forward(params, x, c, eps):
    """
    x:   (N, 1, H, W) f32;  c: (N, C) one-hot f32;  eps: (N, Z) f32 noise
    Returns (x_hat (N,1,H,W) f32, mu (N,Z) f32, logvar (N,Z) f32).
    """
    N = x.shape[0]
    x_flat = x.reshape(N, -1)
    D = x_flat.shape[1]
    C = c.shape[1]
    Z = eps.shape[1]

    # Padded dims derived statically from the weight shapes.
    D_pad = params["w_d3"].shape[1]
    C_pad = params["w_e0c"].shape[0]
    Z_pad = params["w_mu"].shape[1]
    H_pad = params["w_e1"].shape[0]

    # Batch tile: >= 8 rows (sublane), up to 256-row tiles for large batches
    # (256 feeds the v6e/v7x 256-wide MXU; also fine on v5e's 128-wide MXU).
    TM = 256 if N >= 256 else _round_up(N, 8)
    N_pad = _round_up(N, TM)

    def pad_in(a, rows, cols, dtype):
        out = jnp.zeros((rows, cols), dtype)
        return out.at[: a.shape[0], : a.shape[1]].set(a.astype(dtype))

    x_p = pad_in(x_flat, N_pad, D_pad, jnp.bfloat16)
    c_p = pad_in(c, N_pad, C_pad, jnp.bfloat16)
    eps_p = pad_in(eps, N_pad, Z_pad, jnp.float32)   # padded lanes zero => z padded lanes zero

    weight_keys = ("w_e0x", "w_e0c", "w_e1", "w_e2", "w_mu", "w_lv",
                   "w_d0z", "w_d0c", "w_d1", "w_d2", "w_d3")
    weights = [params[k] for k in weight_keys]
    b_pack = params["b_pack"]

    kernel = functools.partial(_cvae_fused_kernel,
                               h_pad=H_pad, z_pad=Z_pad, d_pad=D_pad)

    def resident(shape):                 # VMEM-resident across the whole grid
        return pl.BlockSpec(shape, lambda i: (0, 0))

    def row_tile(cols):                  # batch-tiled activations / outputs
        return pl.BlockSpec((TM, cols), lambda i: (i, 0))

    grid = (N_pad // TM,)

    xhat_p, mu_p, lv_p = pl.pallas_call(
        kernel,
        out_shape=(
            jax.ShapeDtypeStruct((N_pad, D_pad), jnp.float32),
            jax.ShapeDtypeStruct((N_pad, Z_pad), jnp.float32),
            jax.ShapeDtypeStruct((N_pad, Z_pad), jnp.float32),
        ),
        grid_spec=pltpu.PrefetchScalarGridSpec(
            num_scalar_prefetch=0,
            grid=grid,
            in_specs=[row_tile(D_pad), row_tile(C_pad), row_tile(Z_pad)]
                     + [resident(w.shape) for w in weights]
                     + [resident(b_pack.shape)],
            out_specs=[row_tile(D_pad), row_tile(Z_pad), row_tile(Z_pad)],
        ),
        compiler_params=pltpu.CompilerParams(
            dimension_semantics=("parallel",),        # shard batch tiles across TCs
            vmem_limit_bytes=32 * 1024 * 1024,        # ~11 MB used; safe on v5e/v6e/v7x
        ),
    )(x_p, c_p, eps_p, *weights, b_pack)

    x_hat = xhat_p[:N, :D].reshape(x.shape)   # glue: strip padding, back to NCHW
    mu = mu_p[:N, :Z]
    logvar = lv_p[:N, :Z]
    return x_hat, mu, logvar


# ---------------------------------------------------------------------------
# Pure-JAX reference (same padded bf16 weights, f32 math) for a sanity check
# ---------------------------------------------------------------------------

def _reference_forward(params, x, c, eps):
    f32 = jnp.float32
    N = x.shape[0]
    xf0 = x.reshape(N, -1).astype(f32)
    D, C, Z = xf0.shape[1], c.shape[1], eps.shape[1]
    w = {k: v.astype(f32) for k, v in params.items() if k.startswith("w_")}
    b = params["b_pack"]
    D_pad, C_pad = w["w_d3"].shape[1], w["w_e0c"].shape[0]
    Z_pad, H_pad = w["w_mu"].shape[1], w["w_e1"].shape[0]
    xf = jnp.zeros((N, D_pad), f32).at[:, :D].set(xf0)
    cf = jnp.zeros((N, C_pad), f32).at[:, :C].set(c.astype(f32))
    ef = jnp.zeros((N, Z_pad), f32).at[:, :Z].set(eps.astype(f32))
    h = jnp.maximum(xf @ w["w_e0x"] + cf @ w["w_e0c"] + b[0, :H_pad], 0.0)
    h = jnp.maximum(h @ w["w_e1"] + b[1, :H_pad], 0.0)
    h = jnp.maximum(h @ w["w_e2"] + b[2, :H_pad], 0.0)
    mu = h @ w["w_mu"] + b[3, :Z_pad]
    lv = h @ w["w_lv"] + b[4, :Z_pad]
    z = mu + ef * jnp.exp(lv * 0.5)
    d = jnp.maximum(z @ w["w_d0z"] + cf @ w["w_d0c"] + b[5, :H_pad], 0.0)
    d = jnp.maximum(d @ w["w_d1"] + b[6, :H_pad], 0.0)
    d = jnp.maximum(d @ w["w_d2"] + b[7, :H_pad], 0.0)
    xh = jax.nn.sigmoid(d @ w["w_d3"] + b[8, :D_pad])
    return xh[:, :D].reshape(x.shape), mu[:, :Z], lv[:, :Z]


# ---------------------------------------------------------------------------
# Main
# ---------------------------------------------------------------------------

if __name__ == "__main__":
    # Small shapes consistent with the module's forward: x (N,1,H,W), c (N,C).
    N, H_IMG, W_IMG = 2, 16, 16
    INPUT_SIZE = H_IMG * W_IMG        # 256
    NUM_CLASSES = 10
    LATENT_SIZE = 15
    HIDDEN_DIM = 400

    root = jax.random.PRNGKey(0)
    k_params, k_x, k_c, k_eps = jax.random.split(root, 4)

    params = init_cvae_params(k_params, INPUT_SIZE, NUM_CLASSES, LATENT_SIZE,
                              HIDDEN_DIM)

    x = jax.random.uniform(k_x, (N, 1, H_IMG, W_IMG), jnp.float32)
    labels = jax.random.randint(k_c, (N,), 0, NUM_CLASSES)
    c = jax.nn.one_hot(labels, NUM_CLASSES, dtype=jnp.float32)
    # TODO(synk): torch.normal is drawn inside reparametrize in PyTorch; here the
    # standard-normal eps is passed in explicitly for determinism/testability.
    eps = jax.random.normal(k_eps, (N, LATENT_SIZE), jnp.float32)

    x_hat, mu, logvar = jax.jit(cvae_forward)(params, x, c, eps)
    jax.block_until_ready((x_hat, mu, logvar))

    # Shape / sanity checks
    assert x_hat.shape == x.shape
    assert mu.shape == (N, LATENT_SIZE)
    assert logvar.shape == (N, LATENT_SIZE)
    assert bool(jnp.all(jnp.isfinite(x_hat)))
    assert bool(jnp.all(jnp.isfinite(mu))) and bool(jnp.all(jnp.isfinite(logvar)))
    assert bool(jnp.all((x_hat >= 0.0) & (x_hat <= 1.0)))   # sigmoid range

    # Numerical check vs. pure-JAX reference (bf16 matmul operands => loose tol)
    xr, mr, lr = _reference_forward(params, x, c, eps)
    assert float(jnp.max(jnp.abs(x_hat - xr))) < 5e-2
    assert float(jnp.max(jnp.abs(mu - mr))) < 5e-2
    assert float(jnp.max(jnp.abs(logvar - lr))) < 5e-2

    print("KERNEL_OK")
</pallas_src>

<mosaic_0001>
module attributes {stable_mosaic.version = 11 : i64} {
  func.func @_cvae_fused_kernel(%arg0: i32, %arg1: memref<8x256xbf16, #tpu.memory_space<vmem>>, %arg2: memref<8x128xbf16, #tpu.memory_space<vmem>>, %arg3: memref<8x128xf32, #tpu.memory_space<vmem>>, %arg4: memref<256x512xbf16, #tpu.memory_space<vmem>>, %arg5: memref<128x512xbf16, #tpu.memory_space<vmem>>, %arg6: memref<512x512xbf16, #tpu.memory_space<vmem>>, %arg7: memref<512x512xbf16, #tpu.memory_space<vmem>>, %arg8: memref<512x128xbf16, #tpu.memory_space<vmem>>, %arg9: memref<512x128xbf16, #tpu.memory_space<vmem>>, %arg10: memref<128x512xbf16, #tpu.memory_space<vmem>>, %arg11: memref<128x512xbf16, #tpu.memory_space<vmem>>, %arg12: memref<512x512xbf16, #tpu.memory_space<vmem>>, %arg13: memref<512x512xbf16, #tpu.memory_space<vmem>>, %arg14: memref<512x256xbf16, #tpu.memory_space<vmem>>, %arg15: memref<16x512xf32, #tpu.memory_space<vmem>>, %arg16: memref<8x256xf32, #tpu.memory_space<vmem>>, %arg17: memref<8x128xf32, #tpu.memory_space<vmem>>, %arg18: memref<8x128xf32, #tpu.memory_space<vmem>>) attributes {dimension_semantics = [#tpu.dimension_semantics<parallel>], iteration_bounds = array<i64: 1>, scalar_prefetch = 0 : i64, scratch_operands = 0 : i64, tpu.core_type = #tpu.core_type<tc>, window_params = [{transform_indices = @transform_0, window_bounds = array<i64: 8, 256>}, {transform_indices = @transform_1, window_bounds = array<i64: 8, 128>}, {transform_indices = @transform_2, window_bounds = array<i64: 8, 128>}, {pipeline_mode = #tpu.pipeline_mode<synchronous>, transform_indices = @transform_3, window_bounds = array<i64: 256, 512>}, {pipeline_mode = #tpu.pipeline_mode<synchronous>, transform_indices = @transform_4, window_bounds = array<i64: 128, 512>}, {pipeline_mode = #tpu.pipeline_mode<synchronous>, transform_indices = @transform_5, window_bounds = array<i64: 512, 512>}, {pipeline_mode = #tpu.pipeline_mode<synchronous>, transform_indices = @transform_6, window_bounds = array<i64: 512, 512>}, {pipeline_mode = #tpu.pipeline_mode<synchronous>, transform_indices = @transform_7, window_bounds = array<i64: 512, 128>}, {pipeline_mode = #tpu.pipeline_mode<synchronous>, transform_indices = @transform_8, window_bounds = array<i64: 512, 128>}, {pipeline_mode = #tpu.pipeline_mode<synchronous>, transform_indices = @transform_9, window_bounds = array<i64: 128, 512>}, {pipeline_mode = #tpu.pipeline_mode<synchronous>, transform_indices = @transform_10, window_bounds = array<i64: 128, 512>}, {pipeline_mode = #tpu.pipeline_mode<synchronous>, transform_indices = @transform_11, window_bounds = array<i64: 512, 512>}, {pipeline_mode = #tpu.pipeline_mode<synchronous>, transform_indices = @transform_12, window_bounds = array<i64: 512, 512>}, {pipeline_mode = #tpu.pipeline_mode<synchronous>, transform_indices = @transform_13, window_bounds = array<i64: 512, 256>}, {pipeline_mode = #tpu.pipeline_mode<synchronous>, transform_indices = @transform_14, window_bounds = array<i64: 16, 512>}, {transform_indices = @transform_15, window_bounds = array<i64: 8, 256>}, {transform_indices = @transform_16, window_bounds = array<i64: 8, 128>}, {transform_indices = @transform_17, window_bounds = array<i64: 8, 128>}]} {
    %c0 = arith.constant 0 : index
    %c0_0 = arith.constant 0 : index
    %0 = vector.load %arg1[%c0, %c0_0] : memref<8x256xbf16, #tpu.memory_space<vmem>>, vector<8x256xbf16>
    %c0_1 = arith.constant 0 : index
    %c0_2 = arith.constant 0 : index
    %1 = vector.load %arg2[%c0_1, %c0_2] : memref<8x128xbf16, #tpu.memory_space<vmem>>, vector<8x128xbf16>
    %c0_3 = arith.constant 0 : index
    %c0_4 = arith.constant 0 : index
    %2 = vector.load %arg4[%c0_3, %c0_4] : memref<256x512xbf16, #tpu.memory_space<vmem>>, vector<256x512xbf16>
    %cst = arith.constant dense<0.000000e+00> : vector<8x512xf32>
    %3 = tpu.matmul %0, %2, %cst {dimension_numbers = #tpu.dot_dimension_numbers<[1], [0], [0], [1], [0, 0, 1, 1], [], []>} : vector<8x256xbf16>, vector<256x512xbf16>, vector<8x512xf32> -> vector<8x512xf32>
    %c0_5 = arith.constant 0 : index
    %c0_6 = arith.constant 0 : index
    %4 = vector.load %arg5[%c0_5, %c0_6] : memref<128x512xbf16, #tpu.memory_space<vmem>>, vector<128x512xbf16>
    %cst_7 = arith.constant dense<0.000000e+00> : vector<8x512xf32>
    %5 = tpu.matmul %1, %4, %cst_7 {dimension_numbers = #tpu.dot_dimension_numbers<[1], [0], [0], [1], [0, 0, 1, 1], [], []>} : vector<8x128xbf16>, vector<128x512xbf16>, vector<8x512xf32> -> vector<8x512xf32>
    %6 = arith.addf %3, %5 : vector<8x512xf32>
    %c0_8 = arith.constant 0 : index
    %c0_9 = arith.constant 0 : index
    %7 = vector.load %arg15[%c0_8, %c0_9] : memref<16x512xf32, #tpu.memory_space<vmem>>, vector<1x512xf32>
    %8 = vector.broadcast %7 : vector<1x512xf32> to vector<8x512xf32>
    %9 = arith.addf %6, %8 : vector<8x512xf32>
    %cst_10 = arith.constant 0.000000e+00 : f32
    %10 = vector.broadcast %cst_10 : f32 to vector<8x512xf32>
    %11 = arith.maximumf %9, %10 : vector<8x512xf32>
    %12 = arith.truncf %11 : vector<8x512xf32> to vector<8x512xbf16>
    %c0_11 = arith.constant 0 : index
    %c0_12 = arith.constant 0 : index
    %13 = vector.load %arg6[%c0_11, %c0_12] : memref<512x512xbf16, #tpu.memory_space<vmem>>, vector<512x512xbf16>
    %cst_13 = arith.constant dense<0.000000e+00> : vector<8x512xf32>
    %14 = tpu.matmul %12, %13, %cst_13 {dimension_numbers = #tpu.dot_dimension_numbers<[1], [0], [0], [1], [0, 0, 1, 1], [], []>} : vector<8x512xbf16>, vector<512x512xbf16>, vector<8x512xf32> -> vector<8x512xf32>
    %c1 = arith.constant 1 : index
    %c0_14 = arith.constant 0 : index
    %15 = vector.load %arg15[%c1, %c0_14] : memref<16x512xf32, #tpu.memory_space<vmem>>, vector<1x512xf32>
    %16 = vector.broadcast %15 : vector<1x512xf32> to vector<8x512xf32>
    %17 = arith.addf %14, %16 : vector<8x512xf32>
    %cst_15 = arith.constant 0.000000e+00 : f32
    %18 = vector.broadcast %cst_15 : f32 to vector<8x512xf32>
    %19 = arith.maximumf %17, %18 : vector<8x512xf32>
    %20 = arith.truncf %19 : vector<8x512xf32> to vector<8x512xbf16>
    %c0_16 = arith.constant 0 : index
    %c0_17 = arith.constant 0 : index
    %21 = vector.load %arg7[%c0_16, %c0_17] : memref<512x512xbf16, #tpu.memory_space<vmem>>, vector<512x512xbf16>
    %cst_18 = arith.constant dense<0.000000e+00> : vector<8x512xf32>
    %22 = tpu.matmul %20, %21, %cst_18 {dimension_numbers = #tpu.dot_dimension_numbers<[1], [0], [0], [1], [0, 0, 1, 1], [], []>} : vector<8x512xbf16>, vector<512x512xbf16>, vector<8x512xf32> -> vector<8x512xf32>
    %c2 = arith.constant 2 : index
    %c0_19 = arith.constant 0 : index
    %23 = vector.load %arg15[%c2, %c0_19] : memref<16x512xf32, #tpu.memory_space<vmem>>, vector<1x512xf32>
    %24 = vector.broadcast %23 : vector<1x512xf32> to vector<8x512xf32>
    %25 = arith.addf %22, %24 : vector<8x512xf32>
    %cst_20 = arith.constant 0.000000e+00 : f32
    %26 = vector.broadcast %cst_20 : f32 to vector<8x512xf32>
    %27 = arith.maximumf %25, %26 : vector<8x512xf32>
    %28 = arith.truncf %27 : vector<8x512xf32> to vector<8x512xbf16>
    %c0_21 = arith.constant 0 : index
    %c0_22 = arith.constant 0 : index
    %29 = vector.load %arg8[%c0_21, %c0_22] : memref<512x128xbf16, #tpu.memory_space<vmem>>, vector<512x128xbf16>
    %cst_23 = arith.constant dense<0.000000e+00> : vector<8x128xf32>
    %30 = tpu.matmul %28, %29, %cst_23 {dimension_numbers = #tpu.dot_dimension_numbers<[1], [0], [0], [1], [0, 0, 1, 1], [], []>} : vector<8x512xbf16>, vector<512x128xbf16>, vector<8x128xf32> -> vector<8x128xf32>
    %c3 = arith.constant 3 : index
    %c0_24 = arith.constant 0 : index
    %31 = vector.load %arg15[%c3, %c0_24] : memref<16x512xf32, #tpu.memory_space<vmem>>, vector<1x128xf32>
    %32 = vector.broadcast %31 : vector<1x128xf32> to vector<8x128xf32>
    %33 = arith.addf %30, %32 : vector<8x128xf32>
    %c0_25 = arith.constant 0 : index
    %c0_26 = arith.constant 0 : index
    %34 = vector.load %arg9[%c0_25, %c0_26] : memref<512x128xbf16, #tpu.memory_space<vmem>>, vector<512x128xbf16>
    %cst_27 = arith.constant dense<0.000000e+00> : vector<8x128xf32>
    %35 = tpu.matmul %28, %34, %cst_27 {dimension_numbers = #tpu.dot_dimension_numbers<[1], [0], [0], [1], [0, 0, 1, 1], [], []>} : vector<8x512xbf16>, vector<512x128xbf16>, vector<8x128xf32> -> vector<8x128xf32>
    %c4 = arith.constant 4 : index
    %c0_28 = arith.constant 0 : index
    %36 = vector.load %arg15[%c4, %c0_28] : memref<16x512xf32, #tpu.memory_space<vmem>>, vector<1x128xf32>
    %37 = vector.broadcast %36 : vector<1x128xf32> to vector<8x128xf32>
    %38 = arith.addf %35, %37 : vector<8x128xf32>
    %c0_29 = arith.constant 0 : index
    %c0_30 = arith.constant 0 : index
    %39 = vector.load %arg17[%c0_29, %c0_30] : memref<8x128xf32, #tpu.memory_space<vmem>>, vector<8x128xf32>
    tpu.vector_store %arg17[%c0_29, %c0_30], %33 {strides = array<i32>} : memref<8x128xf32, #tpu.memory_space<vmem>>, vector<8x128xf32>,
    %c0_31 = arith.constant 0 : index
    %c0_32 = arith.constant 0 : index
    %40 = vector.load %arg18[%c0_31, %c0_32] : memref<8x128xf32, #tpu.memory_space<vmem>>, vector<8x128xf32>
    tpu.vector_store %arg18[%c0_31, %c0_32], %38 {strides = array<i32>} : memref<8x128xf32, #tpu.memory_space<vmem>>, vector<8x128xf32>,
    %c0_33 = arith.constant 0 : index
    %c0_34 = arith.constant 0 : index
    %41 = vector.load %arg3[%c0_33, %c0_34] : memref<8x128xf32, #tpu.memory_space<vmem>>, vector<8x128xf32>
    %cst_35 = arith.constant 5.000000e-01 : f32
    %42 = vector.broadcast %cst_35 : f32 to vector<8x128xf32>
    %43 = arith.mulf %38, %42 : vector<8x128xf32>
    %44 = math.exp %43 : vector<8x128xf32>
    %45 = arith.mulf %41, %44 : vector<8x128xf32>
    %46 = arith.addf %33, %45 : vector<8x128xf32>
    %47 = arith.truncf %46 : vector<8x128xf32> to vector<8x128xbf16>
    %c0_36 = arith.constant 0 : index
    %c0_37 = arith.constant 0 : index
    %48 = vector.load %arg10[%c0_36, %c0_37] : memref<128x512xbf16, #tpu.memory_space<vmem>>, vector<128x512xbf16>
    %cst_38 = arith.constant dense<0.000000e+00> : vector<8x512xf32>
    %49 = tpu.matmul %47, %48, %cst_38 {dimension_numbers = #tpu.dot_dimension_numbers<[1], [0], [0], [1], [0, 0, 1, 1], [], []>} : vector<8x128xbf16>, vector<128x512xbf16>, vector<8x512xf32> -> vector<8x512xf32>
    %c0_39 = arith.constant 0 : index
    %c0_40 = arith.constant 0 : index
    %50 = vector.load %arg11[%c0_39, %c0_40] : memref<128x512xbf16, #tpu.memory_space<vmem>>, vector<128x512xbf16>
    %cst_41 = arith.constant dense<0.000000e+00> : vector<8x512xf32>
    %51 = tpu.matmul %1, %50, %cst_41 {dimension_numbers = #tpu.dot_dimension_numbers<[1], [0], [0], [1], [0, 0, 1, 1], [], []>} : vector<8x128xbf16>, vector<128x512xbf16>, vector<8x512xf32> -> vector<8x512xf32>
    %52 = arith.addf %49, %51 : vector<8x512xf32>
    %c5 = arith.constant 5 : index
    %c0_42 = arith.constant 0 : index
    %53 = vector.load %arg15[%c5, %c0_42] : memref<16x512xf32, #tpu.memory_space<vmem>>, vector<1x512xf32>
    %54 = vector.broadcast %53 : vector<1x512xf32> to vector<8x512xf32>
    %55 = arith.addf %52, %54 : vector<8x512xf32>
    %cst_43 = arith.constant 0.000000e+00 : f32
    %56 = vector.broadcast %cst_43 : f32 to vector<8x512xf32>
    %57 = arith.maximumf %55, %56 : vector<8x512xf32>
    %58 = arith.truncf %57 : vector<8x512xf32> to vector<8x512xbf16>
    %c0_44 = arith.constant 0 : index
    %c0_45 = arith.constant 0 : index
    %59 = vector.load %arg12[%c0_44, %c0_45] : memref<512x512xbf16, #tpu.memory_space<vmem>>, vector<512x512xbf16>
    %cst_46 = arith.constant dense<0.000000e+00> : vector<8x512xf32>
    %60 = tpu.matmul %58, %59, %cst_46 {dimension_numbers = #tpu.dot_dimension_numbers<[1], [0], [0], [1], [0, 0, 1, 1], [], []>} : vector<8x512xbf16>, vector<512x512xbf16>, vector<8x512xf32> -> vector<8x512xf32>
    %c6 = arith.constant 6 : index
    %c0_47 = arith.constant 0 : index
    %61 = vector.load %arg15[%c6, %c0_47] : memref<16x512xf32, #tpu.memory_space<vmem>>, vector<1x512xf32>
    %62 = vector.broadcast %61 : vector<1x512xf32> to vector<8x512xf32>
    %63 = arith.addf %60, %62 : vector<8x512xf32>
    %cst_48 = arith.constant 0.000000e+00 : f32
    %64 = vector.broadcast %cst_48 : f32 to vector<8x512xf32>
    %65 = arith.maximumf %63, %64 : vector<8x512xf32>
    %66 = arith.truncf %65 : vector<8x512xf32> to vector<8x512xbf16>
    %c0_49 = arith.constant 0 : index
    %c0_50 = arith.constant 0 : index
    %67 = vector.load %arg13[%c0_49, %c0_50] : memref<512x512xbf16, #tpu.memory_space<vmem>>, vector<512x512xbf16>
    %cst_51 = arith.constant dense<0.000000e+00> : vector<8x512xf32>
    %68 = tpu.matmul %66, %67, %cst_51 {dimension_numbers = #tpu.dot_dimension_numbers<[1], [0], [0], [1], [0, 0, 1, 1], [], []>} : vector<8x512xbf16>, vector<512x512xbf16>, vector<8x512xf32> -> vector<8x512xf32>
    %c7 = arith.constant 7 : index
    %c0_52 = arith.constant 0 : index
    %69 = vector.load %arg15[%c7, %c0_52] : memref<16x512xf32, #tpu.memory_space<vmem>>, vector<1x512xf32>
    %70 = vector.broadcast %69 : vector<1x512xf32> to vector<8x512xf32>
    %71 = arith.addf %68, %70 : vector<8x512xf32>
    %cst_53 = arith.constant 0.000000e+00 : f32
    %72 = vector.broadcast %cst_53 : f32 to vector<8x512xf32>
    %73 = arith.maximumf %71, %72 : vector<8x512xf32>
    %74 = arith.truncf %73 : vector<8x512xf32> to vector<8x512xbf16>
    %c0_54 = arith.constant 0 : index
    %c0_55 = arith.constant 0 : index
    %75 = vector.load %arg14[%c0_54, %c0_55] : memref<512x256xbf16, #tpu.memory_space<vmem>>, vector<512x256xbf16>
    %cst_56 = arith.constant dense<0.000000e+00> : vector<8x256xf32>
    %76 = tpu.matmul %74, %75, %cst_56 {dimension_numbers = #tpu.dot_dimension_numbers<[1], [0], [0], [1], [0, 0, 1, 1], [], []>} : vector<8x512xbf16>, vector<512x256xbf16>, vector<8x256xf32> -> vector<8x256xf32>
    %c8 = arith.constant 8 : index
    %c0_57 = arith.constant 0 : index
    %77 = vector.load %arg15[%c8, %c0_57] : memref<16x512xf32, #tpu.memory_space<vmem>>, vector<1x256xf32>
    %78 = vector.broadcast %77 : vector<1x256xf32> to vector<8x256xf32>
    %79 = arith.addf %76, %78 : vector<8x256xf32>
    %80 = arith.negf %79 : vector<8x256xf32>
    %81 = math.exp %80 : vector<8x256xf32>
    %cst_58 = arith.constant 1.000000e+00 : f32
    %82 = vector.broadcast %cst_58 : f32 to vector<8x256xf32>
    %83 = arith.addf %82, %81 : vector<8x256xf32>
    %84 = arith.divf %82, %83 : vector<8x256xf32>
    %c0_59 = arith.constant 0 : index
    %c0_60 = arith.constant 0 : index
    %85 = vector.load %arg16[%c0_59, %c0_60] : memref<8x256xf32, #tpu.memory_space<vmem>>, vector<8x256xf32>
    tpu.vector_store %arg16[%c0_59, %c0_60], %84 {strides = array<i32>} : memref<8x256xf32, #tpu.memory_space<vmem>>, vector<8x256xf32>,
    return
  }
  func.func @transform_0(%arg0: i32) -> (i32, i32) {
    %c0_i32 = arith.constant 0 : i32
    %c0_i32_0 = arith.constant 0 : i32
    return %arg0, %c0_i32 : i32, i32
  }
  func.func @transform_1(%arg0: i32) -> (i32, i32) {
    %c0_i32 = arith.constant 0 : i32
    %c0_i32_0 = arith.constant 0 : i32
    return %arg0, %c0_i32 : i32, i32
  }
  func.func @transform_2(%arg0: i32) -> (i32, i32) {
    %c0_i32 = arith.constant 0 : i32
    %c0_i32_0 = arith.constant 0 : i32
    return %arg0, %c0_i32 : i32, i32
  }
  func.func @transform_3(%arg0: i32) -> (i32, i32) {
    %c0_i32 = arith.constant 0 : i32
    %c0_i32_0 = arith.constant 0 : i32
    %c0_i32_1 = arith.constant 0 : i32
    return %c0_i32, %c0_i32_0 : i32, i32
  }
  func.func @transform_4(%arg0: i32) -> (i32, i32) {
    %c0_i32 = arith.constant 0 : i32
    %c0_i32_0 = arith.constant 0 : i32
    %c0_i32_1 = arith.constant 0 : i32
    return %c0_i32, %c0_i32_0 : i32, i32
  }
  func.func @transform_5(%arg0: i32) -> (i32, i32) {
    %c0_i32 = arith.constant 0 : i32
    %c0_i32_0 = arith.constant 0 : i32
    %c0_i32_1 = arith.constant 0 : i32
    return %c0_i32, %c0_i32_0 : i32, i32
  }
  func.func @transform_6(%arg0: i32) -> (i32, i32) {
    %c0_i32 = arith.constant 0 : i32
    %c0_i32_0 = arith.constant 0 : i32
    %c0_i32_1 = arith.constant 0 : i32
    return %c0_i32, %c0_i32_0 : i32, i32
  }
  func.func @transform_7(%arg0: i32) -> (i32, i32) {
    %c0_i32 = arith.constant 0 : i32
    %c0_i32_0 = arith.constant 0 : i32
    %c0_i32_1 = arith.constant 0 : i32
    return %c0_i32, %c0_i32_0 : i32, i32
  }
  func.func @transform_8(%arg0: i32) -> (i32, i32) {
    %c0_i32 = arith.constant 0 : i32
    %c0_i32_0 = arith.constant 0 : i32
    %c0_i32_1 = arith.constant 0 : i32
    return %c0_i32, %c0_i32_0 : i32, i32
  }
  func.func @transform_9(%arg0: i32) -> (i32, i32) {
    %c0_i32 = arith.constant 0 : i32
    %c0_i32_0 = arith.constant 0 : i32
    %c0_i32_1 = arith.constant 0 : i32
    return %c0_i32, %c0_i32_0 : i32, i32
  }
  func.func @transform_10(%arg0: i32) -> (i32, i32) {
    %c0_i32 = arith.constant 0 : i32
    %c0_i32_0 = arith.constant 0 : i32
    %c0_i32_1 = arith.constant 0 : i32
    return %c0_i32, %c0_i32_0 : i32, i32
  }
  func.func @transform_11(%arg0: i32) -> (i32, i32) {
    %c0_i32 = arith.constant 0 : i32
    %c0_i32_0 = arith.constant 0 : i32
    %c0_i32_1 = arith.constant 0 : i32
    return %c0_i32, %c0_i32_0 : i32, i32
  }
  func.func @transform_12(%arg0: i32) -> (i32, i32) {
    %c0_i32 = arith.constant 0 : i32
    %c0_i32_0 = arith.constant 0 : i32
    %c0_i32_1 = arith.constant 0 : i32
    return %c0_i32, %c0_i32_0 : i32, i32
  }
  func.func @transform_13(%arg0: i32) -> (i32, i32) {
    %c0_i32 = arith.constant 0 : i32
    %c0_i32_0 = arith.constant 0 : i32
    %c0_i32_1 = arith.constant 0 : i32
    return %c0_i32, %c0_i32_0 : i32, i32
  }
  func.func @transform_14(%arg0: i32) -> (i32, i32) {
    %c0_i32 = arith.constant 0 : i32
    %c0_i32_0 = arith.constant 0 : i32
    %c0_i32_1 = arith.constant 0 : i32
    return %c0_i32, %c0_i32_0 : i32, i32
  }
  func.func @transform_15(%arg0: i32) -> (i32, i32) {
    %c0_i32 = arith.constant 0 : i32
    %c0_i32_0 = arith.constant 0 : i32
    return %arg0, %c0_i32 : i32, i32
  }
  func.func @transform_16(%arg0: i32) -> (i32, i32) {
    %c0_i32 = arith.constant 0 : i32
    %c0_i32_0 = arith.constant 0 : i32
    return %arg0, %c0_i32 : i32, i32
  }
  func.func @transform_17(%arg0: i32) -> (i32, i32) {
    %c0_i32 = arith.constant 0 : i32
    %c0_i32_0 = arith.constant 0 : i32
    return %arg0, %c0_i32 : i32, i32
  }
}

</mosaic_0001>

<llo_original>
// kernel: cvae_forward.1
$region0: #{cvae_forward.1}
  #allocation0 [shape = 'u32[]', space=smem, size = 0x4, offset = 0x4, fixed_abs, tag = 'smem constant byte address 0x4 - core index']
  #allocation1 [shape = 'u32[144,128]{1,0:T(1,128)}', space=vmem, size = 0x12000, scoped, tag = 'internal scratch']
  %s0 = inlined_call_operand.vmem [shape: bf16[8,256], index: 0, kind: input, shape index: {}]
  %s1 = inlined_call_operand.vmem [shape: bf16[8,128], index: 1, kind: input, shape index: {}]
  %s2 = inlined_call_operand.vmem [shape: f32[8,128], index: 2, kind: input, shape index: {}]
  %s3 = inlined_call_operand.hbm [shape: bf16[256,512], index: 3, kind: input, shape index: {}]
  %s4 = inlined_call_operand.hbm [shape: bf16[128,512], index: 4, kind: input, shape index: {}]
  %s5 = inlined_call_operand.hbm [shape: bf16[512,512], index: 5, kind: input, shape index: {}]
  %s6 = inlined_call_operand.hbm [shape: bf16[512,512], index: 6, kind: input, shape index: {}]
  %s7 = inlined_call_operand.hbm [shape: bf16[512,128], index: 7, kind: input, shape index: {}]
  %s8 = inlined_call_operand.hbm [shape: bf16[512,128], index: 8, kind: input, shape index: {}]
  %s9 = inlined_call_operand.hbm [shape: bf16[128,512], index: 9, kind: input, shape index: {}]
  %s10 = inlined_call_operand.hbm [shape: bf16[128,512], index: 10, kind: input, shape index: {}]
  %s11 = inlined_call_operand.hbm [shape: bf16[512,512], index: 11, kind: input, shape index: {}]
  %s12 = inlined_call_operand.hbm [shape: bf16[512,512], index: 12, kind: input, shape index: {}]
  %s13 = inlined_call_operand.hbm [shape: bf16[512,256], index: 13, kind: input, shape index: {}]
  %s14 = inlined_call_operand.vmem [shape: f32[16,512], index: 14, kind: input, shape index: {}]
  %s15 = inlined_call_operand.vmem [shape: f32[8,256], index: 15, kind: output, shape index: {0}]
  %s16 = inlined_call_operand.vmem [shape: f32[8,128], index: 16, kind: output, shape index: {1}]
  %s17 = inlined_call_operand.vmem [shape: f32[8,128], index: 17, kind: output, shape index: {2}]
  %18 = xla_tuple %s15, %s16, %s17
  %s19 = sld [smem:[#allocation0]]
  $region130: #{cvae_forward.1} parent=0
    _
  %s21 = ssub.s32 1, %s19
  %s22 = scalar_select 0, %s21, %s19
  $region1: #{cvae_forward.1} parent=0
    #allocation2 [shape = 'u8[262144]{0}', space=vmem, size = 0x40000, scoped, tag = 'input window, operand 3, single buffered']
    #allocation3 [shape = 's32[1]{0}', space=sflag, size = 0x4, scoped, tag = 'scoped memory for cvae_forward.1']
    #allocation4 [shape = 'u8[131072]{0}', space=vmem, size = 0x20000, scoped, tag = 'input window, operand 4, single buffered']
    #allocation5 [shape = 's32[1]{0}', space=sflag, size = 0x4, scoped, tag = 'scoped memory for cvae_forward.1']
    #allocation6 [shape = 'u8[524288]{0}', space=vmem, size = 0x80000, scoped, tag = 'input window, operand 5, single buffered']
    #allocation7 [shape = 'u8[524288]{0}', space=vmem, size = 0x80000, scoped, tag = 'input window, operand 6, single buffered']
    #allocation8 [shape = 's32[1]{0}', space=sflag, size = 0x4, scoped, tag = 'scoped memory for cvae_forward.1']
    #allocation9 [shape = 'u8[131072]{0}', space=vmem, size = 0x20000, scoped, tag = 'input window, operand 7, single buffered']
    #allocation10 [shape = 'u8[131072]{0}', space=vmem, size = 0x20000, scoped, tag = 'input window, operand 8, single buffered']
    #allocation11 [shape = 's32[1]{0}', space=sflag, size = 0x4, scoped, tag = 'scoped memory for cvae_forward.1']
    #allocation12 [shape = 'u8[131072]{0}', space=vmem, size = 0x20000, scoped, tag = 'input window, operand 9, single buffered']
    #allocation13 [shape = 'u8[131072]{0}', space=vmem, size = 0x20000, scoped, tag = 'input window, operand 10, single buffered']
    #allocation14 [shape = 's32[1]{0}', space=sflag, size = 0x4, scoped, tag = 'scoped memory for cvae_forward.1']
    #allocation15 [shape = 'u8[524288]{0}', space=vmem, size = 0x80000, scoped, tag = 'input window, operand 11, single buffered']
    #allocation16 [shape = 'u8[524288]{0}', space=vmem, size = 0x80000, scoped, tag = 'input window, operand 12, single buffered']
    #allocation17 [shape = 's32[1]{0}', space=sflag, size = 0x4, scoped, tag = 'scoped memory for cvae_forward.1']
    #allocation18 [shape = 'u8[262144]{0}', space=vmem, size = 0x40000, scoped, tag = 'input window, operand 13, single buffered']
    %23 = vsyncpa [#allocation3], 0
    %24 = vsyncpa [#allocation5], 0
    %25 = vsyncpa [#allocation8], 0
    %26 = vsyncpa [#allocation11], 0
    %27 = vsyncpa [#allocation14], 0
    %28 = vsyncpa [#allocation17], 0
    // Predicated region
    $region2: #{cvae_forward.1} parent=1 // pred_check
      _
    $region3: #{cvae_forward.1} parent=1 // pred_check_branch
      %30 = sbr.rel (0) target = $region5
    $region4: #{cvae_forward.1} parent=1 // pred_region
      _
    $region5: #{cvae_forward.1} parent=1 // pred_fallthru
      _
    // Predicated region
    $region6: #{cvae_forward.1} parent=1 // pred_check
      _
    $region7: #{cvae_forward.1} parent=1 // pred_check_branch
      %32 = sbr.rel (0) target = $region9
    $region8: #{cvae_forward.1} parent=1 // pred_region
      _
    $region9: #{cvae_forward.1} parent=1 // pred_fallthru
      _
    // Predicated region
    $region10: #{cvae_forward.1} parent=1 // pred_check
      _
    $region11: #{cvae_forward.1} parent=1 // pred_check_branch
      %34 = sbr.rel (0) target = $region13
    $region12: #{cvae_forward.1} parent=1 // pred_region
      _
    $region13: #{cvae_forward.1} parent=1 // pred_fallthru
      _
    // Predicated region
    $region14: #{cvae_forward.1} parent=1 // pred_check
      _
    $region15: #{cvae_forward.1} parent=1 // pred_check_branch
      %36 = sbr.rel (0) target = $region17
    $region16: #{cvae_forward.1} parent=1 // pred_region
      %s38 = ssub.s32 8192, 8192
      %39 = vsyncadd [#allocation3], %s38
      %s40 = sshll.u32 [#allocation2], 4
      %s41 = int_to_ptr.vmem [resolvable:$true] %s40
      %46 = dma.hbm_to_vmem [thread:$0]  %s3, 8192, %s41, [#allocation3], 256, 256, 16
    $region17: #{cvae_forward.1} parent=1 // pred_fallthru
      _
    // Predicated region
    $region18: #{cvae_forward.1} parent=1 // pred_check
      _
    $region19: #{cvae_forward.1} parent=1 // pred_check_branch
      %48 = sbr.rel (0) target = $region21
    $region20: #{cvae_forward.1} parent=1 // pred_region
      %s50 = ssub.s32 4096, 4096
      %51 = vsyncadd [#allocation5], %s50
      %s52 = sshll.u32 [#allocation4], 4
      %s53 = int_to_ptr.vmem [resolvable:$true] %s52
      %58 = dma.hbm_to_vmem [thread:$0]  %s4, 4096, %s53, [#allocation5], 256, 256, 16
    $region21: #{cvae_forward.1} parent=1 // pred_fallthru
      _
    // Predicated region
    $region22: #{cvae_forward.1} parent=1 // pred_check
      _
    $region23: #{cvae_forward.1} parent=1 // pred_check_branch
      %60 = sbr.rel (0) target = $region25
    $region24: #{cvae_forward.1} parent=1 // pred_region
      %s62 = ssub.s32 16384, 16384
      %63 = vsyncadd [#allocation5], %s62
      %s64 = sshll.u32 [#allocation6], 4
      %s65 = int_to_ptr.vmem [resolvable:$true] %s64
      %70 = dma.hbm_to_vmem [thread:$0]  %s5, 16384, %s65, [#allocation5], 256, 256, 16
    $region25: #{cvae_forward.1} parent=1 // pred_fallthru
      _
    // Predicated region
    $region26: #{cvae_forward.1} parent=1 // pred_check
      _
    $region27: #{cvae_forward.1} parent=1 // pred_check_branch
      %72 = sbr.rel (0) target = $region29
    $region28: #{cvae_forward.1} parent=1 // pred_region
      %s74 = ssub.s32 16384, 16384
      %75 = vsyncadd [#allocation8], %s74
      %s76 = sshll.u32 [#allocation7], 4
      %s77 = int_to_ptr.vmem [resolvable:$true] %s76
      %82 = dma.hbm_to_vmem [thread:$0]  %s6, 16384, %s77, [#allocation8], 256, 256, 16
    $region29: #{cvae_forward.1} parent=1 // pred_fallthru
      _
    // Predicated region
    $region30: #{cvae_forward.1} parent=1 // pred_check
      _
    $region31: #{cvae_forward.1} parent=1 // pred_check_branch
      %84 = sbr.rel (0) target = $region33
    $region32: #{cvae_forward.1} parent=1 // pred_region
      %s86 = ssub.s32 4096, 4096
      %87 = vsyncadd [#allocation8], %s86
      %s88 = sshll.u32 [#allocation9], 4
      %s89 = int_to_ptr.vmem [resolvable:$true] %s88
      %94 = dma.hbm_to_vmem [thread:$0]  %s7, 4096, %s89, [#allocation8], 64, 64, 4
    $region33: #{cvae_forward.1} parent=1 // pred_fallthru
      _
    // Predicated region
    $region34: #{cvae_forward.1} parent=1 // pred_check
      _
    $region35: #{cvae_forward.1} parent=1 // pred_check_branch
      %96 = sbr.rel (0) target = $region37
    $region36: #{cvae_forward.1} parent=1 // pred_region
      %s98 = ssub.s32 4096, 4096
      %99 = vsyncadd [#allocation11], %s98
      %s100 = sshll.u32 [#allocation10], 4
      %s101 = int_to_ptr.vmem [resolvable:$true] %s100
      %106 = dma.hbm_to_vmem [thread:$0]  %s8, 4096, %s101, [#allocation11], 64, 64, 4
    $region37: #{cvae_forward.1} parent=1 // pred_fallthru
      _
    // Predicated region
    $region38: #{cvae_forward.1} parent=1 // pred_check
      _
    $region39: #{cvae_forward.1} parent=1 // pred_check_branch
      %108 = sbr.rel (0) target = $region41
    $region40: #{cvae_forward.1} parent=1 // pred_region
      %s110 = ssub.s32 4096, 4096
      %111 = vsyncadd [#allocation11], %s110
      %s112 = sshll.u32 [#allocation12], 4
      %s113 = int_to_ptr.vmem [resolvable:$true] %s112
      %118 = dma.hbm_to_vmem [thread:$0]  %s9, 4096, %s113, [#allocation11], 256, 256, 16
    $region41: #{cvae_forward.1} parent=1 // pred_fallthru
      _
    // Predicated region
    $region42: #{cvae_forward.1} parent=1 // pred_check
      _
    $region43: #{cvae_forward.1} parent=1 // pred_check_branch
      %120 = sbr.rel (0) target = $region45
    $region44: #{cvae_forward.1} parent=1 // pred_region
      %s122 = ssub.s32 4096, 4096
      %123 = vsyncadd [#allocation14], %s122
      %s124 = sshll.u32 [#allocation13], 4
      %s125 = int_to_ptr.vmem [resolvable:$true] %s124
      %130 = dma.hbm_to_vmem [thread:$0]  %s10, 4096, %s125, [#allocation14], 256, 256, 16
    $region45: #{cvae_forward.1} parent=1 // pred_fallthru
      _
    // Predicated region
    $region46: #{cvae_forward.1} parent=1 // pred_check
      _
    $region47: #{cvae_forward.1} parent=1 // pred_check_branch
      %132 = sbr.rel (0) target = $region49
    $region48: #{cvae_forward.1} parent=1 // pred_region
      %s134 = ssub.s32 16384, 16384
      %135 = vsyncadd [#allocation14], %s134
      %s136 = sshll.u32 [#allocation15], 4
      %s137 = int_to_ptr.vmem [resolvable:$true] %s136
      %142 = dma.hbm_to_vmem [thread:$0]  %s11, 16384, %s137, [#allocation14], 256, 256, 16
    $region49: #{cvae_forward.1} parent=1 // pred_fallthru
      _
    // Predicated region
    $region50: #{cvae_forward.1} parent=1 // pred_check
      _
    $region51: #{cvae_forward.1} parent=1 // pred_check_branch
      %144 = sbr.rel (0) target = $region53
    $region52: #{cvae_forward.1} parent=1 // pred_region
      %s146 = ssub.s32 16384, 16384
      %147 = vsyncadd [#allocation17], %s146
      %s148 = sshll.u32 [#allocation16], 4
      %s149 = int_to_ptr.vmem [resolvable:$true] %s148
      %154 = dma.hbm_to_vmem [thread:$0]  %s12, 16384, %s149, [#allocation17], 256, 256, 16
    $region53: #{cvae_forward.1} parent=1 // pred_fallthru
      _
    // Predicated region
    $region54: #{cvae_forward.1} parent=1 // pred_check
      _
    $region55: #{cvae_forward.1} parent=1 // pred_check_branch
      %156 = sbr.rel (0) target = $region57
    $region56: #{cvae_forward.1} parent=1 // pred_region
      %s158 = ssub.s32 8192, 8192
      %159 = vsyncadd [#allocation17], %s158
      %s160 = sshll.u32 [#allocation18], 4
      %s161 = int_to_ptr.vmem [resolvable:$true] %s160
      %166 = dma.hbm_to_vmem [thread:$0]  %s13, 8192, %s161, [#allocation17], 128, 128, 8
    $region57: #{cvae_forward.1} parent=1 // pred_fallthru
      _
    // Predicated region
    $region58: #{cvae_forward.1} parent=1 // pred_check
      _
    $region59: #{cvae_forward.1} parent=1 // pred_check_branch
      %168 = sbr.rel (0) target = $region61
    $region60: #{cvae_forward.1} parent=1 // pred_region
      _
    $region61: #{cvae_forward.1} parent=1 // pred_fallthru
      _
    // Predicated region
    $region62: #{cvae_forward.1} parent=1 // pred_check
      _
    $region63: #{cvae_forward.1} parent=1 // pred_check_branch
      %170 = sbr.rel (0) target = $region65
    $region64: #{cvae_forward.1} parent=1 // pred_region
      %171 = dma.done [#allocation3], 8192
    $region65: #{cvae_forward.1} parent=1 // pred_fallthru
      _
    // Predicated region
    $region66: #{cvae_forward.1} parent=1 // pred_check
      _
    $region67: #{cvae_forward.1} parent=1 // pred_check_branch
      %173 = sbr.rel (0) target = $region69
    $region68: #{cvae_forward.1} parent=1 // pred_region
      %174 = dma.done [#allocation5], 4096
    $region69: #{cvae_forward.1} parent=1 // pred_fallthru
      _
    // Predicated region
    $region70: #{cvae_forward.1} parent=1 // pred_check
      _
    $region71: #{cvae_forward.1} parent=1 // pred_check_branch
      %176 = sbr.rel (0) target = $region73
    $region72: #{cvae_forward.1} parent=1 // pred_region
      %177 = dma.done [#allocation5], 16384
    $region73: #{cvae_forward.1} parent=1 // pred_fallthru
      _
    // Predicated region
    $region74: #{cvae_forward.1} parent=1 // pred_check
      _
    $region75: #{cvae_forward.1} parent=1 // pred_check_branch
      %179 = sbr.rel (0) target = $region77
    $region76: #{cvae_forward.1} parent=1 // pred_region
      %180 = dma.done [#allocation8], 16384
    $region77: #{cvae_forward.1} parent=1 // pred_fallthru
      _
    // Predicated region
    $region78: #{cvae_forward.1} parent=1 // pred_check
      _
    $region79: #{cvae_forward.1} parent=1 // pred_check_branch
      %182 = sbr.rel (0) target = $region81
    $region80: #{cvae_forward.1} parent=1 // pred_region
      %183 = dma.done [#allocation8], 4096
    $region81: #{cvae_forward.1} parent=1 // pred_fallthru
      _
    // Predicated region
    $region82: #{cvae_forward.1} parent=1 // pred_check
      _
    $region83: #{cvae_forward.1} parent=1 // pred_check_branch
      %185 = sbr.rel (0) target = $region85
    $region84: #{cvae_forward.1} parent=1 // pred_region
      %186 = dma.done [#allocation11], 4096
    $region85: #{cvae_forward.1} parent=1 // pred_fallthru
      _
    // Predicated region
    $region86: #{cvae_forward.1} parent=1 // pred_check
      _
    $region87: #{cvae_forward.1} parent=1 // pred_check_branch
      %188 = sbr.rel (0) target = $region89
    $region88: #{cvae_forward.1} parent=1 // pred_region
      %189 = dma.done [#allocation11], 4096
    $region89: #{cvae_forward.1} parent=1 // pred_fallthru
      _
    // Predicated region
    $region90: #{cvae_forward.1} parent=1 // pred_check
      _
    $region91: #{cvae_forward.1} parent=1 // pred_check_branch
      %191 = sbr.rel (0) target = $region93
    $region92: #{cvae_forward.1} parent=1 // pred_region
      %192 = dma.done [#allocation14], 4096
    $region93: #{cvae_forward.1} parent=1 // pred_fallthru
      _
    // Predicated region
    $region94: #{cvae_forward.1} parent=1 // pred_check
      _
    $region95: #{cvae_forward.1} parent=1 // pred_check_branch
      %194 = sbr.rel (0) target = $region97
    $region96: #{cvae_forward.1} parent=1 // pred_region
      %195 = dma.done [#allocation14], 16384
    $region97: #{cvae_forward.1} parent=1 // pred_fallthru
      _
    // Predicated region
    $region98: #{cvae_forward.1} parent=1 // pred_check
      _
    $region99: #{cvae_forward.1} parent=1 // pred_check_branch
      %197 = sbr.rel (0) target = $region101
    $region100: #{cvae_forward.1} parent=1 // pred_region
      %198 = dma.done [#allocation17], 16384
    $region101: #{cvae_forward.1} parent=1 // pred_fallthru
      _
    // Predicated region
    $region102: #{cvae_forward.1} parent=1 // pred_check
      _
    $region103: #{cvae_forward.1} parent=1 // pred_check_branch
      %200 = sbr.rel (0) target = $region105
    $region104: #{cvae_forward.1} parent=1 // pred_region
      %201 = dma.done [#allocation17], 8192
    $region105: #{cvae_forward.1} parent=1 // pred_fallthru
      _
    %v203 = vld [vmem:[%s0] sm:$0xff]
    %v204 = vld [vmem:[%s1] sm:$0xf]
    %v205 = vld [vmem:[#allocation2] sm:$0xff]
    %v206 = vld [vmem:[#allocation2 + $0x8] sm:$0xff]
    %v207 = vld [vmem:[#allocation2 + $0x10] sm:$0xff]
    %v208 = vld [vmem:[#allocation2 + $0x18] sm:$0xff]
    %v209 = vld [vmem:[#allocation2 + $0x20] sm:$0xff]
    %v210 = vld [vmem:[#allocation2 + $0x28] sm:$0xff]
    %v211 = vld [vmem:[#allocation2 + $0x30] sm:$0xff]
    %v212 = vld [vmem:[#allocation2 + $0x38] sm:$0xff]
    %v213 = vld [vmem:[#allocation2 + $0x40] sm:$0xff]
    %v214 = vld [vmem:[#allocation2 + $0x48] sm:$0xff]
    %v215 = vld [vmem:[#allocation2 + $0x50] sm:$0xff]
    %v216 = vld [vmem:[#allocation2 + $0x58] sm:$0xff]
    %v217 = vld [vmem:[#allocation2 + $0x60] sm:$0xff]
    %v218 = vld [vmem:[#allocation2 + $0x68] sm:$0xff]
    %v219 = vld [vmem:[#allocation2 + $0x70] sm:$0xff]
    %v220 = vld [vmem:[#allocation2 + $0x78] sm:$0xff]
    %v221 = vld [vmem:[#allocation2 + $0x80] sm:$0xff]
    %v222 = vld [vmem:[#allocation2 + $0x88] sm:$0xff]
    %v223 = vld [vmem:[#allocation2 + $0x90] sm:$0xff]
    %v224 = vld [vmem:[#allocation2 + $0x98] sm:$0xff]
    %v225 = vld [vmem:[#allocation2 + $0xa0] sm:$0xff]
    %v226 = vld [vmem:[#allocation2 + $0xa8] sm:$0xff]
    %v227 = vld [vmem:[#allocation2 + $0xb0] sm:$0xff]
    %v228 = vld [vmem:[#allocation2 + $0xb8] sm:$0xff]
    %v229 = vld [vmem:[#allocation2 + $0xc0] sm:$0xff]
    %v230 = vld [vmem:[#allocation2 + $0xc8] sm:$0xff]
    %v231 = vld [vmem:[#allocation2 + $0xd0] sm:$0xff]
    %v232 = vld [vmem:[#allocation2 + $0xd8] sm:$0xff]
    %v233 = vld [vmem:[#allocation2 + $0xe0] sm:$0xff]
    %v234 = vld [vmem:[#allocation2 + $0xe8] sm:$0xff]
    %v235 = vld [vmem:[#allocation2 + $0xf0] sm:$0xff]
    %v236 = vld [vmem:[#allocation2 + $0xf8] sm:$0xff]
    %v237 = vld [vmem:[#allocation2 + $0x100] sm:$0xff]
    %v238 = vld [vmem:[#allocation2 + $0x108] sm:$0xff]
    %v239 = vld [vmem:[#allocation2 + $0x110] sm:$0xff]
    %v240 = vld [vmem:[#allocation2 + $0x118] sm:$0xff]
    %v241 = vld [vmem:[#allocation2 + $0x120] sm:$0xff]
    %v242 = vld [vmem:[#allocation2 + $0x128] sm:$0xff]
    %v243 = vld [vmem:[#allocation2 + $0x130] sm:$0xff]
    %v244 = vld [vmem:[#allocation2 + $0x138] sm:$0xff]
    %v245 = vld [vmem:[#allocation2 + $0x140] sm:$0xff]
    %v246 = vld [vmem:[#allocation2 + $0x148] sm:$0xff]
    %v247 = vld [vmem:[#allocation2 + $0x150] sm:$0xff]
    %v248 = vld [vmem:[#allocation2 + $0x158] sm:$0xff]
    %v249 = vld [vmem:[#allocation2 + $0x160] sm:$0xff]
    %v250 = vld [vmem:[#allocation2 + $0x168] sm:$0xff]
    %v251 = vld [vmem:[#allocation2 + $0x170] sm:$0xff]
    %v252 = vld [vmem:[#allocation2 + $0x178] sm:$0xff]
    %v253 = vld [vmem:[#allocation2 + $0x180] sm:$0xff]
    %v254 = vld [vmem:[#allocation2 + $0x188] sm:$0xff]
    %v255 = vld [vmem:[#allocation2 + $0x190] sm:$0xff]
    %v256 = vld [vmem:[#allocation2 + $0x198] sm:$0xff]
    %v257 = vld [vmem:[#allocation2 + $0x1a0] sm:$0xff]
    %v258 = vld [vmem:[#allocation2 + $0x1a8] sm:$0xff]
    %v259 = vld [vmem:[#allocation2 + $0x1b0] sm:$0xff]
    %v260 = vld [vmem:[#allocation2 + $0x1b8] sm:$0xff]
    %v261 = vld [vmem:[#allocation2 + $0x1c0] sm:$0xff]
    %v262 = vld [vmem:[#allocation2 + $0x1c8] sm:$0xff]
    %v263 = vld [vmem:[#allocation2 + $0x1d0] sm:$0xff]
    %v264 = vld [vmem:[#allocation2 + $0x1d8] sm:$0xff]
    %v265 = vld [vmem:[#allocation2 + $0x1e0] sm:$0xff]
    %v266 = vld [vmem:[#allocation2 + $0x1e8] sm:$0xff]
    %v267 = vld [vmem:[#allocation2 + $0x1f0] sm:$0xff]
    %v268 = vld [vmem:[#allocation2 + $0x1f8] sm:$0xff]
    %v269 = vld [vmem:[#allocation4] sm:$0xff]
    %v270 = vld [vmem:[#allocation4 + $0x8] sm:$0xff]
    %v271 = vld [vmem:[#allocation4 + $0x10] sm:$0xff]
    %v272 = vld [vmem:[#allocation4 + $0x18] sm:$0xff]
    %v273 = vld [vmem:[#allocation4 + $0x20] sm:$0xff]
    %v274 = vld [vmem:[#allocation4 + $0x28] sm:$0xff]
    %v275 = vld [vmem:[#allocation4 + $0x30] sm:$0xff]
    %v276 = vld [vmem:[#allocation4 + $0x38] sm:$0xff]
    %v277 = vld [vmem:[#allocation4 + $0x40] sm:$0xff]
    %v278 = vld [vmem:[#allocation4 + $0x48] sm:$0xff]
    %v279 = vld [vmem:[#allocation4 + $0x50] sm:$0xff]
    %v280 = vld [vmem:[#allocation4 + $0x58] sm:$0xff]
    %v281 = vld [vmem:[#allocation4 + $0x60] sm:$0xff]
    %v282 = vld [vmem:[#allocation4 + $0x68] sm:$0xff]
    %v283 = vld [vmem:[#allocation4 + $0x70] sm:$0xff]
    %v284 = vld [vmem:[#allocation4 + $0x78] sm:$0xff]
    %v285 = vld [vmem:[#allocation4 + $0x80] sm:$0xff]
    %v286 = vld [vmem:[#allocation4 + $0x88] sm:$0xff]
    %v287 = vld [vmem:[#allocation4 + $0x90] sm:$0xff]
    %v288 = vld [vmem:[#allocation4 + $0x98] sm:$0xff]
    %v289 = vld [vmem:[#allocation4 + $0xa0] sm:$0xff]
    %v290 = vld [vmem:[#allocation4 + $0xa8] sm:$0xff]
    %v291 = vld [vmem:[#allocation4 + $0xb0] sm:$0xff]
    %v292 = vld [vmem:[#allocation4 + $0xb8] sm:$0xff]
    %v293 = vld [vmem:[#allocation4 + $0xc0] sm:$0xff]
    %v294 = vld [vmem:[#allocation4 + $0xc8] sm:$0xff]
    %v295 = vld [vmem:[#allocation4 + $0xd0] sm:$0xff]
    %v296 = vld [vmem:[#allocation4 + $0xd8] sm:$0xff]
    %v297 = vld [vmem:[#allocation4 + $0xe0] sm:$0xff]
    %v298 = vld [vmem:[#allocation4 + $0xe8] sm:$0xff]
    %v299 = vld [vmem:[#allocation4 + $0xf0] sm:$0xff]
    %v300 = vld [vmem:[#allocation4 + $0xf8] sm:$0xff]
    %v333 = vunpack.c.l.b16 %v269
    %v334 = vunpack.c.h.b16 %v269
    %v335 = vunpack.c.l.b16 %v270
    %v336 = vunpack.c.h.b16 %v270
    %v337 = vunpack.c.l.b16 %v271
    %v338 = vunpack.c.h.b16 %v271
    %v339 = vunpack.c.l.b16 %v272
    %v340 = vunpack.c.h.b16 %v272
    %v341 = vunpack.c.l.b16 %v273
    %v342 = vunpack.c.h.b16 %v273
    %v343 = vunpack.c.l.b16 %v274
    %v344 = vunpack.c.h.b16 %v274
    %v345 = vunpack.c.l.b16 %v275
    %v346 = vunpack.c.h.b16 %v275
    %v347 = vunpack.c.l.b16 %v276
    %v348 = vunpack.c.h.b16 %v276
    %v349 = vunpack.c.l.b16 %v277
    %v350 = vunpack.c.h.b16 %v277
    %v351 = vunpack.c.l.b16 %v278
    %v352 = vunpack.c.h.b16 %v278
    %v353 = vunpack.c.l.b16 %v279
    %v354 = vunpack.c.h.b16 %v279
    %v355 = vunpack.c.l.b16 %v280
    %v356 = vunpack.c.h.b16 %v280
    %v357 = vunpack.c.l.b16 %v281
    %v358 = vunpack.c.h.b16 %v281
    %v359 = vunpack.c.l.b16 %v282
    %v360 = vunpack.c.h.b16 %v282
    %v361 = vunpack.c.l.b16 %v283
    %v362 = vunpack.c.h.b16 %v283
    %v363 = vunpack.c.l.b16 %v284
    %v364 = vunpack.c.h.b16 %v284
    %v365 = vunpack.c.l.b16 %v285
    %v366 = vunpack.c.h.b16 %v285
    %v367 = vunpack.c.l.b16 %v286
    %v368 = vunpack.c.h.b16 %v286
    %v369 = vunpack.c.l.b16 %v287
    %v370 = vunpack.c.h.b16 %v287
    %v371 = vunpack.c.l.b16 %v288
    %v372 = vunpack.c.h.b16 %v288
    %v373 = vunpack.c.l.b16 %v289
    %v374 = vunpack.c.h.b16 %v289
    %v375 = vunpack.c.l.b16 %v290
    %v376 = vunpack.c.h.b16 %v290
    %v377 = vunpack.c.l.b16 %v291
    %v378 = vunpack.c.h.b16 %v291
    %v379 = vunpack.c.l.b16 %v292
    %v380 = vunpack.c.h.b16 %v292
    %v381 = vunpack.c.l.b16 %v293
    %v382 = vunpack.c.h.b16 %v293
    %v383 = vunpack.c.l.b16 %v294
    %v384 = vunpack.c.h.b16 %v294
    %v385 = vunpack.c.l.b16 %v295
    %v386 = vunpack.c.h.b16 %v295
    %v387 = vunpack.c.l.b16 %v296
    %v388 = vunpack.c.h.b16 %v296
    %v389 = vunpack.c.l.b16 %v297
    %v390 = vunpack.c.h.b16 %v297
    %v391 = vunpack.c.l.b16 %v298
    %v392 = vunpack.c.h.b16 %v298
    %v393 = vunpack.c.l.b16 %v299
    %v394 = vunpack.c.h.b16 %v299
    %v395 = vunpack.c.l.b16 %v300
    %v396 = vunpack.c.h.b16 %v300
    %v397 = vpack.c.b16 %v337, %v333
    %v398 = vpack.c.b16 %v338, %v334
    %v399 = vpack.c.b16 %v339, %v335
    %v400 = vpack.c.b16 %v340, %v336
    %v401 = vpack.c.b16 %v345, %v341
    %v402 = vpack.c.b16 %v346, %v342
    %v403 = vpack.c.b16 %v347, %v343
    %v404 = vpack.c.b16 %v348, %v344
    %v405 = vpack.c.b16 %v353, %v349
    %v406 = vpack.c.b16 %v354, %v350
    %v407 = vpack.c.b16 %v355, %v351
    %v408 = vpack.c.b16 %v356, %v352
    %v409 = vpack.c.b16 %v361, %v357
    %v410 = vpack.c.b16 %v362, %v358
    %v411 = vpack.c.b16 %v363, %v359
    %v412 = vpack.c.b16 %v364, %v360
    %v413 = vpack.c.b16 %v369, %v365
    %v414 = vpack.c.b16 %v370, %v366
    %v415 = vpack.c.b16 %v371, %v367
    %v416 = vpack.c.b16 %v372, %v368
    %v417 = vpack.c.b16 %v377, %v373
    %v418 = vpack.c.b16 %v378, %v374
    %v419 = vpack.c.b16 %v379, %v375
    %v420 = vpack.c.b16 %v380, %v376
    %v421 = vpack.c.b16 %v385, %v381
    %v422 = vpack.c.b16 %v386, %v382
    %v423 = vpack.c.b16 %v387, %v383
    %v424 = vpack.c.b16 %v388, %v384
    %v425 = vpack.c.b16 %v393, %v389
    %v426 = vpack.c.b16 %v394, %v390
    %v427 = vpack.c.b16 %v395, %v391
    %v428 = vpack.c.b16 %v396, %v392
    %461 = vmatprep.subr.bf16.mxu0 %v398
    %462 = vmatpush1.bf16.msra.mxu0 %v397
    %463 = vmatprep.subr.bf16.mxu0 %v402
    %464 = vmatpush1.bf16.msra.mxu0 %v401
    %465 = vmatprep.subr.bf16.mxu0 %v406
    %466 = vmatpush1.bf16.msra.mxu0 %v405
    %467 = vmatprep.subr.bf16.mxu0 %v410
    %468 = vmatpush1.bf16.msra.mxu0 %v409
    %469 = vmatprep.subr.bf16.mxu0 %v414
    %470 = vmatpush1.bf16.msra.mxu0 %v413
    %471 = vmatprep.subr.bf16.mxu0 %v418
    %472 = vmatpush1.bf16.msra.mxu0 %v417
    %473 = vmatprep.subr.bf16.mxu0 %v422
    %474 = vmatpush1.bf16.msra.mxu0 %v421
    %475 = vmatprep.subr.bf16.mxu0 %v426
    %476 = vmatpush1.bf16.msra.mxu0 %v425
    %477 = vmatprep.subr.bf16.mxu0 0
    %478 = vmatpush1.bf16.msra.mxu0 0
    %479 = vmatprep.subr.bf16.mxu0 0
    %480 = vmatpush1.bf16.msra.mxu0 0
    %481 = vmatprep.subr.bf16.mxu0 0
    %482 = vmatpush1.bf16.msra.mxu0 0
    %483 = vmatprep.subr.bf16.mxu0 0
    %484 = vmatpush1.bf16.msra.mxu0 0
    %485 = vmatprep.subr.bf16.mxu0 0
    %486 = vmatpush1.bf16.msra.mxu0 0
    %487 = vmatprep.subr.bf16.mxu0 0
    %488 = vmatpush1.bf16.msra.mxu0 0
    %489 = vmatprep.subr.bf16.mxu0 0
    %490 = vmatpush1.bf16.msra.mxu0 0
    %491 = vmatprep.subr.bf16.mxu0 0
    %492 = vmatpush1.bf16.msra.mxu0 0
    %493 = vmatprep.mubr.bf16.mxu0 0
    %494 = vmatmul.mubr.bf16.gmra.mrb[0].mxu0 %v204
    %v495 = vpop.f32.mrb[0].mxu0
    %v496 = vadd.f32 0.0, %v495
    %v497 = vpop.f32.mrb[0].mxu0
    %v498 = vadd.f32 0.0, %v497
    %v499 = vpop.f32.mrb[0].mxu0
    %v500 = vpop.f32.mrb[0].mxu0
    %501 = vdwg.mxu0
    %502 = vmatprep.subr.bf16.mxu0 %v400
    %503 = vmatpush1.bf16.msra.mxu0 %v399
    %504 = vmatprep.subr.bf16.mxu0 %v404
    %505 = vmatpush1.bf16.msra.mxu0 %v403
    %506 = vmatprep.subr.bf16.mxu0 %v408
    %507 = vmatpush1.bf16.msra.mxu0 %v407
    %508 = vmatprep.subr.bf16.mxu0 %v412
    %509 = vmatpush1.bf16.msra.mxu0 %v411
    %510 = vmatprep.subr.bf16.mxu0 %v416
    %511 = vmatpush1.bf16.msra.mxu0 %v415
    %512 = vmatprep.subr.bf16.mxu0 %v420
    %513 = vmatpush1.bf16.msra.mxu0 %v419
    %514 = vmatprep.subr.bf16.mxu0 %v424
    %515 = vmatpush1.bf16.msra.mxu0 %v423
    %516 = vmatprep.subr.bf16.mxu0 %v428
    %517 = vmatpush1.bf16.msra.mxu0 %v427
    %518 = vmatprep.subr.bf16.mxu0 0
    %519 = vmatpush1.bf16.msra.mxu0 0
    %520 = vmatprep.subr.bf16.mxu0 0
    %521 = vmatpush1.bf16.msra.mxu0 0
    %522 = vmatprep.subr.bf16.mxu0 0
    %523 = vmatpush1.bf16.msra.mxu0 0
    %524 = vmatprep.subr.bf16.mxu0 0
    %525 = vmatpush1.bf16.msra.mxu0 0
    %526 = vmatprep.subr.bf16.mxu0 0
    %527 = vmatpush1.bf16.msra.mxu0 0
    %528 = vmatprep.subr.bf16.mxu0 0
    %529 = vmatpush1.bf16.msra.mxu0 0
    %530 = vmatprep.subr.bf16.mxu0 0
    %531 = vmatpush1.bf16.msra.mxu0 0
    %532 = vmatprep.subr.bf16.mxu0 0
    %533 = vmatpush1.bf16.msra.mxu0 0
    %534 = vmatprep.mubr.bf16.mxu0 0
    %535 = vmatmul.mubr.bf16.gmra.mrb[0].mxu0 %v204
    %v536 = vpop.f32.mrb[0].mxu0
    %v537 = vadd.f32 0.0, %v536
    %v538 = vpop.f32.mrb[0].mxu0
    %v539 = vadd.f32 0.0, %v538
    %v540 = vpop.f32.mrb[0].mxu0
    %v541 = vpop.f32.mrb[0].mxu0
    %542 = vdwg.mxu0
    %v544 = vunpack.c.l.b16 %v203
    %v545 = vunpack.c.h.b16 %v203
    %v546 = vpack.c.b16 %v544, %v544
    %v547 = vpack.c.b16 %v545, %v545
    %v614 = vunpack.c.l.b16 %v205
    %v615 = vunpack.c.h.b16 %v205
    %v616 = vunpack.c.l.b16 %v206
    %v617 = vunpack.c.h.b16 %v206
    %v618 = vunpack.c.l.b16 %v207
    %v619 = vunpack.c.h.b16 %v207
    %v620 = vunpack.c.l.b16 %v208
    %v621 = vunpack.c.h.b16 %v208
    %v622 = vunpack.c.l.b16 %v209
    %v623 = vunpack.c.h.b16 %v209
    %v624 = vunpack.c.l.b16 %v210
    %v625 = vunpack.c.h.b16 %v210
    %v626 = vunpack.c.l.b16 %v211
    %v627 = vunpack.c.h.b16 %v211
    %v628 = vunpack.c.l.b16 %v212
    %v629 = vunpack.c.h.b16 %v212
    %v630 = vunpack.c.l.b16 %v213
    %v631 = vunpack.c.h.b16 %v213
    %v632 = vunpack.c.l.b16 %v214
    %v633 = vunpack.c.h.b16 %v214
    %v634 = vunpack.c.l.b16 %v215
    %v635 = vunpack.c.h.b16 %v215
    %v636 = vunpack.c.l.b16 %v216
    %v637 = vunpack.c.h.b16 %v216
    %v638 = vunpack.c.l.b16 %v217
    %v639 = vunpack.c.h.b16 %v217
    %v640 = vunpack.c.l.b16 %v218
    %v641 = vunpack.c.h.b16 %v218
    %v642 = vunpack.c.l.b16 %v219
    %v643 = vunpack.c.h.b16 %v219
    %v644 = vunpack.c.l.b16 %v220
    %v645 = vunpack.c.h.b16 %v220
    %v646 = vunpack.c.l.b16 %v221
    %v647 = vunpack.c.h.b16 %v221
    %v648 = vunpack.c.l.b16 %v222
    %v649 = vunpack.c.h.b16 %v222
    %v650 = vunpack.c.l.b16 %v223
    %v651 = vunpack.c.h.b16 %v223
    %v652 = vunpack.c.l.b16 %v224
    %v653 = vunpack.c.h.b16 %v224
    %v654 = vunpack.c.l.b16 %v225
    %v655 = vunpack.c.h.b16 %v225
    %v656 = vunpack.c.l.b16 %v226
    %v657 = vunpack.c.h.b16 %v226
    %v658 = vunpack.c.l.b16 %v227
    %v659 = vunpack.c.h.b16 %v227
    %v660 = vunpack.c.l.b16 %v228
    %v661 = vunpack.c.h.b16 %v228
    %v662 = vunpack.c.l.b16 %v229
    %v663 = vunpack.c.h.b16 %v229
    %v664 = vunpack.c.l.b16 %v230
    %v665 = vunpack.c.h.b16 %v230
    %v666 = vunpack.c.l.b16 %v231
    %v667 = vunpack.c.h.b16 %v231
    %v668 = vunpack.c.l.b16 %v232
    %v669 = vunpack.c.h.b16 %v232
    %v670 = vunpack.c.l.b16 %v233
    %v671 = vunpack.c.h.b16 %v233
    %v672 = vunpack.c.l.b16 %v234
    %v673 = vunpack.c.h.b16 %v234
    %v674 = vunpack.c.l.b16 %v235
    %v675 = vunpack.c.h.b16 %v235
    %v676 = vunpack.c.l.b16 %v236
    %v677 = vunpack.c.h.b16 %v236
    %v678 = vunpack.c.l.b16 %v237
    %v679 = vunpack.c.h.b16 %v237
    %v680 = vunpack.c.l.b16 %v238
    %v681 = vunpack.c.h.b16 %v238
    %v682 = vunpack.c.l.b16 %v239
    %v683 = vunpack.c.h.b16 %v239
    %v684 = vunpack.c.l.b16 %v240
    %v685 = vunpack.c.h.b16 %v240
    %v686 = vunpack.c.l.b16 %v241
    %v687 = vunpack.c.h.b16 %v241
    %v688 = vunpack.c.l.b16 %v242
    %v689 = vunpack.c.h.b16 %v242
    %v690 = vunpack.c.l.b16 %v243
    %v691 = vunpack.c.h.b16 %v243
    %v692 = vunpack.c.l.b16 %v244
    %v693 = vunpack.c.h.b16 %v244
    %v694 = vunpack.c.l.b16 %v245
    %v695 = vunpack.c.h.b16 %v245
    %v696 = vunpack.c.l.b16 %v246
    %v697 = vunpack.c.h.b16 %v246
    %v698 = vunpack.c.l.b16 %v247
    %v699 = vunpack.c.h.b16 %v247
    %v700 = vunpack.c.l.b16 %v248
    %v701 = vunpack.c.h.b16 %v248
    %v702 = vunpack.c.l.b16 %v249
    %v703 = vunpack.c.h.b16 %v249
    %v704 = vunpack.c.l.b16 %v250
    %v705 = vunpack.c.h.b16 %v250
    %v706 = vunpack.c.l.b16 %v251
    %v707 = vunpack.c.h.b16 %v251
    %v708 = vunpack.c.l.b16 %v252
    %v709 = vunpack.c.h.b16 %v252
    %v710 = vunpack.c.l.b16 %v253
    %v711 = vunpack.c.h.b16 %v253
    %v712 = vunpack.c.l.b16 %v254
    %v713 = vunpack.c.h.b16 %v254
    %v714 = vunpack.c.l.b16 %v255
    %v715 = vunpack.c.h.b16 %v255
    %v716 = vunpack.c.l.b16 %v256
    %v717 = vunpack.c.h.b16 %v256
    %v718 = vunpack.c.l.b16 %v257
    %v719 = vunpack.c.h.b16 %v257
    %v720 = vunpack.c.l.b16 %v258
    %v721 = vunpack.c.h.b16 %v258
    %v722 = vunpack.c.l.b16 %v259
    %v723 = vunpack.c.h.b16 %v259
    %v724 = vunpack.c.l.b16 %v260
    %v725 = vunpack.c.h.b16 %v260
    %v726 = vunpack.c.l.b16 %v261
    %v727 = vunpack.c.h.b16 %v261
    %v728 = vunpack.c.l.b16 %v262
    %v729 = vunpack.c.h.b16 %v262
    %v730 = vunpack.c.l.b16 %v263
    %v731 = vunpack.c.h.b16 %v263
    %v732 = vunpack.c.l.b16 %v264
    %v733 = vunpack.c.h.b16 %v264
    %v734 = vunpack.c.l.b16 %v265
    %v735 = vunpack.c.h.b16 %v265
    %v736 = vunpack.c.l.b16 %v266
    %v737 = vunpack.c.h.b16 %v266
    %v738 = vunpack.c.l.b16 %v267
    %v739 = vunpack.c.h.b16 %v267
    %v740 = vunpack.c.l.b16 %v268
    %v741 = vunpack.c.h.b16 %v268
    %v742 = vpack.c.b16 %v618, %v614
    %v743 = vpack.c.b16 %v619, %v615
    %v744 = vpack.c.b16 %v620, %v616
    %v745 = vpack.c.b16 %v621, %v617
    %v746 = vpack.c.b16 %v626, %v622
    %v747 = vpack.c.b16 %v627, %v623
    %v748 = vpack.c.b16 %v628, %v624
    %v749 = vpack.c.b16 %v629, %v625
    %v750 = vpack.c.b16 %v634, %v630
    %v751 = vpack.c.b16 %v635, %v631
    %v752 = vpack.c.b16 %v636, %v632
    %v753 = vpack.c.b16 %v637, %v633
    %v754 = vpack.c.b16 %v642, %v638
    %v755 = vpack.c.b16 %v643, %v639
    %v756 = vpack.c.b16 %v644, %v640
    %v757 = vpack.c.b16 %v645, %v641
    %v758 = vpack.c.b16 %v650, %v646
    %v759 = vpack.c.b16 %v651, %v647
    %v760 = vpack.c.b16 %v652, %v648
    %v761 = vpack.c.b16 %v653, %v649
    %v762 = vpack.c.b16 %v658, %v654
    %v763 = vpack.c.b16 %v659, %v655
    %v764 = vpack.c.b16 %v660, %v656
    %v765 = vpack.c.b16 %v661, %v657
    %v766 = vpack.c.b16 %v666, %v662
    %v767 = vpack.c.b16 %v667, %v663
    %v768 = vpack.c.b16 %v668, %v664
    %v769 = vpack.c.b16 %v669, %v665
    %v770 = vpack.c.b16 %v674, %v670
    %v771 = vpack.c.b16 %v675, %v671
    %v772 = vpack.c.b16 %v676, %v672
    %v773 = vpack.c.b16 %v677, %v673
    %v774 = vpack.c.b16 %v682, %v678
    %v775 = vpack.c.b16 %v683, %v679
    %v776 = vpack.c.b16 %v684, %v680
    %v777 = vpack.c.b16 %v685, %v681
    %v778 = vpack.c.b16 %v690, %v686
    %v779 = vpack.c.b16 %v691, %v687
    %v780 = vpack.c.b16 %v692, %v688
    %v781 = vpack.c.b16 %v693, %v689
    %v782 = vpack.c.b16 %v698, %v694
    %v783 = vpack.c.b16 %v699, %v695
    %v784 = vpack.c.b16 %v700, %v696
    %v785 = vpack.c.b16 %v701, %v697
    %v786 = vpack.c.b16 %v706, %v702
    %v787 = vpack.c.b16 %v707, %v703
    %v788 = vpack.c.b16 %v708, %v704
    %v789 = vpack.c.b16 %v709, %v705
    %v790 = vpack.c.b16 %v714, %v710
    %v791 = vpack.c.b16 %v715, %v711
    %v792 = vpack.c.b16 %v716, %v712
    %v793 = vpack.c.b16 %v717, %v713
    %v794 = vpack.c.b16 %v722, %v718
    %v795 = vpack.c.b16 %v723, %v719
    %v796 = vpack.c.b16 %v724, %v720
    %v797 = vpack.c.b16 %v725, %v721
    %v798 = vpack.c.b16 %v730, %v726
    %v799 = vpack.c.b16 %v731, %v727
    %v800 = vpack.c.b16 %v732, %v728
    %v801 = vpack.c.b16 %v733, %v729
    %v802 = vpack.c.b16 %v738, %v734
    %v803 = vpack.c.b16 %v739, %v735
    %v804 = vpack.c.b16 %v740, %v736
    %v805 = vpack.c.b16 %v741, %v737
    %870 = vmatprep.subr.bf16.mxu0 %v743
    %871 = vmatpush1.bf16.msra.mxu0 %v742
    %872 = vmatprep.subr.bf16.mxu0 %v747
    %873 = vmatpush1.bf16.msra.mxu0 %v746
    %874 = vmatprep.subr.bf16.mxu0 %v751
    %875 = vmatpush1.bf16.msra.mxu0 %v750
    %876 = vmatprep.subr.bf16.mxu0 %v755
    %877 = vmatpush1.bf16.msra.mxu0 %v754
    %878 = vmatprep.subr.bf16.mxu0 %v759
    %879 = vmatpush1.bf16.msra.mxu0 %v758
    %880 = vmatprep.subr.bf16.mxu0 %v763
    %881 = vmatpush1.bf16.msra.mxu0 %v762
    %882 = vmatprep.subr.bf16.mxu0 %v767
    %883 = vmatpush1.bf16.msra.mxu0 %v766
    %884 = vmatprep.subr.bf16.mxu0 %v771
    %885 = vmatpush1.bf16.msra.mxu0 %v770
    %886 = vmatprep.subr.bf16.mxu0 %v775
    %887 = vmatpush1.bf16.msra.mxu0 %v774
    %888 = vmatprep.subr.bf16.mxu0 %v779
    %889 = vmatpush1.bf16.msra.mxu0 %v778
    %890 = vmatprep.subr.bf16.mxu0 %v783
    %891 = vmatpush1.bf16.msra.mxu0 %v782
    %892 = vmatprep.subr.bf16.mxu0 %v787
    %893 = vmatpush1.bf16.msra.mxu0 %v786
    %894 = vmatprep.subr.bf16.mxu0 %v791
    %895 = vmatpush1.bf16.msra.mxu0 %v790
    %896 = vmatprep.subr.bf16.mxu0 %v795
    %897 = vmatpush1.bf16.msra.mxu0 %v794
    %898 = vmatprep.subr.bf16.mxu0 %v799
    %899 = vmatpush1.bf16.msra.mxu0 %v798
    %900 = vmatprep.subr.bf16.mxu0 %v803
    %901 = vmatpush1.bf16.msra.mxu0 %v802
    %902 = vmatprep.mubr.bf16.mxu0 %v547
    %903 = vmatmul.mubr.bf16.gmra.mrb[0].mxu0 %v546
    %v904 = vpop.f32.mrb[0].mxu0
    %v905 = vadd.f32 %v496, %v904
    %v906 = vpop.f32.mrb[0].mxu0
    %v907 = vadd.f32 %v498, %v906
    %v908 = vpop.f32.mrb[0].mxu0
    %v909 = vpop.f32.mrb[0].mxu0
    %910 = vdwg.mxu0
    %911 = vmatprep.subr.bf16.mxu0 %v745
    %912 = vmatpush1.bf16.msra.mxu0 %v744
    %913 = vmatprep.subr.bf16.mxu0 %v749
    %914 = vmatpush1.bf16.msra.mxu0 %v748
    %915 = vmatprep.subr.bf16.mxu0 %v753
    %916 = vmatpush1.bf16.msra.mxu0 %v752
    %917 = vmatprep.subr.bf16.mxu0 %v757
    %918 = vmatpush1.bf16.msra.mxu0 %v756
    %919 = vmatprep.subr.bf16.mxu0 %v761
    %920 = vmatpush1.bf16.msra.mxu0 %v760
    %921 = vmatprep.subr.bf16.mxu0 %v765
    %922 = vmatpush1.bf16.msra.mxu0 %v764
    %923 = vmatprep.subr.bf16.mxu0 %v769
    %924 = vmatpush1.bf16.msra.mxu0 %v768
    %925 = vmatprep.subr.bf16.mxu0 %v773
    %926 = vmatpush1.bf16.msra.mxu0 %v772
    %927 = vmatprep.subr.bf16.mxu0 %v777
    %928 = vmatpush1.bf16.msra.mxu0 %v776
    %929 = vmatprep.subr.bf16.mxu0 %v781
    %930 = vmatpush1.bf16.msra.mxu0 %v780
    %931 = vmatprep.subr.bf16.mxu0 %v785
    %932 = vmatpush1.bf16.msra.mxu0 %v784
    %933 = vmatprep.subr.bf16.mxu0 %v789
    %934 = vmatpush1.bf16.msra.mxu0 %v788
    %935 = vmatprep.subr.bf16.mxu0 %v793
    %936 = vmatpush1.bf16.msra.mxu0 %v792
    %937 = vmatprep.subr.bf16.mxu0 %v797
    %938 = vmatpush1.bf16.msra.mxu0 %v796
    %939 = vmatprep.subr.bf16.mxu0 %v801
    %940 = vmatpush1.bf16.msra.mxu0 %v800
    %941 = vmatprep.subr.bf16.mxu0 %v805
    %942 = vmatpush1.bf16.msra.mxu0 %v804
    %943 = vmatprep.mubr.bf16.mxu0 %v547
    %944 = vmatmul.mubr.bf16.gmra.mrb[0].mxu0 %v546
    %v945 = vpop.f32.mrb[0].mxu0
    %v946 = vadd.f32 %v537, %v945
    %v947 = vpop.f32.mrb[0].mxu0
    %v948 = vadd.f32 %v539, %v947
    %v949 = vpop.f32.mrb[0].mxu0
    %v950 = vpop.f32.mrb[0].mxu0
    %951 = vdwg.mxu0
    %v952 = vld [vmem:[%s14] ss:$8 sm:$0xf]
    %v954 = vlaneseq
    %v955 = vshrl.u32 %v954, 7
    %v956 = vsub.s32 0, %v955
    %v957 = vrot.slane %v952, %v956
    %v958 = vlaneseq
    %v959 = vshrl.u32 %v958, 7
    %v960 = vsub.s32 1, %v959
    %v961 = vrot.slane %v952, %v960
    %v962 = vlaneseq
    %v963 = vshrl.u32 %v962, 7
    %v964 = vsub.s32 2, %v963
    %v965 = vrot.slane %v952, %v964
    %v966 = vlaneseq
    %v967 = vshrl.u32 %v966, 7
    %v968 = vsub.s32 3, %v967
    %v969 = vrot.slane %v952, %v968
    %v974 = vadd.f32 %v905, %v957
    %v975 = vadd.f32 %v907, %v961
    %v976 = vadd.f32 %v946, %v965
    %v977 = vadd.f32 %v948, %v969
    %v978 = vmax.f32 %v974, 0.0
    %v979 = vmax.f32 %v975, 0.0
    %v980 = vmax.f32 %v976, 0.0
    %v981 = vmax.f32 %v977, 0.0
    %v982 = vpack.c.bf16 %v978, %v978
    %v983 = vpack.c.bf16 %v979, %v979
    %v984 = vpack.c.bf16 %v980, %v980
    %v985 = vpack.c.bf16 %v981, %v981
    %v986 = vld [vmem:[#allocation6] sm:$0xff]
    %v987 = vld [vmem:[#allocation6 + $0x8] sm:$0xff]
    %v988 = vld [vmem:[#allocation6 + $0x10] sm:$0xff]
    %v989 = vld [vmem:[#allocation6 + $0x18] sm:$0xff]
    %v990 = vld [vmem:[#allocation6 + $0x20] sm:$0xff]
    %v991 = vld [vmem:[#allocation6 + $0x28] sm:$0xff]
    %v992 = vld [vmem:[#allocation6 + $0x30] sm:$0xff]
    %v993 = vld [vmem:[#allocation6 + $0x38] sm:$0xff]
    %v994 = vld [vmem:[#allocation6 + $0x40] sm:$0xff]
    %v995 = vld [vmem:[#allocation6 + $0x48] sm:$0xff]
    %v996 = vld [vmem:[#allocation6 + $0x50] sm:$0xff]
    %v997 = vld [vmem:[#allocation6 + $0x58] sm:$0xff]
    %v998 = vld [vmem:[#allocation6 + $0x60] sm:$0xff]
    %v999 = vld [vmem:[#allocation6 + $0x68] sm:$0xff]
    %v1000 = vld [vmem:[#allocation6 + $0x70] sm:$0xff]
    %v1001 = vld [vmem:[#allocation6 + $0x78] sm:$0xff]
    %v1002 = vld [vmem:[#allocation6 + $0x80] sm:$0xff]
    %v1003 = vld [vmem:[#allocation6 + $0x88] sm:$0xff]
    %v1004 = vld [vmem:[#allocation6 + $0x90] sm:$0xff]
    %v1005 = vld [vmem:[#allocation6 + $0x98] sm:$0xff]
    %v1006 = vld [vmem:[#allocation6 + $0xa0] sm:$0xff]
    %v1007 = vld [vmem:[#allocation6 + $0xa8] sm:$0xff]
    %v1008 = vld [vmem:[#allocation6 + $0xb0] sm:$0xff]
    %v1009 = vld [vmem:[#allocation6 + $0xb8] sm:$0xff]
    %v1010 = vld [vmem:[#allocation6 + $0xc0] sm:$0xff]
    %v1011 = vld [vmem:[#allocation6 + $0xc8] sm:$0xff]
    %v1012 = vld [vmem:[#allocation6 + $0xd0] sm:$0xff]
    %v1013 = vld [vmem:[#allocation6 + $0xd8] sm:$0xff]
    %v1014 = vld [vmem:[#allocation6 + $0xe0] sm:$0xff]
    %v1015 = vld [vmem:[#allocation6 + $0xe8] sm:$0xff]
    %v1016 = vld [vmem:[#allocation6 + $0xf0] sm:$0xff]
    %v1017 = vld [vmem:[#allocation6 + $0xf8] sm:$0xff]
    %v1018 = vld [vmem:[#allocation6 + $0x100] sm:$0xff]
    %v1019 = vld [vmem:[#allocation6 + $0x108] sm:$0xff]
    %v1020 = vld [vmem:[#allocation6 + $0x110] sm:$0xff]
    %v1021 = vld [vmem:[#allocation6 + $0x118] sm:$0xff]
    %v1022 = vld [vmem:[#allocation6 + $0x120] sm:$0xff]
    %v1023 = vld [vmem:[#allocation6 + $0x128] sm:$0xff]
    %v1024 = vld [vmem:[#allocation6 + $0x130] sm:$0xff]
    %v1025 = vld [vmem:[#allocation6 + $0x138] sm:$0xff]
    %v1026 = vld [vmem:[#allocation6 + $0x140] sm:$0xff]
    %v1027 = vld [vmem:[#allocation6 + $0x148] sm:$0xff]
    %v1028 = vld [vmem:[#allocation6 + $0x150] sm:$0xff]
    %v1029 = vld [vmem:[#allocation6 + $0x158] sm:$0xff]
    %v1030 = vld [vmem:[#allocation6 + $0x160] sm:$0xff]
    %v1031 = vld [vmem:[#allocation6 + $0x168] sm:$0xff]
    %v1032 = vld [vmem:[#allocation6 + $0x170] sm:$0xff]
    %v1033 = vld [vmem:[#allocation6 + $0x178] sm:$0xff]
    %v1034 = vld [vmem:[#allocation6 + $0x180] sm:$0xff]
    %v1035 = vld [vmem:[#allocation6 + $0x188] sm:$0xff]
    %v1036 = vld [vmem:[#allocation6 + $0x190] sm:$0xff]
    %v1037 = vld [vmem:[#allocation6 + $0x198] sm:$0xff]
    %v1038 = vld [vmem:[#allocation6 + $0x1a0] sm:$0xff]
    %v1039 = vld [vmem:[#allocation6 + $0x1a8] sm:$0xff]
    %v1040 = vld [vmem:[#allocation6 + $0x1b0] sm:$0xff]
    %v1041 = vld [vmem:[#allocation6 + $0x1b8] sm:$0xff]
    %v1042 = vld [vmem:[#allocation6 + $0x1c0] sm:$0xff]
    %v1043 = vld [vmem:[#allocation6 + $0x1c8] sm:$0xff]
    %v1044 = vld [vmem:[#allocation6 + $0x1d0] sm:$0xff]
    %v1045 = vld [vmem:[#allocation6 + $0x1d8] sm:$0xff]
    %v1046 = vld [vmem:[#allocation6 + $0x1e0] sm:$0xff]
    %v1047 = vld [vmem:[#allocation6 + $0x1e8] sm:$0xff]
    %v1048 = vld [vmem:[#allocation6 + $0x1f0] sm:$0xff]
    %v1049 = vld [vmem:[#allocation6 + $0x1f8] sm:$0xff]
    %v1050 = vld [vmem:[#allocation6 + $0x200] sm:$0xff]
    %v1051 = vld [vmem:[#allocation6 + $0x208] sm:$0xff]
    %v1052 = vld [vmem:[#allocation6 + $0x210] sm:$0xff]
    %v1053 = vld [vmem:[#allocation6 + $0x218] sm:$0xff]
    %v1054 = vld [vmem:[#allocation6 + $0x220] sm:$0xff]
    %v1055 = vld [vmem:[#allocation6 + $0x228] sm:$0xff]
    %v1056 = vld [vmem:[#allocation6 + $0x230] sm:$0xff]
    %v1057 = vld [vmem:[#allocation6 + $0x238] sm:$0xff]
    %v1058 = vld [vmem:[#allocation6 + $0x240] sm:$0xff]
    %v1059 = vld [vmem:[#allocation6 + $0x248] sm:$0xff]
    %v1060 = vld [vmem:[#allocation6 + $0x250] sm:$0xff]
    %v1061 = vld [vmem:[#allocation6 + $0x258] sm:$0xff]
    %v1062 = vld [vmem:[#allocation6 + $0x260] sm:$0xff]
    %v1063 = vld [vmem:[#allocation6 + $0x268] sm:$0xff]
    %v1064 = vld [vmem:[#allocation6 + $0x270] sm:$0xff]
    %v1065 = vld [vmem:[#allocation6 + $0x278] sm:$0xff]
    %v1066 = vld [vmem:[#allocation6 + $0x280] sm:$0xff]
    %v1067 = vld [vmem:[#allocation6 + $0x288] sm:$0xff]
    %v1068 = vld [vmem:[#allocation6 + $0x290] sm:$0xff]
    %v1069 = vld [vmem:[#allocation6 + $0x298] sm:$0xff]
    %v1070 = vld [vmem:[#allocation6 + $0x2a0] sm:$0xff]
    %v1071 = vld [vmem:[#allocation6 + $0x2a8] sm:$0xff]
    %v1072 = vld [vmem:[#allocation6 + $0x2b0] sm:$0xff]
    %v1073 = vld [vmem:[#allocation6 + $0x2b8] sm:$0xff]
    %v1074 = vld [vmem:[#allocation6 + $0x2c0] sm:$0xff]
    %v1075 = vld [vmem:[#allocation6 + $0x2c8] sm:$0xff]
    %v1076 = vld [vmem:[#allocation6 + $0x2d0] sm:$0xff]
    %v1077 = vld [vmem:[#allocation6 + $0x2d8] sm:$0xff]
    %v1078 = vld [vmem:[#allocation6 + $0x2e0] sm:$0xff]
    %v1079 = vld [vmem:[#allocation6 + $0x2e8] sm:$0xff]
    %v1080 = vld [vmem:[#allocation6 + $0x2f0] sm:$0xff]
    %v1081 = vld [vmem:[#allocation6 + $0x2f8] sm:$0xff]
    %v1082 = vld [vmem:[#allocation6 + $0x300] sm:$0xff]
    %v1083 = vld [vmem:[#allocation6 + $0x308] sm:$0xff]
    %v1084 = vld [vmem:[#allocation6 + $0x310] sm:$0xff]
    %v1085 = vld [vmem:[#allocation6 + $0x318] sm:$0xff]
    %v1086 = vld [vmem:[#allocation6 + $0x320] sm:$0xff]
    %v1087 = vld [vmem:[#allocation6 + $0x328] sm:$0xff]
    %v1088 = vld [vmem:[#allocation6 + $0x330] sm:$0xff]
    %v1089 = vld [vmem:[#allocation6 + $0x338] sm:$0xff]
    %v1090 = vld [vmem:[#allocation6 + $0x340] sm:$0xff]
    %v1091 = vld [vmem:[#allocation6 + $0x348] sm:$0xff]
    %v1092 = vld [vmem:[#allocation6 + $0x350] sm:$0xff]
    %v1093 = vld [vmem:[#allocation6 + $0x358] sm:$0xff]
    %v1094 = vld [vmem:[#allocation6 + $0x360] sm:$0xff]
    %v1095 = vld [vmem:[#allocation6 + $0x368] sm:$0xff]
    %v1096 = vld [vmem:[#allocation6 + $0x370] sm:$0xff]
    %v1097 = vld [vmem:[#allocation6 + $0x378] sm:$0xff]
    %v1098 = vld [vmem:[#allocation6 + $0x380] sm:$0xff]
    %v1099 = vld [vmem:[#allocation6 + $0x388] sm:$0xff]
    %v1100 = vld [vmem:[#allocation6 + $0x390] sm:$0xff]
    %v1101 = vld [vmem:[#allocation6 + $0x398] sm:$0xff]
    %v1102 = vld [vmem:[#allocation6 + $0x3a0] sm:$0xff]
    %v1103 = vld [vmem:[#allocation6 + $0x3a8] sm:$0xff]
    %v1104 = vld [vmem:[#allocation6 + $0x3b0] sm:$0xff]
    %v1105 = vld [vmem:[#allocation6 + $0x3b8] sm:$0xff]
    %v1106 = vld [vmem:[#allocation6 + $0x3c0] sm:$0xff]
    %v1107 = vld [vmem:[#allocation6 + $0x3c8] sm:$0xff]
    %v1108 = vld [vmem:[#allocation6 + $0x3d0] sm:$0xff]
    %v1109 = vld [vmem:[#allocation6 + $0x3d8] sm:$0xff]
    %v1110 = vld [vmem:[#allocation6 + $0x3e0] sm:$0xff]
    %v1111 = vld [vmem:[#allocation6 + $0x3e8] sm:$0xff]
    %v1112 = vld [vmem:[#allocation6 + $0x3f0] sm:$0xff]
    %v1113 = vld [vmem:[#allocation6 + $0x3f8] sm:$0xff]
    %s1114 = scalar_lea.vmem %s14, 1
    %v1115 = vld [vmem:[%s1114] ss:$8 sm:$0xf]
    %v1117 = vlaneseq
    %v1118 = vshrl.u32 %v1117, 7
    %v1119 = vsub.s32 0, %v1118
    %v1120 = vrot.slane %v1115, %v1119
    %v1121 = vlaneseq
    %v1122 = vshrl.u32 %v1121, 7
    %v1123 = vsub.s32 1, %v1122
    %v1124 = vrot.slane %v1115, %v1123
    %v1125 = vlaneseq
    %v1126 = vshrl.u32 %v1125, 7
    %v1127 = vsub.s32 2, %v1126
    %v1128 = vrot.slane %v1115, %v1127
    %v1129 = vlaneseq
    %v1130 = vshrl.u32 %v1129, 7
    %v1131 = vsub.s32 3, %v1130
    %v1132 = vrot.slane %v1115, %v1131
    %v1265 = vunpack.c.l.b16 %v986
    %v1266 = vunpack.c.h.b16 %v986
    %v1267 = vunpack.c.l.b16 %v987
    %v1268 = vunpack.c.h.b16 %v987
    %v1269 = vunpack.c.l.b16 %v988
    %v1270 = vunpack.c.h.b16 %v988
    %v1271 = vunpack.c.l.b16 %v989
    %v1272 = vunpack.c.h.b16 %v989
    %v1273 = vunpack.c.l.b16 %v990
    %v1274 = vunpack.c.h.b16 %v990
    %v1275 = vunpack.c.l.b16 %v991
    %v1276 = vunpack.c.h.b16 %v991
    %v1277 = vunpack.c.l.b16 %v992
    %v1278 = vunpack.c.h.b16 %v992
    %v1279 = vunpack.c.l.b16 %v993
    %v1280 = vunpack.c.h.b16 %v993
    %v1281 = vunpack.c.l.b16 %v994
    %v1282 = vunpack.c.h.b16 %v994
    %v1283 = vunpack.c.l.b16 %v995
    %v1284 = vunpack.c.h.b16 %v995
    %v1285 = vunpack.c.l.b16 %v996
    %v1286 = vunpack.c.h.b16 %v996
    %v1287 = vunpack.c.l.b16 %v997
    %v1288 = vunpack.c.h.b16 %v997
    %v1289 = vunpack.c.l.b16 %v998
    %v1290 = vunpack.c.h.b16 %v998
    %v1291 = vunpack.c.l.b16 %v999
    %v1292 = vunpack.c.h.b16 %v999
    %v1293 = vunpack.c.l.b16 %v1000
    %v1294 = vunpack.c.h.b16 %v1000
    %v1295 = vunpack.c.l.b16 %v1001
    %v1296 = vunpack.c.h.b16 %v1001
    %v1297 = vunpack.c.l.b16 %v1002
    %v1298 = vunpack.c.h.b16 %v1002
    %v1299 = vunpack.c.l.b16 %v1003
    %v1300 = vunpack.c.h.b16 %v1003
    %v1301 = vunpack.c.l.b16 %v1004
    %v1302 = vunpack.c.h.b16 %v1004
    %v1303 = vunpack.c.l.b16 %v1005
    %v1304 = vunpack.c.h.b16 %v1005
    %v1305 = vunpack.c.l.b16 %v1006
    %v1306 = vunpack.c.h.b16 %v1006
    %v1307 = vunpack.c.l.b16 %v1007
    %v1308 = vunpack.c.h.b16 %v1007
    %v1309 = vunpack.c.l.b16 %v1008
    %v1310 = vunpack.c.h.b16 %v1008
    %v1311 = vunpack.c.l.b16 %v1009
    %v1312 = vunpack.c.h.b16 %v1009
    %v1313 = vunpack.c.l.b16 %v1010
    %v1314 = vunpack.c.h.b16 %v1010
    %v1315 = vunpack.c.l.b16 %v1011
    %v1316 = vunpack.c.h.b16 %v1011
    %v1317 = vunpack.c.l.b16 %v1012
    %v1318 = vunpack.c.h.b16 %v1012
    %v1319 = vunpack.c.l.b16 %v1013
    %v1320 = vunpack.c.h.b16 %v1013
    %v1321 = vunpack.c.l.b16 %v1014
    %v1322 = vunpack.c.h.b16 %v1014
    %v1323 = vunpack.c.l.b16 %v1015
    %v1324 = vunpack.c.h.b16 %v1015
    %v1325 = vunpack.c.l.b16 %v1016
    %v1326 = vunpack.c.h.b16 %v1016
    %v1327 = vunpack.c.l.b16 %v1017
    %v1328 = vunpack.c.h.b16 %v1017
    %v1329 = vunpack.c.l.b16 %v1018
    %v1330 = vunpack.c.h.b16 %v1018
    %v1331 = vunpack.c.l.b16 %v1019
    %v1332 = vunpack.c.h.b16 %v1019
    %v1333 = vunpack.c.l.b16 %v1020
    %v1334 = vunpack.c.h.b16 %v1020
    %v1335 = vunpack.c.l.b16 %v1021
    %v1336 = vunpack.c.h.b16 %v1021
    %v1337 = vunpack.c.l.b16 %v1022
    %v1338 = vunpack.c.h.b16 %v1022
    %v1339 = vunpack.c.l.b16 %v1023
    %v1340 = vunpack.c.h.b16 %v1023
    %v1341 = vunpack.c.l.b16 %v1024
    %v1342 = vunpack.c.h.b16 %v1024
    %v1343 = vunpack.c.l.b16 %v1025
    %v1344 = vunpack.c.h.b16 %v1025
    %v1345 = vunpack.c.l.b16 %v1026
    %v1346 = vunpack.c.h.b16 %v1026
    %v1347 = vunpack.c.l.b16 %v1027
    %v1348 = vunpack.c.h.b16 %v1027
    %v1349 = vunpack.c.l.b16 %v1028
    %v1350 = vunpack.c.h.b16 %v1028
    %v1351 = vunpack.c.l.b16 %v1029
    %v1352 = vunpack.c.h.b16 %v1029
    %v1353 = vunpack.c.l.b16 %v1030
    %v1354 = vunpack.c.h.b16 %v1030
    %v1355 = vunpack.c.l.b16 %v1031
    %v1356 = vunpack.c.h.b16 %v1031
    %v1357 = vunpack.c.l.b16 %v1032
    %v1358 = vunpack.c.h.b16 %v1032
    %v1359 = vunpack.c.l.b16 %v1033
    %v1360 = vunpack.c.h.b16 %v1033
    %v1361 = vunpack.c.l.b16 %v1034
    %v1362 = vunpack.c.h.b16 %v1034
    %v1363 = vunpack.c.l.b16 %v1035
    %v1364 = vunpack.c.h.b16 %v1035
    %v1365 = vunpack.c.l.b16 %v1036
    %v1366 = vunpack.c.h.b16 %v1036
    %v1367 = vunpack.c.l.b16 %v1037
    %v1368 = vunpack.c.h.b16 %v1037
    %v1369 = vunpack.c.l.b16 %v1038
    %v1370 = vunpack.c.h.b16 %v1038
    %v1371 = vunpack.c.l.b16 %v1039
    %v1372 = vunpack.c.h.b16 %v1039
    %v1373 = vunpack.c.l.b16 %v1040
    %v1374 = vunpack.c.h.b16 %v1040
    %v1375 = vunpack.c.l.b16 %v1041
    %v1376 = vunpack.c.h.b16 %v1041
    %v1377 = vunpack.c.l.b16 %v1042
    %v1378 = vunpack.c.h.b16 %v1042
    %v1379 = vunpack.c.l.b16 %v1043
    %v1380 = vunpack.c.h.b16 %v1043
    %v1381 = vunpack.c.l.b16 %v1044
    %v1382 = vunpack.c.h.b16 %v1044
    %v1383 = vunpack.c.l.b16 %v1045
    %v1384 = vunpack.c.h.b16 %v1045
    %v1385 = vunpack.c.l.b16 %v1046
    %v1386 = vunpack.c.h.b16 %v1046
    %v1387 = vunpack.c.l.b16 %v1047
    %v1388 = vunpack.c.h.b16 %v1047
    %v1389 = vunpack.c.l.b16 %v1048
    %v1390 = vunpack.c.h.b16 %v1048
    %v1391 = vunpack.c.l.b16 %v1049
    %v1392 = vunpack.c.h.b16 %v1049
    %v1393 = vunpack.c.l.b16 %v1050
    %v1394 = vunpack.c.h.b16 %v1050
    %v1395 = vunpack.c.l.b16 %v1051
    %v1396 = vunpack.c.h.b16 %v1051
    %v1397 = vunpack.c.l.b16 %v1052
    %v1398 = vunpack.c.h.b16 %v1052
    %v1399 = vunpack.c.l.b16 %v1053
    %v1400 = vunpack.c.h.b16 %v1053
    %v1401 = vunpack.c.l.b16 %v1054
    %v1402 = vunpack.c.h.b16 %v1054
    %v1403 = vunpack.c.l.b16 %v1055
    %v1404 = vunpack.c.h.b16 %v1055
    %v1405 = vunpack.c.l.b16 %v1056
    %v1406 = vunpack.c.h.b16 %v1056
    %v1407 = vunpack.c.l.b16 %v1057
    %v1408 = vunpack.c.h.b16 %v1057
    %v1409 = vunpack.c.l.b16 %v1058
    %v1410 = vunpack.c.h.b16 %v1058
    %v1411 = vunpack.c.l.b16 %v1059
    %v1412 = vunpack.c.h.b16 %v1059
    %v1413 = vunpack.c.l.b16 %v1060
    %v1414 = vunpack.c.h.b16 %v1060
    %v1415 = vunpack.c.l.b16 %v1061
    %v1416 = vunpack.c.h.b16 %v1061
    %v1417 = vunpack.c.l.b16 %v1062
    %v1418 = vunpack.c.h.b16 %v1062
    %v1419 = vunpack.c.l.b16 %v1063
    %v1420 = vunpack.c.h.b16 %v1063
    %v1421 = vunpack.c.l.b16 %v1064
    %v1422 = vunpack.c.h.b16 %v1064
    %v1423 = vunpack.c.l.b16 %v1065
    %v1424 = vunpack.c.h.b16 %v1065
    %v1425 = vunpack.c.l.b16 %v1066
    %v1426 = vunpack.c.h.b16 %v1066
    %v1427 = vunpack.c.l.b16 %v1067
    %v1428 = vunpack.c.h.b16 %v1067
    %v1429 = vunpack.c.l.b16 %v1068
    %v1430 = vunpack.c.h.b16 %v1068
    %v1431 = vunpack.c.l.b16 %v1069
    %v1432 = vunpack.c.h.b16 %v1069
    %v1433 = vunpack.c.l.b16 %v1070
    %v1434 = vunpack.c.h.b16 %v1070
    %v1435 = vunpack.c.l.b16 %v1071
    %v1436 = vunpack.c.h.b16 %v1071
    %v1437 = vunpack.c.l.b16 %v1072
    %v1438 = vunpack.c.h.b16 %v1072
    %v1439 = vunpack.c.l.b16 %v1073
    %v1440 = vunpack.c.h.b16 %v1073
    %v1441 = vunpack.c.l.b16 %v1074
    %v1442 = vunpack.c.h.b16 %v1074
    %v1443 = vunpack.c.l.b16 %v1075
    %v1444 = vunpack.c.h.b16 %v1075
    %v1445 = vunpack.c.l.b16 %v1076
    %v1446 = vunpack.c.h.b16 %v1076
    %v1447 = vunpack.c.l.b16 %v1077
    %v1448 = vunpack.c.h.b16 %v1077
    %v1449 = vunpack.c.l.b16 %v1078
    %v1450 = vunpack.c.h.b16 %v1078
    %v1451 = vunpack.c.l.b16 %v1079
    %v1452 = vunpack.c.h.b16 %v1079
    %v1453 = vunpack.c.l.b16 %v1080
    %v1454 = vunpack.c.h.b16 %v1080
    %v1455 = vunpack.c.l.b16 %v1081
    %v1456 = vunpack.c.h.b16 %v1081
    %v1457 = vunpack.c.l.b16 %v1082
    %v1458 = vunpack.c.h.b16 %v1082
    %v1459 = vunpack.c.l.b16 %v1083
    %v1460 = vunpack.c.h.b16 %v1083
    %v1461 = vunpack.c.l.b16 %v1084
    %v1462 = vunpack.c.h.b16 %v1084
    %v1463 = vunpack.c.l.b16 %v1085
    %v1464 = vunpack.c.h.b16 %v1085
    %v1465 = vunpack.c.l.b16 %v1086
    %v1466 = vunpack.c.h.b16 %v1086
    %v1467 = vunpack.c.l.b16 %v1087
    %v1468 = vunpack.c.h.b16 %v1087
    %v1469 = vunpack.c.l.b16 %v1088
    %v1470 = vunpack.c.h.b16 %v1088
    %v1471 = vunpack.c.l.b16 %v1089
    %v1472 = vunpack.c.h.b16 %v1089
    %v1473 = vunpack.c.l.b16 %v1090
    %v1474 = vunpack.c.h.b16 %v1090
    %v1475 = vunpack.c.l.b16 %v1091
    %v1476 = vunpack.c.h.b16 %v1091
    %v1477 = vunpack.c.l.b16 %v1092
    %v1478 = vunpack.c.h.b16 %v1092
    %v1479 = vunpack.c.l.b16 %v1093
    %v1480 = vunpack.c.h.b16 %v1093
    %v1481 = vunpack.c.l.b16 %v1094
    %v1482 = vunpack.c.h.b16 %v1094
    %v1483 = vunpack.c.l.b16 %v1095
    %v1484 = vunpack.c.h.b16 %v1095
    %v1485 = vunpack.c.l.b16 %v1096
    %v1486 = vunpack.c.h.b16 %v1096
    %v1487 = vunpack.c.l.b16 %v1097
    %v1488 = vunpack.c.h.b16 %v1097
    %v1489 = vunpack.c.l.b16 %v1098
    %v1490 = vunpack.c.h.b16 %v1098
    %v1491 = vunpack.c.l.b16 %v1099
    %v1492 = vunpack.c.h.b16 %v1099
    %v1493 = vunpack.c.l.b16 %v1100
    %v1494 = vunpack.c.h.b16 %v1100
    %v1495 = vunpack.c.l.b16 %v1101
    %v1496 = vunpack.c.h.b16 %v1101
    %v1497 = vunpack.c.l.b16 %v1102
    %v1498 = vunpack.c.h.b16 %v1102
    %v1499 = vunpack.c.l.b16 %v1103
    %v1500 = vunpack.c.h.b16 %v1103
    %v1501 = vunpack.c.l.b16 %v1104
    %v1502 = vunpack.c.h.b16 %v1104
    %v1503 = vunpack.c.l.b16 %v1105
    %v1504 = vunpack.c.h.b16 %v1105
    %v1505 = vunpack.c.l.b16 %v1106
    %v1506 = vunpack.c.h.b16 %v1106
    %v1507 = vunpack.c.l.b16 %v1107
    %v1508 = vunpack.c.h.b16 %v1107
    %v1509 = vunpack.c.l.b16 %v1108
    %v1510 = vunpack.c.h.b16 %v1108
    %v1511 = vunpack.c.l.b16 %v1109
    %v1512 = vunpack.c.h.b16 %v1109
    %v1513 = vunpack.c.l.b16 %v1110
    %v1514 = vunpack.c.h.b16 %v1110
    %v1515 = vunpack.c.l.b16 %v1111
    %v1516 = vunpack.c.h.b16 %v1111
    %v1517 = vunpack.c.l.b16 %v1112
    %v1518 = vunpack.c.h.b16 %v1112
    %v1519 = vunpack.c.l.b16 %v1113
    %v1520 = vunpack.c.h.b16 %v1113
    %v1521 = vpack.c.b16 %v1269, %v1265
    %v1522 = vpack.c.b16 %v1270, %v1266
    %v1523 = vpack.c.b16 %v1271, %v1267
    %v1524 = vpack.c.b16 %v1272, %v1268
    %v1525 = vpack.c.b16 %v1277, %v1273
    %v1526 = vpack.c.b16 %v1278, %v1274
    %v1527 = vpack.c.b16 %v1279, %v1275
    %v1528 = vpack.c.b16 %v1280, %v1276
    %v1529 = vpack.c.b16 %v1285, %v1281
    %v1530 = vpack.c.b16 %v1286, %v1282
    %v1531 = vpack.c.b16 %v1287, %v1283
    %v1532 = vpack.c.b16 %v1288, %v1284
    %v1533 = vpack.c.b16 %v1293, %v1289
    %v1534 = vpack.c.b16 %v1294, %v1290
    %v1535 = vpack.c.b16 %v1295, %v1291
    %v1536 = vpack.c.b16 %v1296, %v1292
    %v1537 = vpack.c.b16 %v1301, %v1297
    %v1538 = vpack.c.b16 %v1302, %v1298
    %v1539 = vpack.c.b16 %v1303, %v1299
    %v1540 = vpack.c.b16 %v1304, %v1300
    %v1541 = vpack.c.b16 %v1309, %v1305
    %v1542 = vpack.c.b16 %v1310, %v1306
    %v1543 = vpack.c.b16 %v1311, %v1307
    %v1544 = vpack.c.b16 %v1312, %v1308
    %v1545 = vpack.c.b16 %v1317, %v1313
    %v1546 = vpack.c.b16 %v1318, %v1314
    %v1547 = vpack.c.b16 %v1319, %v1315
    %v1548 = vpack.c.b16 %v1320, %v1316
    %v1549 = vpack.c.b16 %v1325, %v1321
    %v1550 = vpack.c.b16 %v1326, %v1322
    %v1551 = vpack.c.b16 %v1327, %v1323
    %v1552 = vpack.c.b16 %v1328, %v1324
    %v1553 = vpack.c.b16 %v1333, %v1329
    %v1554 = vpack.c.b16 %v1334, %v1330
    %v1555 = vpack.c.b16 %v1335, %v1331
    %v1556 = vpack.c.b16 %v1336, %v1332
    %v1557 = vpack.c.b16 %v1341, %v1337
    %v1558 = vpack.c.b16 %v1342, %v1338
    %v1559 = vpack.c.b16 %v1343, %v1339
    %v1560 = vpack.c.b16 %v1344, %v1340
    %v1561 = vpack.c.b16 %v1349, %v1345
    %v1562 = vpack.c.b16 %v1350, %v1346
    %v1563 = vpack.c.b16 %v1351, %v1347
    %v1564 = vpack.c.b16 %v1352, %v1348
    %v1565 = vpack.c.b16 %v1357, %v1353
    %v1566 = vpack.c.b16 %v1358, %v1354
    %v1567 = vpack.c.b16 %v1359, %v1355
    %v1568 = vpack.c.b16 %v1360, %v1356
    %v1569 = vpack.c.b16 %v1365, %v1361
    %v1570 = vpack.c.b16 %v1366, %v1362
    %v1571 = vpack.c.b16 %v1367, %v1363
    %v1572 = vpack.c.b16 %v1368, %v1364
    %v1573 = vpack.c.b16 %v1373, %v1369
    %v1574 = vpack.c.b16 %v1374, %v1370
    %v1575 = vpack.c.b16 %v1375, %v1371
    %v1576 = vpack.c.b16 %v1376, %v1372
    %v1577 = vpack.c.b16 %v1381, %v1377
    %v1578 = vpack.c.b16 %v1382, %v1378
    %v1579 = vpack.c.b16 %v1383, %v1379
    %v1580 = vpack.c.b16 %v1384, %v1380
    %v1581 = vpack.c.b16 %v1389, %v1385
    %v1582 = vpack.c.b16 %v1390, %v1386
    %v1583 = vpack.c.b16 %v1391, %v1387
    %v1584 = vpack.c.b16 %v1392, %v1388
    %v1585 = vpack.c.b16 %v1397, %v1393
    %v1586 = vpack.c.b16 %v1398, %v1394
    %v1587 = vpack.c.b16 %v1399, %v1395
    %v1588 = vpack.c.b16 %v1400, %v1396
    %v1589 = vpack.c.b16 %v1405, %v1401
    %v1590 = vpack.c.b16 %v1406, %v1402
    %v1591 = vpack.c.b16 %v1407, %v1403
    %v1592 = vpack.c.b16 %v1408, %v1404
    %v1593 = vpack.c.b16 %v1413, %v1409
    %v1594 = vpack.c.b16 %v1414, %v1410
    %v1595 = vpack.c.b16 %v1415, %v1411
    %v1596 = vpack.c.b16 %v1416, %v1412
    %v1597 = vpack.c.b16 %v1421, %v1417
    %v1598 = vpack.c.b16 %v1422, %v1418
    %v1599 = vpack.c.b16 %v1423, %v1419
    %v1600 = vpack.c.b16 %v1424, %v1420
    %v1601 = vpack.c.b16 %v1429, %v1425
    %v1602 = vpack.c.b16 %v1430, %v1426
    %v1603 = vpack.c.b16 %v1431, %v1427
    %v1604 = vpack.c.b16 %v1432, %v1428
    %v1605 = vpack.c.b16 %v1437, %v1433
    %v1606 = vpack.c.b16 %v1438, %v1434
    %v1607 = vpack.c.b16 %v1439, %v1435
    %v1608 = vpack.c.b16 %v1440, %v1436
    %v1609 = vpack.c.b16 %v1445, %v1441
    %v1610 = vpack.c.b16 %v1446, %v1442
    %v1611 = vpack.c.b16 %v1447, %v1443
    %v1612 = vpack.c.b16 %v1448, %v1444
    %v1613 = vpack.c.b16 %v1453, %v1449
    %v1614 = vpack.c.b16 %v1454, %v1450
    %v1615 = vpack.c.b16 %v1455, %v1451
    %v1616 = vpack.c.b16 %v1456, %v1452
    %v1617 = vpack.c.b16 %v1461, %v1457
    %v1618 = vpack.c.b16 %v1462, %v1458
    %v1619 = vpack.c.b16 %v1463, %v1459
    %v1620 = vpack.c.b16 %v1464, %v1460
    %v1621 = vpack.c.b16 %v1469, %v1465
    %v1622 = vpack.c.b16 %v1470, %v1466
    %v1623 = vpack.c.b16 %v1471, %v1467
    %v1624 = vpack.c.b16 %v1472, %v1468
    %v1625 = vpack.c.b16 %v1477, %v1473
    %v1626 = vpack.c.b16 %v1478, %v1474
    %v1627 = vpack.c.b16 %v1479, %v1475
    %v1628 = vpack.c.b16 %v1480, %v1476
    %v1629 = vpack.c.b16 %v1485, %v1481
    %v1630 = vpack.c.b16 %v1486, %v1482
    %v1631 = vpack.c.b16 %v1487, %v1483
    %v1632 = vpack.c.b16 %v1488, %v1484
    %v1633 = vpack.c.b16 %v1493, %v1489
    %v1634 = vpack.c.b16 %v1494, %v1490
    %v1635 = vpack.c.b16 %v1495, %v1491
    %v1636 = vpack.c.b16 %v1496, %v1492
    %v1637 = vpack.c.b16 %v1501, %v1497
    %v1638 = vpack.c.b16 %v1502, %v1498
    %v1639 = vpack.c.b16 %v1503, %v1499
    %v1640 = vpack.c.b16 %v1504, %v1500
    %v1641 = vpack.c.b16 %v1509, %v1505
    %v1642 = vpack.c.b16 %v1510, %v1506
    %v1643 = vpack.c.b16 %v1511, %v1507
    %v1644 = vpack.c.b16 %v1512, %v1508
    %v1645 = vpack.c.b16 %v1517, %v1513
    %v1646 = vpack.c.b16 %v1518, %v1514
    %v1647 = vpack.c.b16 %v1519, %v1515
    %v1648 = vpack.c.b16 %v1520, %v1516
    %1777 = vmatprep.subr.bf16.mxu0 %v1522
    %1778 = vmatpush1.bf16.msra.mxu0 %v1521
    %1779 = vmatprep.subr.bf16.mxu0 %v1526
    %1780 = vmatpush1.bf16.msra.mxu0 %v1525
    %1781 = vmatprep.subr.bf16.mxu0 %v1530
    %1782 = vmatpush1.bf16.msra.mxu0 %v1529
    %1783 = vmatprep.subr.bf16.mxu0 %v1534
    %1784 = vmatpush1.bf16.msra.mxu0 %v1533
    %1785 = vmatprep.subr.bf16.mxu0 %v1538
    %1786 = vmatpush1.bf16.msra.mxu0 %v1537
    %1787 = vmatprep.subr.bf16.mxu0 %v1542
    %1788 = vmatpush1.bf16.msra.mxu0 %v1541
    %1789 = vmatprep.subr.bf16.mxu0 %v1546
    %1790 = vmatpush1.bf16.msra.mxu0 %v1545
    %1791 = vmatprep.subr.bf16.mxu0 %v1550
    %1792 = vmatpush1.bf16.msra.mxu0 %v1549
    %1793 = vmatprep.subr.bf16.mxu0 %v1554
    %1794 = vmatpush1.bf16.msra.mxu0 %v1553
    %1795 = vmatprep.subr.bf16.mxu0 %v1558
    %1796 = vmatpush1.bf16.msra.mxu0 %v1557
    %1797 = vmatprep.subr.bf16.mxu0 %v1562
    %1798 = vmatpush1.bf16.msra.mxu0 %v1561
    %1799 = vmatprep.subr.bf16.mxu0 %v1566
    %1800 = vmatpush1.bf16.msra.mxu0 %v1565
    %1801 = vmatprep.subr.bf16.mxu0 %v1570
    %1802 = vmatpush1.bf16.msra.mxu0 %v1569
    %1803 = vmatprep.subr.bf16.mxu0 %v1574
    %1804 = vmatpush1.bf16.msra.mxu0 %v1573
    %1805 = vmatprep.subr.bf16.mxu0 %v1578
    %1806 = vmatpush1.bf16.msra.mxu0 %v1577
    %1807 = vmatprep.subr.bf16.mxu0 %v1582
    %1808 = vmatpush1.bf16.msra.mxu0 %v1581
    %1809 = vmatprep.mubr.bf16.mxu0 %v983
    %1810 = vmatmul.mubr.bf16.gmra.mrb[0].mxu0 %v982
    %v1811 = vpop.f32.mrb[0].mxu0
    %v1812 = vadd.f32 %v1120, %v1811
    %v1813 = vpop.f32.mrb[0].mxu0
    %v1814 = vadd.f32 %v1124, %v1813
    %v1815 = vpop.f32.mrb[0].mxu0
    %v1816 = vpop.f32.mrb[0].mxu0
    %1817 = vdwg.mxu0
    %1818 = vmatprep.subr.bf16.mxu0 %v1586
    %1819 = vmatpush1.bf16.msra.mxu0 %v1585
    %1820 = vmatprep.subr.bf16.mxu0 %v1590
    %1821 = vmatpush1.bf16.msra.mxu0 %v1589
    %1822 = vmatprep.subr.bf16.mxu0 %v1594
    %1823 = vmatpush1.bf16.msra.mxu0 %v1593
    %1824 = vmatprep.subr.bf16.mxu0 %v1598
    %1825 = vmatpush1.bf16.msra.mxu0 %v1597
    %1826 = vmatprep.subr.bf16.mxu0 %v1602
    %1827 = vmatpush1.bf16.msra.mxu0 %v1601
    %1828 = vmatprep.subr.bf16.mxu0 %v1606
    %1829 = vmatpush1.bf16.msra.mxu0 %v1605
    %1830 = vmatprep.subr.bf16.mxu0 %v1610
    %1831 = vmatpush1.bf16.msra.mxu0 %v1609
    %1832 = vmatprep.subr.bf16.mxu0 %v1614
    %1833 = vmatpush1.bf16.msra.mxu0 %v1613
    %1834 = vmatprep.subr.bf16.mxu0 %v1618
    %1835 = vmatpush1.bf16.msra.mxu0 %v1617
    %1836 = vmatprep.subr.bf16.mxu0 %v1622
    %1837 = vmatpush1.bf16.msra.mxu0 %v1621
    %1838 = vmatprep.subr.bf16.mxu0 %v1626
    %1839 = vmatpush1.bf16.msra.mxu0 %v1625
    %1840 = vmatprep.subr.bf16.mxu0 %v1630
    %1841 = vmatpush1.bf16.msra.mxu0 %v1629
    %1842 = vmatprep.subr.bf16.mxu0 %v1634
    %1843 = vmatpush1.bf16.msra.mxu0 %v1633
    %1844 = vmatprep.subr.bf16.mxu0 %v1638
    %1845 = vmatpush1.bf16.msra.mxu0 %v1637
    %1846 = vmatprep.subr.bf16.mxu0 %v1642
    %1847 = vmatpush1.bf16.msra.mxu0 %v1641
    %1848 = vmatprep.subr.bf16.mxu0 %v1646
    %1849 = vmatpush1.bf16.msra.mxu0 %v1645
    %1850 = vmatprep.mubr.bf16.mxu0 %v985
    %1851 = vmatmul.mubr.bf16.gmra.mrb[0].mxu0 %v984
    %v1852 = vpop.f32.mrb[0].mxu0
    %v1853 = vadd.f32 %v1812, %v1852
    %v1854 = vpop.f32.mrb[0].mxu0
    %v1855 = vadd.f32 %v1814, %v1854
    %v1856 = vpop.f32.mrb[0].mxu0
    %v1857 = vpop.f32.mrb[0].mxu0
    %1858 = vdwg.mxu0
    %1859 = vmatprep.subr.bf16.mxu0 %v1524
    %1860 = vmatpush1.bf16.msra.mxu0 %v1523
    %1861 = vmatprep.subr.bf16.mxu0 %v1528
    %1862 = vmatpush1.bf16.msra.mxu0 %v1527
    %1863 = vmatprep.subr.bf16.mxu0 %v1532
    %1864 = vmatpush1.bf16.msra.mxu0 %v1531
    %1865 = vmatprep.subr.bf16.mxu0 %v1536
    %1866 = vmatpush1.bf16.msra.mxu0 %v1535
    %1867 = vmatprep.subr.bf16.mxu0 %v1540
    %1868 = vmatpush1.bf16.msra.mxu0 %v1539
    %1869 = vmatprep.subr.bf16.mxu0 %v1544
    %1870 = vmatpush1.bf16.msra.mxu0 %v1543
    %1871 = vmatprep.subr.bf16.mxu0 %v1548
    %1872 = vmatpush1.bf16.msra.mxu0 %v1547
    %1873 = vmatprep.subr.bf16.mxu0 %v1552
    %1874 = vmatpush1.bf16.msra.mxu0 %v1551
    %1875 = vmatprep.subr.bf16.mxu0 %v1556
    %1876 = vmatpush1.bf16.msra.mxu0 %v1555
    %1877 = vmatprep.subr.bf16.mxu0 %v1560
    %1878 = vmatpush1.bf16.msra.mxu0 %v1559
    %1879 = vmatprep.subr.bf16.mxu0 %v1564
    %1880 = vmatpush1.bf16.msra.mxu0 %v1563
    %1881 = vmatprep.subr.bf16.mxu0 %v1568
    %1882 = vmatpush1.bf16.msra.mxu0 %v1567
    %1883 = vmatprep.subr.bf16.mxu0 %v1572
    %1884 = vmatpush1.bf16.msra.mxu0 %v1571
    %1885 = vmatprep.subr.bf16.mxu0 %v1576
    %1886 = vmatpush1.bf16.msra.mxu0 %v1575
    %1887 = vmatprep.subr.bf16.mxu0 %v1580
    %1888 = vmatpush1.bf16.msra.mxu0 %v1579
    %1889 = vmatprep.subr.bf16.mxu0 %v1584
    %1890 = vmatpush1.bf16.msra.mxu0 %v1583
    %1891 = vmatprep.mubr.bf16.mxu0 %v983
    %1892 = vmatmul.mubr.bf16.gmra.mrb[0].mxu0 %v982
    %v1893 = vpop.f32.mrb[0].mxu0
    %v1894 = vadd.f32 %v1128, %v1893
    %v1895 = vpop.f32.mrb[0].mxu0
    %v1896 = vadd.f32 %v1132, %v1895
    %v1897 = vpop.f32.mrb[0].mxu0
    %v1898 = vpop.f32.mrb[0].mxu0
    %1899 = vdwg.mxu0
    %1900 = vmatprep.subr.bf16.mxu0 %v1588
    %1901 = vmatpush1.bf16.msra.mxu0 %v1587
    %1902 = vmatprep.subr.bf16.mxu0 %v1592
    %1903 = vmatpush1.bf16.msra.mxu0 %v1591
    %1904 = vmatprep.subr.bf16.mxu0 %v1596
    %1905 = vmatpush1.bf16.msra.mxu0 %v1595
    %1906 = vmatprep.subr.bf16.mxu0 %v1600
    %1907 = vmatpush1.bf16.msra.mxu0 %v1599
    %1908 = vmatprep.subr.bf16.mxu0 %v1604
    %1909 = vmatpush1.bf16.msra.mxu0 %v1603
    %1910 = vmatprep.subr.bf16.mxu0 %v1608
    %1911 = vmatpush1.bf16.msra.mxu0 %v1607
    %1912 = vmatprep.subr.bf16.mxu0 %v1612
    %1913 = vmatpush1.bf16.msra.mxu0 %v1611
    %1914 = vmatprep.subr.bf16.mxu0 %v1616
    %1915 = vmatpush1.bf16.msra.mxu0 %v1615
    %1916 = vmatprep.subr.bf16.mxu0 %v1620
    %1917 = vmatpush1.bf16.msra.mxu0 %v1619
    %1918 = vmatprep.subr.bf16.mxu0 %v1624
    %1919 = vmatpush1.bf16.msra.mxu0 %v1623
    %1920 = vmatprep.subr.bf16.mxu0 %v1628
    %1921 = vmatpush1.bf16.msra.mxu0 %v1627
    %1922 = vmatprep.subr.bf16.mxu0 %v1632
    %1923 = vmatpush1.bf16.msra.mxu0 %v1631
    %1924 = vmatprep.subr.bf16.mxu0 %v1636
    %1925 = vmatpush1.bf16.msra.mxu0 %v1635
    %1926 = vmatprep.subr.bf16.mxu0 %v1640
    %1927 = vmatpush1.bf16.msra.mxu0 %v1639
    %1928 = vmatprep.subr.bf16.mxu0 %v1644
    %1929 = vmatpush1.bf16.msra.mxu0 %v1643
    %1930 = vmatprep.subr.bf16.mxu0 %v1648
    %1931 = vmatpush1.bf16.msra.mxu0 %v1647
    %1932 = vmatprep.mubr.bf16.mxu0 %v985
    %1933 = vmatmul.mubr.bf16.gmra.mrb[0].mxu0 %v984
    %v1934 = vpop.f32.mrb[0].mxu0
    %v1935 = vadd.f32 %v1894, %v1934
    %v1936 = vpop.f32.mrb[0].mxu0
    %v1937 = vadd.f32 %v1896, %v1936
    %v1938 = vpop.f32.mrb[0].mxu0
    %v1939 = vpop.f32.mrb[0].mxu0
    %1940 = vdwg.mxu0
    %v1941 = vmax.f32 %v1853, 0.0
    %v1942 = vmax.f32 %v1855, 0.0
    %v1943 = vmax.f32 %v1935, 0.0
    %v1944 = vmax.f32 %v1937, 0.0
    %v1945 = vpack.c.bf16 %v1941, %v1941
    %v1946 = vpack.c.bf16 %v1942, %v1942
    %v1947 = vpack.c.bf16 %v1943, %v1943
    %v1948 = vpack.c.bf16 %v1944, %v1944
    %v1949 = vld [vmem:[#allocation7] sm:$0xff]
    %v1950 = vld [vmem:[#allocation7 + $0x8] sm:$0xff]
    %v1951 = vld [vmem:[#allocation7 + $0x10] sm:$0xff]
    %v1952 = vld [vmem:[#allocation7 + $0x18] sm:$0xff]
    %v1953 = vld [vmem:[#allocation7 + $0x20] sm:$0xff]
    %v1954 = vld [vmem:[#allocation7 + $0x28] sm:$0xff]
    %v1955 = vld [vmem:[#allocation7 + $0x30] sm:$0xff]
    %v1956 = vld [vmem:[#allocation7 + $0x38] sm:$0xff]
    %v1957 = vld [vmem:[#allocation7 + $0x40] sm:$0xff]
    %v1958 = vld [vmem:[#allocation7 + $0x48] sm:$0xff]
    %v1959 = vld [vmem:[#allocation7 + $0x50] sm:$0xff]
    %v1960 = vld [vmem:[#allocation7 + $0x58] sm:$0xff]
    %v1961 = vld [vmem:[#allocation7 + $0x60] sm:$0xff]
    %v1962 = vld [vmem:[#allocation7 + $0x68] sm:$0xff]
    %v1963 = vld [vmem:[#allocation7 + $0x70] sm:$0xff]
    %v1964 = vld [vmem:[#allocation7 + $0x78] sm:$0xff]
    %v1965 = vld [vmem:[#allocation7 + $0x80] sm:$0xff]
    %v1966 = vld [vmem:[#allocation7 + $0x88] sm:$0xff]
    %v1967 = vld [vmem:[#allocation7 + $0x90] sm:$0xff]
    %v1968 = vld [vmem:[#allocation7 + $0x98] sm:$0xff]
    %v1969 = vld [vmem:[#allocation7 + $0xa0] sm:$0xff]
    %v1970 = vld [vmem:[#allocation7 + $0xa8] sm:$0xff]
    %v1971 = vld [vmem:[#allocation7 + $0xb0] sm:$0xff]
    %v1972 = vld [vmem:[#allocation7 + $0xb8] sm:$0xff]
    %v1973 = vld [vmem:[#allocation7 + $0xc0] sm:$0xff]
    %v1974 = vld [vmem:[#allocation7 + $0xc8] sm:$0xff]
    %v1975 = vld [vmem:[#allocation7 + $0xd0] sm:$0xff]
    %v1976 = vld [vmem:[#allocation7 + $0xd8] sm:$0xff]
    %v1977 = vld [vmem:[#allocation7 + $0xe0] sm:$0xff]
    %v1978 = vld [vmem:[#allocation7 + $0xe8] sm:$0xff]
    %v1979 = vld [vmem:[#allocation7 + $0xf0] sm:$0xff]
    %v1980 = vld [vmem:[#allocation7 + $0xf8] sm:$0xff]
    %v1981 = vld [vmem:[#allocation7 + $0x100] sm:$0xff]
    %v1982 = vld [vmem:[#allocation7 + $0x108] sm:$0xff]
    %v1983 = vld [vmem:[#allocation7 + $0x110] sm:$0xff]
    %v1984 = vld [vmem:[#allocation7 + $0x118] sm:$0xff]
    %v1985 = vld [vmem:[#allocation7 + $0x120] sm:$0xff]
    %v1986 = vld [vmem:[#allocation7 + $0x128] sm:$0xff]
    %v1987 = vld [vmem:[#allocation7 + $0x130] sm:$0xff]
    %v1988 = vld [vmem:[#allocation7 + $0x138] sm:$0xff]
    %v1989 = vld [vmem:[#allocation7 + $0x140] sm:$0xff]
    %v1990 = vld [vmem:[#allocation7 + $0x148] sm:$0xff]
    %v1991 = vld [vmem:[#allocation7 + $0x150] sm:$0xff]
    %v1992 = vld [vmem:[#allocation7 + $0x158] sm:$0xff]
    %v1993 = vld [vmem:[#allocation7 + $0x160] sm:$0xff]
    %v1994 = vld [vmem:[#allocation7 + $0x168] sm:$0xff]
    %v1995 = vld [vmem:[#allocation7 + $0x170] sm:$0xff]
    %v1996 = vld [vmem:[#allocation7 + $0x178] sm:$0xff]
    %v1997 = vld [vmem:[#allocation7 + $0x180] sm:$0xff]
    %v1998 = vld [vmem:[#allocation7 + $0x188] sm:$0xff]
    %v1999 = vld [vmem:[#allocation7 + $0x190] sm:$0xff]
    %v2000 = vld [vmem:[#allocation7 + $0x198] sm:$0xff]
    %v2001 = vld [vmem:[#allocation7 + $0x1a0] sm:$0xff]
    %v2002 = vld [vmem:[#allocation7 + $0x1a8] sm:$0xff]
    %v2003 = vld [vmem:[#allocation7 + $0x1b0] sm:$0xff]
    %v2004 = vld [vmem:[#allocation7 + $0x1b8] sm:$0xff]
    %v2005 = vld [vmem:[#allocation7 + $0x1c0] sm:$0xff]
    %v2006 = vld [vmem:[#allocation7 + $0x1c8] sm:$0xff]
    %v2007 = vld [vmem:[#allocation7 + $0x1d0] sm:$0xff]
    %v2008 = vld [vmem:[#allocation7 + $0x1d8] sm:$0xff]
    %v2009 = vld [vmem:[#allocation7 + $0x1e0] sm:$0xff]
    %v2010 = vld [vmem:[#allocation7 + $0x1e8] sm:$0xff]
    %v2011 = vld [vmem:[#allocation7 + $0x1f0] sm:$0xff]
    %v2012 = vld [vmem:[#allocation7 + $0x1f8] sm:$0xff]
    %v2013 = vld [vmem:[#allocation7 + $0x200] sm:$0xff]
    %v2014 = vld [vmem:[#allocation7 + $0x208] sm:$0xff]
    %v2015 = vld [vmem:[#allocation7 + $0x210] sm:$0xff]
    %v2016 = vld [vmem:[#allocation7 + $0x218] sm:$0xff]
    %v2017 = vld [vmem:[#allocation7 + $0x220] sm:$0xff]
    %v2018 = vld [vmem:[#allocation7 + $0x228] sm:$0xff]
    %v2019 = vld [vmem:[#allocation7 + $0x230] sm:$0xff]
    %v2020 = vld [vmem:[#allocation7 + $0x238] sm:$0xff]
    %v2021 = vld [vmem:[#allocation7 + $0x240] sm:$0xff]
    %v2022 = vld [vmem:[#allocation7 + $0x248] sm:$0xff]
    %v2023 = vld [vmem:[#allocation7 + $0x250] sm:$0xff]
    %v2024 = vld [vmem:[#allocation7 + $0x258] sm:$0xff]
    %v2025 = vld [vmem:[#allocation7 + $0x260] sm:$0xff]
    %v2026 = vld [vmem:[#allocation7 + $0x268] sm:$0xff]
    %v2027 = vld [vmem:[#allocation7 + $0x270] sm:$0xff]
    %v2028 = vld [vmem:[#allocation7 + $0x278] sm:$0xff]
    %v2029 = vld [vmem:[#allocation7 + $0x280] sm:$0xff]
    %v2030 = vld [vmem:[#allocation7 + $0x288] sm:$0xff]
    %v2031 = vld [vmem:[#allocation7 + $0x290] sm:$0xff]
    %v2032 = vld [vmem:[#allocation7 + $0x298] sm:$0xff]
    %v2033 = vld [vmem:[#allocation7 + $0x2a0] sm:$0xff]
    %v2034 = vld [vmem:[#allocation7 + $0x2a8] sm:$0xff]
    %v2035 = vld [vmem:[#allocation7 + $0x2b0] sm:$0xff]
    %v2036 = vld [vmem:[#allocation7 + $0x2b8] sm:$0xff]
    %v2037 = vld [vmem:[#allocation7 + $0x2c0] sm:$0xff]
    %v2038 = vld [vmem:[#allocation7 + $0x2c8] sm:$0xff]
    %v2039 = vld [vmem:[#allocation7 + $0x2d0] sm:$0xff]
    %v2040 = vld [vmem:[#allocation7 + $0x2d8] sm:$0xff]
    %v2041 = vld [vmem:[#allocation7 + $0x2e0] sm:$0xff]
    %v2042 = vld [vmem:[#allocation7 + $0x2e8] sm:$0xff]
    %v2043 = vld [vmem:[#allocation7 + $0x2f0] sm:$0xff]
    %v2044 = vld [vmem:[#allocation7 + $0x2f8] sm:$0xff]
    %v2045 = vld [vmem:[#allocation7 + $0x300] sm:$0xff]
    %v2046 = vld [vmem:[#allocation7 + $0x308] sm:$0xff]
    %v2047 = vld [vmem:[#allocation7 + $0x310] sm:$0xff]
    %v2048 = vld [vmem:[#allocation7 + $0x318] sm:$0xff]
    %v2049 = vld [vmem:[#allocation7 + $0x320] sm:$0xff]
    %v2050 = vld [vmem:[#allocation7 + $0x328] sm:$0xff]
    %v2051 = vld [vmem:[#allocation7 + $0x330] sm:$0xff]
    %v2052 = vld [vmem:[#allocation7 + $0x338] sm:$0xff]
    %v2053 = vld [vmem:[#allocation7 + $0x340] sm:$0xff]
    %v2054 = vld [vmem:[#allocation7 + $0x348] sm:$0xff]
    %v2055 = vld [vmem:[#allocation7 + $0x350] sm:$0xff]
    %v2056 = vld [vmem:[#allocation7 + $0x358] sm:$0xff]
    %v2057 = vld [vmem:[#allocation7 + $0x360] sm:$0xff]
    %v2058 = vld [vmem:[#allocation7 + $0x368] sm:$0xff]
    %v2059 = vld [vmem:[#allocation7 + $0x370] sm:$0xff]
    %v2060 = vld [vmem:[#allocation7 + $0x378] sm:$0xff]
    %v2061 = vld [vmem:[#allocation7 + $0x380] sm:$0xff]
    %v2062 = vld [vmem:[#allocation7 + $0x388] sm:$0xff]
    %v2063 = vld [vmem:[#allocation7 + $0x390] sm:$0xff]
    %v2064 = vld [vmem:[#allocation7 + $0x398] sm:$0xff]
    %v2065 = vld [vmem:[#allocation7 + $0x3a0] sm:$0xff]
    %v2066 = vld [vmem:[#allocation7 + $0x3a8] sm:$0xff]
    %v2067 = vld [vmem:[#allocation7 + $0x3b0] sm:$0xff]
    %v2068 = vld [vmem:[#allocation7 + $0x3b8] sm:$0xff]
    %v2069 = vld [vmem:[#allocation7 + $0x3c0] sm:$0xff]
    %v2070 = vld [vmem:[#allocation7 + $0x3c8] sm:$0xff]
    %v2071 = vld [vmem:[#allocation7 + $0x3d0] sm:$0xff]
    %v2072 = vld [vmem:[#allocation7 + $0x3d8] sm:$0xff]
    %v2073 = vld [vmem:[#allocation7 + $0x3e0] sm:$0xff]
    %v2074 = vld [vmem:[#allocation7 + $0x3e8] sm:$0xff]
    %v2075 = vld [vmem:[#allocation7 + $0x3f0] sm:$0xff]
    %v2076 = vld [vmem:[#allocation7 + $0x3f8] sm:$0xff]
    %s2077 = scalar_lea.vmem %s14, 2
    %v2078 = vld [vmem:[%s2077] ss:$8 sm:$0xf]
    %v2080 = vlaneseq
    %v2081 = vshrl.u32 %v2080, 7
    %v2082 = vsub.s32 0, %v2081
    %v2083 = vrot.slane %v2078, %v2082
    %v2084 = vlaneseq
    %v2085 = vshrl.u32 %v2084, 7
    %v2086 = vsub.s32 1, %v2085
    %v2087 = vrot.slane %v2078, %v2086
    %v2088 = vlaneseq
    %v2089 = vshrl.u32 %v2088, 7
    %v2090 = vsub.s32 2, %v2089
    %v2091 = vrot.slane %v2078, %v2090
    %v2092 = vlaneseq
    %v2093 = vshrl.u32 %v2092, 7
    %v2094 = vsub.s32 3, %v2093
    %v2095 = vrot.slane %v2078, %v2094
    %v2228 = vunpack.c.l.b16 %v1949
    %v2229 = vunpack.c.h.b16 %v1949
    %v2230 = vunpack.c.l.b16 %v1950
    %v2231 = vunpack.c.h.b16 %v1950
    %v2232 = vunpack.c.l.b16 %v1951
    %v2233 = vunpack.c.h.b16 %v1951
    %v2234 = vunpack.c.l.b16 %v1952
    %v2235 = vunpack.c.h.b16 %v1952
    %v2236 = vunpack.c.l.b16 %v1953
    %v2237 = vunpack.c.h.b16 %v1953
    %v2238 = vunpack.c.l.b16 %v1954
    %v2239 = vunpack.c.h.b16 %v1954
    %v2240 = vunpack.c.l.b16 %v1955
    %v2241 = vunpack.c.h.b16 %v1955
    %v2242 = vunpack.c.l.b16 %v1956
    %v2243 = vunpack.c.h.b16 %v1956
    %v2244 = vunpack.c.l.b16 %v1957
    %v2245 = vunpack.c.h.b16 %v1957
    %v2246 = vunpack.c.l.b16 %v1958
    %v2247 = vunpack.c.h.b16 %v1958
    %v2248 = vunpack.c.l.b16 %v1959
    %v2249 = vunpack.c.h.b16 %v1959
    %v2250 = vunpack.c.l.b16 %v1960
    %v2251 = vunpack.c.h.b16 %v1960
    %v2252 = vunpack.c.l.b16 %v1961
    %v2253 = vunpack.c.h.b16 %v1961
    %v2254 = vunpack.c.l.b16 %v1962
    %v2255 = vunpack.c.h.b16 %v1962
    %v2256 = vunpack.c.l.b16 %v1963
    %v2257 = vunpack.c.h.b16 %v1963
    %v2258 = vunpack.c.l.b16 %v1964
    %v2259 = vunpack.c.h.b16 %v1964
    %v2260 = vunpack.c.l.b16 %v1965
    %v2261 = vunpack.c.h.b16 %v1965
    %v2262 = vunpack.c.l.b16 %v1966
    %v2263 = vunpack.c.h.b16 %v1966
    %v2264 = vunpack.c.l.b16 %v1967
    %v2265 = vunpack.c.h.b16 %v1967
    %v2266 = vunpack.c.l.b16 %v1968
    %v2267 = vunpack.c.h.b16 %v1968
    %v2268 = vunpack.c.l.b16 %v1969
    %v2269 = vunpack.c.h.b16 %v1969
    %v2270 = vunpack.c.l.b16 %v1970
    %v2271 = vunpack.c.h.b16 %v1970
    %v2272 = vunpack.c.l.b16 %v1971
    %v2273 = vunpack.c.h.b16 %v1971
    %v2274 = vunpack.c.l.b16 %v1972
    %v2275 = vunpack.c.h.b16 %v1972
    %v2276 = vunpack.c.l.b16 %v1973
    %v2277 = vunpack.c.h.b16 %v1973
    %v2278 = vunpack.c.l.b16 %v1974
    %v2279 = vunpack.c.h.b16 %v1974
    %v2280 = vunpack.c.l.b16 %v1975
    %v2281 = vunpack.c.h.b16 %v1975
    %v2282 = vunpack.c.l.b16 %v1976
    %v2283 = vunpack.c.h.b16 %v1976
    %v2284 = vunpack.c.l.b16 %v1977
    %v2285 = vunpack.c.h.b16 %v1977
    %v2286 = vunpack.c.l.b16 %v1978
    %v2287 = vunpack.c.h.b16 %v1978
    %v2288 = vunpack.c.l.b16 %v1979
    %v2289 = vunpack.c.h.b16 %v1979
    %v2290 = vunpack.c.l.b16 %v1980
    %v2291 = vunpack.c.h.b16 %v1980
    %v2292 = vunpack.c.l.b16 %v1981
    %v2293 = vunpack.c.h.b16 %v1981
    %v2294 = vunpack.c.l.b16 %v1982
    %v2295 = vunpack.c.h.b16 %v1982
    %v2296 = vunpack.c.l.b16 %v1983
    %v2297 = vunpack.c.h.b16 %v1983
    %v2298 = vunpack.c.l.b16 %v1984
    %v2299 = vunpack.c.h.b16 %v1984
    %v2300 = vunpack.c.l.b16 %v1985
    %v2301 = vunpack.c.h.b16 %v1985
    %v2302 = vunpack.c.l.b16 %v1986
    %v2303 = vunpack.c.h.b16 %v1986
    %v2304 = vunpack.c.l.b16 %v1987
    %v2305 = vunpack.c.h.b16 %v1987
    %v2306 = vunpack.c.l.b16 %v1988
    %v2307 = vunpack.c.h.b16 %v1988
    %v2308 = vunpack.c.l.b16 %v1989
    %v2309 = vunpack.c.h.b16 %v1989
    %v2310 = vunpack.c.l.b16 %v1990
    %v2311 = vunpack.c.h.b16 %v1990
    %v2312 = vunpack.c.l.b16 %v1991
    %v2313 = vunpack.c.h.b16 %v1991
    %v2314 = vunpack.c.l.b16 %v1992
    %v2315 = vunpack.c.h.b16 %v1992
    %v2316 = vunpack.c.l.b16 %v1993
    %v2317 = vunpack.c.h.b16 %v1993
    %v2318 = vunpack.c.l.b16 %v1994
    %v2319 = vunpack.c.h.b16 %v1994
    %v2320 = vunpack.c.l.b16 %v1995
    %v2321 = vunpack.c.h.b16 %v1995
    %v2322 = vunpack.c.l.b16 %v1996
    %v2323 = vunpack.c.h.b16 %v1996
    %v2324 = vunpack.c.l.b16 %v1997
    %v2325 = vunpack.c.h.b16 %v1997
    %v2326 = vunpack.c.l.b16 %v1998
    %v2327 = vunpack.c.h.b16 %v1998
    %v2328 = vunpack.c.l.b16 %v1999
    %v2329 = vunpack.c.h.b16 %v1999
    %v2330 = vunpack.c.l.b16 %v2000
    %v2331 = vunpack.c.h.b16 %v2000
    %v2332 = vunpack.c.l.b16 %v2001
    %v2333 = vunpack.c.h.b16 %v2001
    %v2334 = vunpack.c.l.b16 %v2002
    %v2335 = vunpack.c.h.b16 %v2002
    %v2336 = vunpack.c.l.b16 %v2003
    %v2337 = vunpack.c.h.b16 %v2003
    %v2338 = vunpack.c.l.b16 %v2004
    %v2339 = vunpack.c.h.b16 %v2004
    %v2340 = vunpack.c.l.b16 %v2005
    %v2341 = vunpack.c.h.b16 %v2005
    %v2342 = vunpack.c.l.b16 %v2006
    %v2343 = vunpack.c.h.b16 %v2006
    %v2344 = vunpack.c.l.b16 %v2007
    %v2345 = vunpack.c.h.b16 %v2007
    %v2346 = vunpack.c.l.b16 %v2008
    %v2347 = vunpack.c.h.b16 %v2008
    %v2348 = vunpack.c.l.b16 %v2009
    %v2349 = vunpack.c.h.b16 %v2009
    %v2350 = vunpack.c.l.b16 %v2010
    %v2351 = vunpack.c.h.b16 %v2010
    %v2352 = vunpack.c.l.b16 %v2011
    %v2353 = vunpack.c.h.b16 %v2011
    %v2354 = vunpack.c.l.b16 %v2012
    %v2355 = vunpack.c.h.b16 %v2012
    %v2356 = vunpack.c.l.b16 %v2013
    %v2357 = vunpack.c.h.b16 %v2013
    %v2358 = vunpack.c.l.b16 %v2014
    %v2359 = vunpack.c.h.b16 %v2014
    %v2360 = vunpack.c.l.b16 %v2015
    %v2361 = vunpack.c.h.b16 %v2015
    %v2362 = vunpack.c.l.b16 %v2016
    %v2363 = vunpack.c.h.b16 %v2016
    %v2364 = vunpack.c.l.b16 %v2017
    %v2365 = vunpack.c.h.b16 %v2017
    %v2366 = vunpack.c.l.b16 %v2018
    %v2367 = vunpack.c.h.b16 %v2018
    %v2368 = vunpack.c.l.b16 %v2019
    %v2369 = vunpack.c.h.b16 %v2019
    %v2370 = vunpack.c.l.b16 %v2020
    %v2371 = vunpack.c.h.b16 %v2020
    %v2372 = vunpack.c.l.b16 %v2021
    %v2373 = vunpack.c.h.b16 %v2021
    %v2374 = vunpack.c.l.b16 %v2022
    %v2375 = vunpack.c.h.b16 %v2022
    %v2376 = vunpack.c.l.b16 %v2023
    %v2377 = vunpack.c.h.b16 %v2023
    %v2378 = vunpack.c.l.b16 %v2024
    %v2379 = vunpack.c.h.b16 %v2024
    %v2380 = vunpack.c.l.b16 %v2025
    %v2381 = vunpack.c.h.b16 %v2025
    %v2382 = vunpack.c.l.b16 %v2026
    %v2383 = vunpack.c.h.b16 %v2026
    %v2384 = vunpack.c.l.b16 %v2027
    %v2385 = vunpack.c.h.b16 %v2027
    %v2386 = vunpack.c.l.b16 %v2028
    %v2387 = vunpack.c.h.b16 %v2028
    %v2388 = vunpack.c.l.b16 %v2029
    %v2389 = vunpack.c.h.b16 %v2029
    %v2390 = vunpack.c.l.b16 %v2030
    %v2391 = vunpack.c.h.b16 %v2030
    %v2392 = vunpack.c.l.b16 %v2031
    %v2393 = vunpack.c.h.b16 %v2031
    %v2394 = vunpack.c.l.b16 %v2032
    %v2395 = vunpack.c.h.b16 %v2032
    %v2396 = vunpack.c.l.b16 %v2033
    %v2397 = vunpack.c.h.b16 %v2033
    %v2398 = vunpack.c.l.b16 %v2034
    %v2399 = vunpack.c.h.b16 %v2034
    %v2400 = vunpack.c.l.b16 %v2035
    %v2401 = vunpack.c.h.b16 %v2035
    %v2402 = vunpack.c.l.b16 %v2036
    %v2403 = vunpack.c.h.b16 %v2036
    %v2404 = vunpack.c.l.b16 %v2037
    %v2405 = vunpack.c.h.b16 %v2037
    %v2406 = vunpack.c.l.b16 %v2038
    %v2407 = vunpack.c.h.b16 %v2038
    %v2408 = vunpack.c.l.b16 %v2039
    %v2409 = vunpack.c.h.b16 %v2039
    %v2410 = vunpack.c.l.b16 %v2040
    %v2411 = vunpack.c.h.b16 %v2040
    %v2412 = vunpack.c.l.b16 %v2041
    %v2413 = vunpack.c.h.b16 %v2041
    %v2414 = vunpack.c.l.b16 %v2042
    %v2415 = vunpack.c.h.b16 %v2042
    %v2416 = vunpack.c.l.b16 %v2043
    %v2417 = vunpack.c.h.b16 %v2043
    %v2418 = vunpack.c.l.b16 %v2044
    %v2419 = vunpack.c.h.b16 %v2044
    %v2420 = vunpack.c.l.b16 %v2045
    %v2421 = vunpack.c.h.b16 %v2045
    %v2422 = vunpack.c.l.b16 %v2046
    %v2423 = vunpack.c.h.b16 %v2046
    %v2424 = vunpack.c.l.b16 %v2047
    %v2425 = vunpack.c.h.b16 %v2047
    %v2426 = vunpack.c.l.b16 %v2048
    %v2427 = vunpack.c.h.b16 %v2048
    %v2428 = vunpack.c.l.b16 %v2049
    %v2429 = vunpack.c.h.b16 %v2049
    %v2430 = vunpack.c.l.b16 %v2050
    %v2431 = vunpack.c.h.b16 %v2050
    %v2432 = vunpack.c.l.b16 %v2051
    %v2433 = vunpack.c.h.b16 %v2051
    %v2434 = vunpack.c.l.b16 %v2052
    %v2435 = vunpack.c.h.b16 %v2052
    %v2436 = vunpack.c.l.b16 %v2053
    %v2437 = vunpack.c.h.b16 %v2053
    %v2438 = vunpack.c.l.b16 %v2054
    %v2439 = vunpack.c.h.b16 %v2054
    %v2440 = vunpack.c.l.b16 %v2055
    %v2441 = vunpack.c.h.b16 %v2055
    %v2442 = vunpack.c.l.b16 %v2056
    %v2443 = vunpack.c.h.b16 %v2056
    %v2444 = vunpack.c.l.b16 %v2057
    %v2445 = vunpack.c.h.b16 %v2057
    %v2446 = vunpack.c.l.b16 %v2058
    %v2447 = vunpack.c.h.b16 %v2058
    %v2448 = vunpack.c.l.b16 %v2059
    %v2449 = vunpack.c.h.b16 %v2059
    %v2450 = vunpack.c.l.b16 %v2060
    %v2451 = vunpack.c.h.b16 %v2060
    %v2452 = vunpack.c.l.b16 %v2061
    %v2453 = vunpack.c.h.b16 %v2061
    %v2454 = vunpack.c.l.b16 %v2062
    %v2455 = vunpack.c.h.b16 %v2062
    %v2456 = vunpack.c.l.b16 %v2063
    %v2457 = vunpack.c.h.b16 %v2063
    %v2458 = vunpack.c.l.b16 %v2064
    %v2459 = vunpack.c.h.b16 %v2064
    %v2460 = vunpack.c.l.b16 %v2065
    %v2461 = vunpack.c.h.b16 %v2065
    %v2462 = vunpack.c.l.b16 %v2066
    %v2463 = vunpack.c.h.b16 %v2066
    %v2464 = vunpack.c.l.b16 %v2067
    %v2465 = vunpack.c.h.b16 %v2067
    %v2466 = vunpack.c.l.b16 %v2068
    %v2467 = vunpack.c.h.b16 %v2068
    %v2468 = vunpack.c.l.b16 %v2069
    %v2469 = vunpack.c.h.b16 %v2069
    %v2470 = vunpack.c.l.b16 %v2070
    %v2471 = vunpack.c.h.b16 %v2070
    %v2472 = vunpack.c.l.b16 %v2071
    %v2473 = vunpack.c.h.b16 %v2071
    %v2474 = vunpack.c.l.b16 %v2072
    %v2475 = vunpack.c.h.b16 %v2072
    %v2476 = vunpack.c.l.b16 %v2073
    %v2477 = vunpack.c.h.b16 %v2073
    %v2478 = vunpack.c.l.b16 %v2074
    %v2479 = vunpack.c.h.b16 %v2074
    %v2480 = vunpack.c.l.b16 %v2075
    %v2481 = vunpack.c.h.b16 %v2075
    %v2482 = vunpack.c.l.b16 %v2076
    %v2483 = vunpack.c.h.b16 %v2076
    %v2484 = vpack.c.b16 %v2232, %v2228
    %v2485 = vpack.c.b16 %v2233, %v2229
    %v2486 = vpack.c.b16 %v2234, %v2230
    %v2487 = vpack.c.b16 %v2235, %v2231
    %v2488 = vpack.c.b16 %v2240, %v2236
    %v2489 = vpack.c.b16 %v2241, %v2237
    %v2490 = vpack.c.b16 %v2242, %v2238
    %v2491 = vpack.c.b16 %v2243, %v2239
    %v2492 = vpack.c.b16 %v2248, %v2244
    %v2493 = vpack.c.b16 %v2249, %v2245
    %v2494 = vpack.c.b16 %v2250, %v2246
    %v2495 = vpack.c.b16 %v2251, %v2247
    %v2496 = vpack.c.b16 %v2256, %v2252
    %v2497 = vpack.c.b16 %v2257, %v2253
    %v2498 = vpack.c.b16 %v2258, %v2254
    %v2499 = vpack.c.b16 %v2259, %v2255
    %v2500 = vpack.c.b16 %v2264, %v2260
    %v2501 = vpack.c.b16 %v2265, %v2261
    %v2502 = vpack.c.b16 %v2266, %v2262
    %v2503 = vpack.c.b16 %v2267, %v2263
    %v2504 = vpack.c.b16 %v2272, %v2268
    %v2505 = vpack.c.b16 %v2273, %v2269
    %v2506 = vpack.c.b16 %v2274, %v2270
    %v2507 = vpack.c.b16 %v2275, %v2271
    %v2508 = vpack.c.b16 %v2280, %v2276
    %v2509 = vpack.c.b16 %v2281, %v2277
    %v2510 = vpack.c.b16 %v2282, %v2278
    %v2511 = vpack.c.b16 %v2283, %v2279
    %v2512 = vpack.c.b16 %v2288, %v2284
    %v2513 = vpack.c.b16 %v2289, %v2285
    %v2514 = vpack.c.b16 %v2290, %v2286
    %v2515 = vpack.c.b16 %v2291, %v2287
    %v2516 = vpack.c.b16 %v2296, %v2292
    %v2517 = vpack.c.b16 %v2297, %v2293
    %v2518 = vpack.c.b16 %v2298, %v2294
    %v2519 = vpack.c.b16 %v2299, %v2295
    %v2520 = vpack.c.b16 %v2304, %v2300
    %v2521 = vpack.c.b16 %v2305, %v2301
    %v2522 = vpack.c.b16 %v2306, %v2302
    %v2523 = vpack.c.b16 %v2307, %v2303
    %v2524 = vpack.c.b16 %v2312, %v2308
    %v2525 = vpack.c.b16 %v2313, %v2309
    %v2526 = vpack.c.b16 %v2314, %v2310
    %v2527 = vpack.c.b16 %v2315, %v2311
    %v2528 = vpack.c.b16 %v2320, %v2316
    %v2529 = vpack.c.b16 %v2321, %v2317
    %v2530 = vpack.c.b16 %v2322, %v2318
    %v2531 = vpack.c.b16 %v2323, %v2319
    %v2532 = vpack.c.b16 %v2328, %v2324
    %v2533 = vpack.c.b16 %v2329, %v2325
    %v2534 = vpack.c.b16 %v2330, %v2326
    %v2535 = vpack.c.b16 %v2331, %v2327
    %v2536 = vpack.c.b16 %v2336, %v2332
    %v2537 = vpack.c.b16 %v2337, %v2333
    %v2538 = vpack.c.b16 %v2338, %v2334
    %v2539 = vpack.c.b16 %v2339, %v2335
    %v2540 = vpack.c.b16 %v2344, %v2340
    %v2541 = vpack.c.b16 %v2345, %v2341
    %v2542 = vpack.c.b16 %v2346, %v2342
    %v2543 = vpack.c.b16 %v2347, %v2343
    %v2544 = vpack.c.b16 %v2352, %v2348
    %v2545 = vpack.c.b16 %v2353, %v2349
    %v2546 = vpack.c.b16 %v2354, %v2350
    %v2547 = vpack.c.b16 %v2355, %v2351
    %v2548 = vpack.c.b16 %v2360, %v2356
    %v2549 = vpack.c.b16 %v2361, %v2357
    %v2550 = vpack.c.b16 %v2362, %v2358
    %v2551 = vpack.c.b16 %v2363, %v2359
    %v2552 = vpack.c.b16 %v2368, %v2364
    %v2553 = vpack.c.b16 %v2369, %v2365
    %v2554 = vpack.c.b16 %v2370, %v2366
    %v2555 = vpack.c.b16 %v2371, %v2367
    %v2556 = vpack.c.b16 %v2376, %v2372
    %v2557 = vpack.c.b16 %v2377, %v2373
    %v2558 = vpack.c.b16 %v2378, %v2374
    %v2559 = vpack.c.b16 %v2379, %v2375
    %v2560 = vpack.c.b16 %v2384, %v2380
    %v2561 = vpack.c.b16 %v2385, %v2381
    %v2562 = vpack.c.b16 %v2386, %v2382
    %v2563 = vpack.c.b16 %v2387, %v2383
    %v2564 = vpack.c.b16 %v2392, %v2388
    %v2565 = vpack.c.b16 %v2393, %v2389
    %v2566 = vpack.c.b16 %v2394, %v2390
    %v2567 = vpack.c.b16 %v2395, %v2391
    %v2568 = vpack.c.b16 %v2400, %v2396
    %v2569 = vpack.c.b16 %v2401, %v2397
    %v2570 = vpack.c.b16 %v2402, %v2398
    %v2571 = vpack.c.b16 %v2403, %v2399
    %v2572 = vpack.c.b16 %v2408, %v2404
    %v2573 = vpack.c.b16 %v2409, %v2405
    %v2574 = vpack.c.b16 %v2410, %v2406
    %v2575 = vpack.c.b16 %v2411, %v2407
    %v2576 = vpack.c.b16 %v2416, %v2412
    %v2577 = vpack.c.b16 %v2417, %v2413
    %v2578 = vpack.c.b16 %v2418, %v2414
    %v2579 = vpack.c.b16 %v2419, %v2415
    %v2580 = vpack.c.b16 %v2424, %v2420
    %v2581 = vpack.c.b16 %v2425, %v2421
    %v2582 = vpack.c.b16 %v2426, %v2422
    %v2583 = vpack.c.b16 %v2427, %v2423
    %v2584 = vpack.c.b16 %v2432, %v2428
    %v2585 = vpack.c.b16 %v2433, %v2429
    %v2586 = vpack.c.b16 %v2434, %v2430
    %v2587 = vpack.c.b16 %v2435, %v2431
    %v2588 = vpack.c.b16 %v2440, %v2436
    %v2589 = vpack.c.b16 %v2441, %v2437
    %v2590 = vpack.c.b16 %v2442, %v2438
    %v2591 = vpack.c.b16 %v2443, %v2439
    %v2592 = vpack.c.b16 %v2448, %v2444
    %v2593 = vpack.c.b16 %v2449, %v2445
    %v2594 = vpack.c.b16 %v2450, %v2446
    %v2595 = vpack.c.b16 %v2451, %v2447
    %v2596 = vpack.c.b16 %v2456, %v2452
    %v2597 = vpack.c.b16 %v2457, %v2453
    %v2598 = vpack.c.b16 %v2458, %v2454
    %v2599 = vpack.c.b16 %v2459, %v2455
    %v2600 = vpack.c.b16 %v2464, %v2460
    %v2601 = vpack.c.b16 %v2465, %v2461
    %v2602 = vpack.c.b16 %v2466, %v2462
    %v2603 = vpack.c.b16 %v2467, %v2463
    %v2604 = vpack.c.b16 %v2472, %v2468
    %v2605 = vpack.c.b16 %v2473, %v2469
    %v2606 = vpack.c.b16 %v2474, %v2470
    %v2607 = vpack.c.b16 %v2475, %v2471
    %v2608 = vpack.c.b16 %v2480, %v2476
    %v2609 = vpack.c.b16 %v2481, %v2477
    %v2610 = vpack.c.b16 %v2482, %v2478
    %v2611 = vpack.c.b16 %v2483, %v2479
    %2740 = vmatprep.subr.bf16.mxu0 %v2485
    %2741 = vmatpush1.bf16.msra.mxu0 %v2484
    %2742 = vmatprep.subr.bf16.mxu0 %v2489
    %2743 = vmatpush1.bf16.msra.mxu0 %v2488
    %2744 = vmatprep.subr.bf16.mxu0 %v2493
    %2745 = vmatpush1.bf16.msra.mxu0 %v2492
    %2746 = vmatprep.subr.bf16.mxu0 %v2497
    %2747 = vmatpush1.bf16.msra.mxu0 %v2496
    %2748 = vmatprep.subr.bf16.mxu0 %v2501
    %2749 = vmatpush1.bf16.msra.mxu0 %v2500
    %2750 = vmatprep.subr.bf16.mxu0 %v2505
    %2751 = vmatpush1.bf16.msra.mxu0 %v2504
    %2752 = vmatprep.subr.bf16.mxu0 %v2509
    %2753 = vmatpush1.bf16.msra.mxu0 %v2508
    %2754 = vmatprep.subr.bf16.mxu0 %v2513
    %2755 = vmatpush1.bf16.msra.mxu0 %v2512
    %2756 = vmatprep.subr.bf16.mxu0 %v2517
    %2757 = vmatpush1.bf16.msra.mxu0 %v2516
    %2758 = vmatprep.subr.bf16.mxu0 %v2521
    %2759 = vmatpush1.bf16.msra.mxu0 %v2520
    %2760 = vmatprep.subr.bf16.mxu0 %v2525
    %2761 = vmatpush1.bf16.msra.mxu0 %v2524
    %2762 = vmatprep.subr.bf16.mxu0 %v2529
    %2763 = vmatpush1.bf16.msra.mxu0 %v2528
    %2764 = vmatprep.subr.bf16.mxu0 %v2533
    %2765 = vmatpush1.bf16.msra.mxu0 %v2532
    %2766 = vmatprep.subr.bf16.mxu0 %v2537
    %2767 = vmatpush1.bf16.msra.mxu0 %v2536
    %2768 = vmatprep.subr.bf16.mxu0 %v2541
    %2769 = vmatpush1.bf16.msra.mxu0 %v2540
    %2770 = vmatprep.subr.bf16.mxu0 %v2545
    %2771 = vmatpush1.bf16.msra.mxu0 %v2544
    %2772 = vmatprep.mubr.bf16.mxu0 %v1946
    %2773 = vmatmul.mubr.bf16.gmra.mrb[0].mxu0 %v1945
    %v2774 = vpop.f32.mrb[0].mxu0
    %v2775 = vadd.f32 %v2083, %v2774
    %v2776 = vpop.f32.mrb[0].mxu0
    %v2777 = vadd.f32 %v2087, %v2776
    %v2778 = vpop.f32.mrb[0].mxu0
    %v2779 = vpop.f32.mrb[0].mxu0
    %2780 = vdwg.mxu0
    %2781 = vmatprep.subr.bf16.mxu0 %v2549
    %2782 = vmatpush1.bf16.msra.mxu0 %v2548
    %2783 = vmatprep.subr.bf16.mxu0 %v2553
    %2784 = vmatpush1.bf16.msra.mxu0 %v2552
    %2785 = vmatprep.subr.bf16.mxu0 %v2557
    %2786 = vmatpush1.bf16.msra.mxu0 %v2556
    %2787 = vmatprep.subr.bf16.mxu0 %v2561
    %2788 = vmatpush1.bf16.msra.mxu0 %v2560
    %2789 = vmatprep.subr.bf16.mxu0 %v2565
    %2790 = vmatpush1.bf16.msra.mxu0 %v2564
    %2791 = vmatprep.subr.bf16.mxu0 %v2569
    %2792 = vmatpush1.bf16.msra.mxu0 %v2568
    %2793 = vmatprep.subr.bf16.mxu0 %v2573
    %2794 = vmatpush1.bf16.msra.mxu0 %v2572
    %2795 = vmatprep.subr.bf16.mxu0 %v2577
    %2796 = vmatpush1.bf16.msra.mxu0 %v2576
    %2797 = vmatprep.subr.bf16.mxu0 %v2581
    %2798 = vmatpush1.bf16.msra.mxu0 %v2580
    %2799 = vmatprep.subr.bf16.mxu0 %v2585
    %2800 = vmatpush1.bf16.msra.mxu0 %v2584
    %2801 = vmatprep.subr.bf16.mxu0 %v2589
    %2802 = vmatpush1.bf16.msra.mxu0 %v2588
    %2803 = vmatprep.subr.bf16.mxu0 %v2593
    %2804 = vmatpush1.bf16.msra.mxu0 %v2592
    %2805 = vmatprep.subr.bf16.mxu0 %v2597
    %2806 = vmatpush1.bf16.msra.mxu0 %v2596
    %2807 = vmatprep.subr.bf16.mxu0 %v2601
    %2808 = vmatpush1.bf16.msra.mxu0 %v2600
    %2809 = vmatprep.subr.bf16.mxu0 %v2605
    %2810 = vmatpush1.bf16.msra.mxu0 %v2604
    %2811 = vmatprep.subr.bf16.mxu0 %v2609
    %2812 = vmatpush1.bf16.msra.mxu0 %v2608
    %2813 = vmatprep.mubr.bf16.mxu0 %v1948
    %2814 = vmatmul.mubr.bf16.gmra.mrb[0].mxu0 %v1947
    %v2815 = vpop.f32.mrb[0].mxu0
    %v2816 = vadd.f32 %v2775, %v2815
    %v2817 = vpop.f32.mrb[0].mxu0
    %v2818 = vadd.f32 %v2777, %v2817
    %v2819 = vpop.f32.mrb[0].mxu0
    %v2820 = vpop.f32.mrb[0].mxu0
    %2821 = vdwg.mxu0
    %2822 = vmatprep.subr.bf16.mxu0 %v2487
    %2823 = vmatpush1.bf16.msra.mxu0 %v2486
    %2824 = vmatprep.subr.bf16.mxu0 %v2491
    %2825 = vmatpush1.bf16.msra.mxu0 %v2490
    %2826 = vmatprep.subr.bf16.mxu0 %v2495
    %2827 = vmatpush1.bf16.msra.mxu0 %v2494
    %2828 = vmatprep.subr.bf16.mxu0 %v2499
    %2829 = vmatpush1.bf16.msra.mxu0 %v2498
    %2830 = vmatprep.subr.bf16.mxu0 %v2503
    %2831 = vmatpush1.bf16.msra.mxu0 %v2502
    %2832 = vmatprep.subr.bf16.mxu0 %v2507
    %2833 = vmatpush1.bf16.msra.mxu0 %v2506
    %2834 = vmatprep.subr.bf16.mxu0 %v2511
    %2835 = vmatpush1.bf16.msra.mxu0 %v2510
    %2836 = vmatprep.subr.bf16.mxu0 %v2515
    %2837 = vmatpush1.bf16.msra.mxu0 %v2514
    %2838 = vmatprep.subr.bf16.mxu0 %v2519
    %2839 = vmatpush1.bf16.msra.mxu0 %v2518
    %2840 = vmatprep.subr.bf16.mxu0 %v2523
    %2841 = vmatpush1.bf16.msra.mxu0 %v2522
    %2842 = vmatprep.subr.bf16.mxu0 %v2527
    %2843 = vmatpush1.bf16.msra.mxu0 %v2526
    %2844 = vmatprep.subr.bf16.mxu0 %v2531
    %2845 = vmatpush1.bf16.msra.mxu0 %v2530
    %2846 = vmatprep.subr.bf16.mxu0 %v2535
    %2847 = vmatpush1.bf16.msra.mxu0 %v2534
    %2848 = vmatprep.subr.bf16.mxu0 %v2539
    %2849 = vmatpush1.bf16.msra.mxu0 %v2538
    %2850 = vmatprep.subr.bf16.mxu0 %v2543
    %2851 = vmatpush1.bf16.msra.mxu0 %v2542
    %2852 = vmatprep.subr.bf16.mxu0 %v2547
    %2853 = vmatpush1.bf16.msra.mxu0 %v2546
    %2854 = vmatprep.mubr.bf16.mxu0 %v1946
    %2855 = vmatmul.mubr.bf16.gmra.mrb[0].mxu0 %v1945
    %v2856 = vpop.f32.mrb[0].mxu0
    %v2857 = vadd.f32 %v2091, %v2856
    %v2858 = vpop.f32.mrb[0].mxu0
    %v2859 = vadd.f32 %v2095, %v2858
    %v2860 = vpop.f32.mrb[0].mxu0
    %v2861 = vpop.f32.mrb[0].mxu0
    %2862 = vdwg.mxu0
    %2863 = vmatprep.subr.bf16.mxu0 %v2551
    %2864 = vmatpush1.bf16.msra.mxu0 %v2550
    %2865 = vmatprep.subr.bf16.mxu0 %v2555
    %2866 = vmatpush1.bf16.msra.mxu0 %v2554
    %2867 = vmatprep.subr.bf16.mxu0 %v2559
    %2868 = vmatpush1.bf16.msra.mxu0 %v2558
    %2869 = vmatprep.subr.bf16.mxu0 %v2563
    %2870 = vmatpush1.bf16.msra.mxu0 %v2562
    %2871 = vmatprep.subr.bf16.mxu0 %v2567
    %2872 = vmatpush1.bf16.msra.mxu0 %v2566
    %2873 = vmatprep.subr.bf16.mxu0 %v2571
    %2874 = vmatpush1.bf16.msra.mxu0 %v2570
    %2875 = vmatprep.subr.bf16.mxu0 %v2575
    %2876 = vmatpush1.bf16.msra.mxu0 %v2574
    %2877 = vmatprep.subr.bf16.mxu0 %v2579
    %2878 = vmatpush1.bf16.msra.mxu0 %v2578
    %2879 = vmatprep.subr.bf16.mxu0 %v2583
    %2880 = vmatpush1.bf16.msra.mxu0 %v2582
    %2881 = vmatprep.subr.bf16.mxu0 %v2587
    %2882 = vmatpush1.bf16.msra.mxu0 %v2586
    %2883 = vmatprep.subr.bf16.mxu0 %v2591
    %2884 = vmatpush1.bf16.msra.mxu0 %v2590
    %2885 = vmatprep.subr.bf16.mxu0 %v2595
    %2886 = vmatpush1.bf16.msra.mxu0 %v2594
    %2887 = vmatprep.subr.bf16.mxu0 %v2599
    %2888 = vmatpush1.bf16.msra.mxu0 %v2598
    %2889 = vmatprep.subr.bf16.mxu0 %v2603
    %2890 = vmatpush1.bf16.msra.mxu0 %v2602
    %2891 = vmatprep.subr.bf16.mxu0 %v2607
    %2892 = vmatpush1.bf16.msra.mxu0 %v2606
    %2893 = vmatprep.subr.bf16.mxu0 %v2611
    %2894 = vmatpush1.bf16.msra.mxu0 %v2610
    %2895 = vmatprep.mubr.bf16.mxu0 %v1948
    %2896 = vmatmul.mubr.bf16.gmra.mrb[0].mxu0 %v1947
    %v2897 = vpop.f32.mrb[0].mxu0
    %v2898 = vadd.f32 %v2857, %v2897
    %v2899 = vpop.f32.mrb[0].mxu0
    %v2900 = vadd.f32 %v2859, %v2899
    %v2901 = vpop.f32.mrb[0].mxu0
    %v2902 = vpop.f32.mrb[0].mxu0
    %2903 = vdwg.mxu0
    %v2904 = vmax.f32 %v2816, 0.0
    %v2905 = vmax.f32 %v2818, 0.0
    %v2906 = vmax.f32 %v2898, 0.0
    %v2907 = vmax.f32 %v2900, 0.0
    %v2908 = vpack.c.bf16 %v2904, %v2904
    %v2909 = vpack.c.bf16 %v2905, %v2905
    %v2910 = vpack.c.bf16 %v2906, %v2906
    %v2911 = vpack.c.bf16 %v2907, %v2907
    %v2912 = vld [vmem:[#allocation9] sm:$0xf]
    %v2913 = vld [vmem:[#allocation9 + $0x4] sm:$0xf]
    %v2914 = vld [vmem:[#allocation9 + $0x8] sm:$0xf]
    %v2915 = vld [vmem:[#allocation9 + $0xc] sm:$0xf]
    %v2916 = vld [vmem:[#allocation9 + $0x10] sm:$0xf]
    %v2917 = vld [vmem:[#allocation9 + $0x14] sm:$0xf]
    %v2918 = vld [vmem:[#allocation9 + $0x18] sm:$0xf]
    %v2919 = vld [vmem:[#allocation9 + $0x1c] sm:$0xf]
    %v2920 = vld [vmem:[#allocation9 + $0x20] sm:$0xf]
    %v2921 = vld [vmem:[#allocation9 + $0x24] sm:$0xf]
    %v2922 = vld [vmem:[#allocation9 + $0x28] sm:$0xf]
    %v2923 = vld [vmem:[#allocation9 + $0x2c] sm:$0xf]
    %v2924 = vld [vmem:[#allocation9 + $0x30] sm:$0xf]
    %v2925 = vld [vmem:[#allocation9 + $0x34] sm:$0xf]
    %v2926 = vld [vmem:[#allocation9 + $0x38] sm:$0xf]
    %v2927 = vld [vmem:[#allocation9 + $0x3c] sm:$0xf]
    %v2928 = vld [vmem:[#allocation9 + $0x40] sm:$0xf]
    %v2929 = vld [vmem:[#allocation9 + $0x44] sm:$0xf]
    %v2930 = vld [vmem:[#allocation9 + $0x48] sm:$0xf]
    %v2931 = vld [vmem:[#allocation9 + $0x4c] sm:$0xf]
    %v2932 = vld [vmem:[#allocation9 + $0x50] sm:$0xf]
    %v2933 = vld [vmem:[#allocation9 + $0x54] sm:$0xf]
    %v2934 = vld [vmem:[#allocation9 + $0x58] sm:$0xf]
    %v2935 = vld [vmem:[#allocation9 + $0x5c] sm:$0xf]
    %v2936 = vld [vmem:[#allocation9 + $0x60] sm:$0xf]
    %v2937 = vld [vmem:[#allocation9 + $0x64] sm:$0xf]
    %v2938 = vld [vmem:[#allocation9 + $0x68] sm:$0xf]
    %v2939 = vld [vmem:[#allocation9 + $0x6c] sm:$0xf]
    %v2940 = vld [vmem:[#allocation9 + $0x70] sm:$0xf]
    %v2941 = vld [vmem:[#allocation9 + $0x74] sm:$0xf]
    %v2942 = vld [vmem:[#allocation9 + $0x78] sm:$0xf]
    %v2943 = vld [vmem:[#allocation9 + $0x7c] sm:$0xf]
    %v2944 = vld [vmem:[#allocation9 + $0x80] sm:$0xf]
    %v2945 = vld [vmem:[#allocation9 + $0x84] sm:$0xf]
    %v2946 = vld [vmem:[#allocation9 + $0x88] sm:$0xf]
    %v2947 = vld [vmem:[#allocation9 + $0x8c] sm:$0xf]
    %v2948 = vld [vmem:[#allocation9 + $0x90] sm:$0xf]
    %v2949 = vld [vmem:[#allocation9 + $0x94] sm:$0xf]
    %v2950 = vld [vmem:[#allocation9 + $0x98] sm:$0xf]
    %v2951 = vld [vmem:[#allocation9 + $0x9c] sm:$0xf]
    %v2952 = vld [vmem:[#allocation9 + $0xa0] sm:$0xf]
    %v2953 = vld [vmem:[#allocation9 + $0xa4] sm:$0xf]
    %v2954 = vld [vmem:[#allocation9 + $0xa8] sm:$0xf]
    %v2955 = vld [vmem:[#allocation9 + $0xac] sm:$0xf]
    %v2956 = vld [vmem:[#allocation9 + $0xb0] sm:$0xf]
    %v2957 = vld [vmem:[#allocation9 + $0xb4] sm:$0xf]
    %v2958 = vld [vmem:[#allocation9 + $0xb8] sm:$0xf]
    %v2959 = vld [vmem:[#allocation9 + $0xbc] sm:$0xf]
    %v2960 = vld [vmem:[#allocation9 + $0xc0] sm:$0xf]
    %v2961 = vld [vmem:[#allocation9 + $0xc4] sm:$0xf]
    %v2962 = vld [vmem:[#allocation9 + $0xc8] sm:$0xf]
    %v2963 = vld [vmem:[#allocation9 + $0xcc] sm:$0xf]
    %v2964 = vld [vmem:[#allocation9 + $0xd0] sm:$0xf]
    %v2965 = vld [vmem:[#allocation9 + $0xd4] sm:$0xf]
    %v2966 = vld [vmem:[#allocation9 + $0xd8] sm:$0xf]
    %v2967 = vld [vmem:[#allocation9 + $0xdc] sm:$0xf]
    %v2968 = vld [vmem:[#allocation9 + $0xe0] sm:$0xf]
    %v2969 = vld [vmem:[#allocation9 + $0xe4] sm:$0xf]
    %v2970 = vld [vmem:[#allocation9 + $0xe8] sm:$0xf]
    %v2971 = vld [vmem:[#allocation9 + $0xec] sm:$0xf]
    %v2972 = vld [vmem:[#allocation9 + $0xf0] sm:$0xf]
    %v2973 = vld [vmem:[#allocation9 + $0xf4] sm:$0xf]
    %v2974 = vld [vmem:[#allocation9 + $0xf8] sm:$0xf]
    %v2975 = vld [vmem:[#allocation9 + $0xfc] sm:$0xf]
    %v2976 = vld [vmem:[%s14 + $0x3] ss:$0 sm:$0xff]
    %v3041 = vunpack.c.l.b16 %v2912
    %v3042 = vunpack.c.l.b16 %v2913
    %v3043 = vunpack.c.l.b16 %v2914
    %v3044 = vunpack.c.l.b16 %v2915
    %v3045 = vunpack.c.l.b16 %v2916
    %v3046 = vunpack.c.l.b16 %v2917
    %v3047 = vunpack.c.l.b16 %v2918
    %v3048 = vunpack.c.l.b16 %v2919
    %v3049 = vunpack.c.l.b16 %v2920
    %v3050 = vunpack.c.l.b16 %v2921
    %v3051 = vunpack.c.l.b16 %v2922
    %v3052 = vunpack.c.l.b16 %v2923
    %v3053 = vunpack.c.l.b16 %v2924
    %v3054 = vunpack.c.l.b16 %v2925
    %v3055 = vunpack.c.l.b16 %v2926
    %v3056 = vunpack.c.l.b16 %v2927
    %v3057 = vunpack.c.l.b16 %v2928
    %v3058 = vunpack.c.l.b16 %v2929
    %v3059 = vunpack.c.l.b16 %v2930
    %v3060 = vunpack.c.l.b16 %v2931
    %v3061 = vunpack.c.l.b16 %v2932
    %v3062 = vunpack.c.l.b16 %v2933
    %v3063 = vunpack.c.l.b16 %v2934
    %v3064 = vunpack.c.l.b16 %v2935
    %v3065 = vunpack.c.l.b16 %v2936
    %v3066 = vunpack.c.l.b16 %v2937
    %v3067 = vunpack.c.l.b16 %v2938
    %v3068 = vunpack.c.l.b16 %v2939
    %v3069 = vunpack.c.l.b16 %v2940
    %v3070 = vunpack.c.l.b16 %v2941
    %v3071 = vunpack.c.l.b16 %v2942
    %v3072 = vunpack.c.l.b16 %v2943
    %v3073 = vunpack.c.l.b16 %v2944
    %v3074 = vunpack.c.l.b16 %v2945
    %v3075 = vunpack.c.l.b16 %v2946
    %v3076 = vunpack.c.l.b16 %v2947
    %v3077 = vunpack.c.l.b16 %v2948
    %v3078 = vunpack.c.l.b16 %v2949
    %v3079 = vunpack.c.l.b16 %v2950
    %v3080 = vunpack.c.l.b16 %v2951
    %v3081 = vunpack.c.l.b16 %v2952
    %v3082 = vunpack.c.l.b16 %v2953
    %v3083 = vunpack.c.l.b16 %v2954
    %v3084 = vunpack.c.l.b16 %v2955
    %v3085 = vunpack.c.l.b16 %v2956
    %v3086 = vunpack.c.l.b16 %v2957
    %v3087 = vunpack.c.l.b16 %v2958
    %v3088 = vunpack.c.l.b16 %v2959
    %v3089 = vunpack.c.l.b16 %v2960
    %v3090 = vunpack.c.l.b16 %v2961
    %v3091 = vunpack.c.l.b16 %v2962
    %v3092 = vunpack.c.l.b16 %v2963
    %v3093 = vunpack.c.l.b16 %v2964
    %v3094 = vunpack.c.l.b16 %v2965
    %v3095 = vunpack.c.l.b16 %v2966
    %v3096 = vunpack.c.l.b16 %v2967
    %v3097 = vunpack.c.l.b16 %v2968
    %v3098 = vunpack.c.l.b16 %v2969
    %v3099 = vunpack.c.l.b16 %v2970
    %v3100 = vunpack.c.l.b16 %v2971
    %v3101 = vunpack.c.l.b16 %v2972
    %v3102 = vunpack.c.l.b16 %v2973
    %v3103 = vunpack.c.l.b16 %v2974
    %v3104 = vunpack.c.l.b16 %v2975
    %v3105 = vpack.c.b16 %v3042, %v3041
    %v3106 = vpack.c.b16 %v3044, %v3043
    %v3107 = vpack.c.b16 %v3046, %v3045
    %v3108 = vpack.c.b16 %v3048, %v3047
    %v3109 = vpack.c.b16 %v3050, %v3049
    %v3110 = vpack.c.b16 %v3052, %v3051
    %v3111 = vpack.c.b16 %v3054, %v3053
    %v3112 = vpack.c.b16 %v3056, %v3055
    %v3113 = vpack.c.b16 %v3058, %v3057
    %v3114 = vpack.c.b16 %v3060, %v3059
    %v3115 = vpack.c.b16 %v3062, %v3061
    %v3116 = vpack.c.b16 %v3064, %v3063
    %v3117 = vpack.c.b16 %v3066, %v3065
    %v3118 = vpack.c.b16 %v3068, %v3067
    %v3119 = vpack.c.b16 %v3070, %v3069
    %v3120 = vpack.c.b16 %v3072, %v3071
    %v3121 = vpack.c.b16 %v3074, %v3073
    %v3122 = vpack.c.b16 %v3076, %v3075
    %v3123 = vpack.c.b16 %v3078, %v3077
    %v3124 = vpack.c.b16 %v3080, %v3079
    %v3125 = vpack.c.b16 %v3082, %v3081
    %v3126 = vpack.c.b16 %v3084, %v3083
    %v3127 = vpack.c.b16 %v3086, %v3085
    %v3128 = vpack.c.b16 %v3088, %v3087
    %v3129 = vpack.c.b16 %v3090, %v3089
    %v3130 = vpack.c.b16 %v3092, %v3091
    %v3131 = vpack.c.b16 %v3094, %v3093
    %v3132 = vpack.c.b16 %v3096, %v3095
    %v3133 = vpack.c.b16 %v3098, %v3097
    %v3134 = vpack.c.b16 %v3100, %v3099
    %v3135 = vpack.c.b16 %v3102, %v3101
    %v3136 = vpack.c.b16 %v3104, %v3103
    %3169 = vmatprep.subr.bf16.mxu0 0
    %3170 = vmatpush1.bf16.msra.mxu0 %v3105
    %3171 = vmatprep.subr.bf16.mxu0 0
    %3172 = vmatpush1.bf16.msra.mxu0 %v3106
    %3173 = vmatprep.subr.bf16.mxu0 0
    %3174 = vmatpush1.bf16.msra.mxu0 %v3107
    %3175 = vmatprep.subr.bf16.mxu0 0
    %3176 = vmatpush1.bf16.msra.mxu0 %v3108
    %3177 = vmatprep.subr.bf16.mxu0 0
    %3178 = vmatpush1.bf16.msra.mxu0 %v3109
    %3179 = vmatprep.subr.bf16.mxu0 0
    %3180 = vmatpush1.bf16.msra.mxu0 %v3110
    %3181 = vmatprep.subr.bf16.mxu0 0
    %3182 = vmatpush1.bf16.msra.mxu0 %v3111
    %3183 = vmatprep.subr.bf16.mxu0 0
    %3184 = vmatpush1.bf16.msra.mxu0 %v3112
    %3185 = vmatprep.subr.bf16.mxu0 0
    %3186 = vmatpush1.bf16.msra.mxu0 %v3113
    %3187 = vmatprep.subr.bf16.mxu0 0
    %3188 = vmatpush1.bf16.msra.mxu0 %v3114
    %3189 = vmatprep.subr.bf16.mxu0 0
    %3190 = vmatpush1.bf16.msra.mxu0 %v3115
    %3191 = vmatprep.subr.bf16.mxu0 0
    %3192 = vmatpush1.bf16.msra.mxu0 %v3116
    %3193 = vmatprep.subr.bf16.mxu0 0
    %3194 = vmatpush1.bf16.msra.mxu0 %v3117
    %3195 = vmatprep.subr.bf16.mxu0 0
    %3196 = vmatpush1.bf16.msra.mxu0 %v3118
    %3197 = vmatprep.subr.bf16.mxu0 0
    %3198 = vmatpush1.bf16.msra.mxu0 %v3119
    %3199 = vmatprep.subr.bf16.mxu0 0
    %3200 = vmatpush1.bf16.msra.mxu0 %v3120
    %3201 = vmatprep.mubr.bf16.mxu0 %v2909
    %3202 = vmatmul.mubr.bf16.gmra.mrb[0].mxu0 %v2908
    %v3203 = vpop.f32.mrb[0].mxu0
    %v3204 = vadd.f32 %v2976, %v3203
    %v3205 = vpop.f32.mrb[0].mxu0
    %v3206 = vpop.f32.mrb[0].mxu0
    %v3207 = vpop.f32.mrb[0].mxu0
    %3208 = vdwg.mxu0
    %3209 = vmatprep.subr.bf16.mxu0 0
    %3210 = vmatpush1.bf16.msra.mxu0 %v3121
    %3211 = vmatprep.subr.bf16.mxu0 0
    %3212 = vmatpush1.bf16.msra.mxu0 %v3122
    %3213 = vmatprep.subr.bf16.mxu0 0
    %3214 = vmatpush1.bf16.msra.mxu0 %v3123
    %3215 = vmatprep.subr.bf16.mxu0 0
    %3216 = vmatpush1.bf16.msra.mxu0 %v3124
    %3217 = vmatprep.subr.bf16.mxu0 0
    %3218 = vmatpush1.bf16.msra.mxu0 %v3125
    %3219 = vmatprep.subr.bf16.mxu0 0
    %3220 = vmatpush1.bf16.msra.mxu0 %v3126
    %3221 = vmatprep.subr.bf16.mxu0 0
    %3222 = vmatpush1.bf16.msra.mxu0 %v3127
    %3223 = vmatprep.subr.bf16.mxu0 0
    %3224 = vmatpush1.bf16.msra.mxu0 %v3128
    %3225 = vmatprep.subr.bf16.mxu0 0
    %3226 = vmatpush1.bf16.msra.mxu0 %v3129
    %3227 = vmatprep.subr.bf16.mxu0 0
    %3228 = vmatpush1.bf16.msra.mxu0 %v3130
    %3229 = vmatprep.subr.bf16.mxu0 0
    %3230 = vmatpush1.bf16.msra.mxu0 %v3131
    %3231 = vmatprep.subr.bf16.mxu0 0
    %3232 = vmatpush1.bf16.msra.mxu0 %v3132
    %3233 = vmatprep.subr.bf16.mxu0 0
    %3234 = vmatpush1.bf16.msra.mxu0 %v3133
    %3235 = vmatprep.subr.bf16.mxu0 0
    %3236 = vmatpush1.bf16.msra.mxu0 %v3134
    %3237 = vmatprep.subr.bf16.mxu0 0
    %3238 = vmatpush1.bf16.msra.mxu0 %v3135
    %3239 = vmatprep.subr.bf16.mxu0 0
    %3240 = vmatpush1.bf16.msra.mxu0 %v3136
    %3241 = vmatprep.mubr.bf16.mxu0 %v2911
    %3242 = vmatmul.mubr.bf16.gmra.mrb[0].mxu0 %v2910
    %v3243 = vpop.f32.mrb[0].mxu0
    %v3244 = vadd.f32 %v3204, %v3243
    %v3245 = vpop.f32.mrb[0].mxu0
    %v3246 = vpop.f32.mrb[0].mxu0
    %v3247 = vpop.f32.mrb[0].mxu0
    %3248 = vdwg.mxu0
    %v3249 = vld [vmem:[#allocation10] sm:$0xf]
    %v3250 = vld [vmem:[#allocation10 + $0x4] sm:$0xf]
    %v3251 = vld [vmem:[#allocation10 + $0x8] sm:$0xf]
    %v3252 = vld [vmem:[#allocation10 + $0xc] sm:$0xf]
    %v3253 = vld [vmem:[#allocation10 + $0x10] sm:$0xf]
    %v3254 = vld [vmem:[#allocation10 + $0x14] sm:$0xf]
    %v3255 = vld [vmem:[#allocation10 + $0x18] sm:$0xf]
    %v3256 = vld [vmem:[#allocation10 + $0x1c] sm:$0xf]
    %v3257 = vld [vmem:[#allocation10 + $0x20] sm:$0xf]
    %v3258 = vld [vmem:[#allocation10 + $0x24] sm:$0xf]
    %v3259 = vld [vmem:[#allocation10 + $0x28] sm:$0xf]
    %v3260 = vld [vmem:[#allocation10 + $0x2c] sm:$0xf]
    %v3261 = vld [vmem:[#allocation10 + $0x30] sm:$0xf]
    %v3262 = vld [vmem:[#allocation10 + $0x34] sm:$0xf]
    %v3263 = vld [vmem:[#allocation10 + $0x38] sm:$0xf]
    %v3264 = vld [vmem:[#allocation10 + $0x3c] sm:$0xf]
    %v3265 = vld [vmem:[#allocation10 + $0x40] sm:$0xf]
    %v3266 = vld [vmem:[#allocation10 + $0x44] sm:$0xf]
    %v3267 = vld [vmem:[#allocation10 + $0x48] sm:$0xf]
    %v3268 = vld [vmem:[#allocation10 + $0x4c] sm:$0xf]
    %v3269 = vld [vmem:[#allocation10 + $0x50] sm:$0xf]
    %v3270 = vld [vmem:[#allocation10 + $0x54] sm:$0xf]
    %v3271 = vld [vmem:[#allocation10 + $0x58] sm:$0xf]
    %v3272 = vld [vmem:[#allocation10 + $0x5c] sm:$0xf]
    %v3273 = vld [vmem:[#allocation10 + $0x60] sm:$0xf]
    %v3274 = vld [vmem:[#allocation10 + $0x64] sm:$0xf]
    %v3275 = vld [vmem:[#allocation10 + $0x68] sm:$0xf]
    %v3276 = vld [vmem:[#allocation10 + $0x6c] sm:$0xf]
    %v3277 = vld [vmem:[#allocation10 + $0x70] sm:$0xf]
    %v3278 = vld [vmem:[#allocation10 + $0x74] sm:$0xf]
    %v3279 = vld [vmem:[#allocation10 + $0x78] sm:$0xf]
    %v3280 = vld [vmem:[#allocation10 + $0x7c] sm:$0xf]
    %v3281 = vld [vmem:[#allocation10 + $0x80] sm:$0xf]
    %v3282 = vld [vmem:[#allocation10 + $0x84] sm:$0xf]
    %v3283 = vld [vmem:[#allocation10 + $0x88] sm:$0xf]
    %v3284 = vld [vmem:[#allocation10 + $0x8c] sm:$0xf]
    %v3285 = vld [vmem:[#allocation10 + $0x90] sm:$0xf]
    %v3286 = vld [vmem:[#allocation10 + $0x94] sm:$0xf]
    %v3287 = vld [vmem:[#allocation10 + $0x98] sm:$0xf]
    %v3288 = vld [vmem:[#allocation10 + $0x9c] sm:$0xf]
    %v3289 = vld [vmem:[#allocation10 + $0xa0] sm:$0xf]
    %v3290 = vld [vmem:[#allocation10 + $0xa4] sm:$0xf]
    %v3291 = vld [vmem:[#allocation10 + $0xa8] sm:$0xf]
    %v3292 = vld [vmem:[#allocation10 + $0xac] sm:$0xf]
    %v3293 = vld [vmem:[#allocation10 + $0xb0] sm:$0xf]
    %v3294 = vld [vmem:[#allocation10 + $0xb4] sm:$0xf]
    %v3295 = vld [vmem:[#allocation10 + $0xb8] sm:$0xf]
    %v3296 = vld [vmem:[#allocation10 + $0xbc] sm:$0xf]
    %v3297 = vld [vmem:[#allocation10 + $0xc0] sm:$0xf]
    %v3298 = vld [vmem:[#allocation10 + $0xc4] sm:$0xf]
    %v3299 = vld [vmem:[#allocation10 + $0xc8] sm:$0xf]
    %v3300 = vld [vmem:[#allocation10 + $0xcc] sm:$0xf]
    %v3301 = vld [vmem:[#allocation10 + $0xd0] sm:$0xf]
    %v3302 = vld [vmem:[#allocation10 + $0xd4] sm:$0xf]
    %v3303 = vld [vmem:[#allocation10 + $0xd8] sm:$0xf]
    %v3304 = vld [vmem:[#allocation10 + $0xdc] sm:$0xf]
    %v3305 = vld [vmem:[#allocation10 + $0xe0] sm:$0xf]
    %v3306 = vld [vmem:[#allocation10 + $0xe4] sm:$0xf]
    %v3307 = vld [vmem:[#allocation10 + $0xe8] sm:$0xf]
    %v3308 = vld [vmem:[#allocation10 + $0xec] sm:$0xf]
    %v3309 = vld [vmem:[#allocation10 + $0xf0] sm:$0xf]
    %v3310 = vld [vmem:[#allocation10 + $0xf4] sm:$0xf]
    %v3311 = vld [vmem:[#allocation10 + $0xf8] sm:$0xf]
    %v3312 = vld [vmem:[#allocation10 + $0xfc] sm:$0xf]
    %v3313 = vld [vmem:[%s14 + $0x4] ss:$0 sm:$0xff]
    %v3378 = vunpack.c.l.b16 %v3249
    %v3379 = vunpack.c.l.b16 %v3250
    %v3380 = vunpack.c.l.b16 %v3251
    %v3381 = vunpack.c.l.b16 %v3252
    %v3382 = vunpack.c.l.b16 %v3253
    %v3383 = vunpack.c.l.b16 %v3254
    %v3384 = vunpack.c.l.b16 %v3255
    %v3385 = vunpack.c.l.b16 %v3256
    %v3386 = vunpack.c.l.b16 %v3257
    %v3387 = vunpack.c.l.b16 %v3258
    %v3388 = vunpack.c.l.b16 %v3259
    %v3389 = vunpack.c.l.b16 %v3260
    %v3390 = vunpack.c.l.b16 %v3261
    %v3391 = vunpack.c.l.b16 %v3262
    %v3392 = vunpack.c.l.b16 %v3263
    %v3393 = vunpack.c.l.b16 %v3264
    %v3394 = vunpack.c.l.b16 %v3265
    %v3395 = vunpack.c.l.b16 %v3266
    %v3396 = vunpack.c.l.b16 %v3267
    %v3397 = vunpack.c.l.b16 %v3268
    %v3398 = vunpack.c.l.b16 %v3269
    %v3399 = vunpack.c.l.b16 %v3270
    %v3400 = vunpack.c.l.b16 %v3271
    %v3401 = vunpack.c.l.b16 %v3272
    %v3402 = vunpack.c.l.b16 %v3273
    %v3403 = vunpack.c.l.b16 %v3274
    %v3404 = vunpack.c.l.b16 %v3275
    %v3405 = vunpack.c.l.b16 %v3276
    %v3406 = vunpack.c.l.b16 %v3277
    %v3407 = vunpack.c.l.b16 %v3278
    %v3408 = vunpack.c.l.b16 %v3279
    %v3409 = vunpack.c.l.b16 %v3280
    %v3410 = vunpack.c.l.b16 %v3281
    %v3411 = vunpack.c.l.b16 %v3282
    %v3412 = vunpack.c.l.b16 %v3283
    %v3413 = vunpack.c.l.b16 %v3284
    %v3414 = vunpack.c.l.b16 %v3285
    %v3415 = vunpack.c.l.b16 %v3286
    %v3416 = vunpack.c.l.b16 %v3287
    %v3417 = vunpack.c.l.b16 %v3288
    %v3418 = vunpack.c.l.b16 %v3289
    %v3419 = vunpack.c.l.b16 %v3290
    %v3420 = vunpack.c.l.b16 %v3291
    %v3421 = vunpack.c.l.b16 %v3292
    %v3422 = vunpack.c.l.b16 %v3293
    %v3423 = vunpack.c.l.b16 %v3294
    %v3424 = vunpack.c.l.b16 %v3295
    %v3425 = vunpack.c.l.b16 %v3296
    %v3426 = vunpack.c.l.b16 %v3297
    %v3427 = vunpack.c.l.b16 %v3298
    %v3428 = vunpack.c.l.b16 %v3299
    %v3429 = vunpack.c.l.b16 %v3300
    %v3430 = vunpack.c.l.b16 %v3301
    %v3431 = vunpack.c.l.b16 %v3302
    %v3432 = vunpack.c.l.b16 %v3303
    %v3433 = vunpack.c.l.b16 %v3304
    %v3434 = vunpack.c.l.b16 %v3305
    %v3435 = vunpack.c.l.b16 %v3306
    %v3436 = vunpack.c.l.b16 %v3307
    %v3437 = vunpack.c.l.b16 %v3308
    %v3438 = vunpack.c.l.b16 %v3309
    %v3439 = vunpack.c.l.b16 %v3310
    %v3440 = vunpack.c.l.b16 %v3311
    %v3441 = vunpack.c.l.b16 %v3312
    %v3442 = vpack.c.b16 %v3379, %v3378
    %v3443 = vpack.c.b16 %v3381, %v3380
    %v3444 = vpack.c.b16 %v3383, %v3382
    %v3445 = vpack.c.b16 %v3385, %v3384
    %v3446 = vpack.c.b16 %v3387, %v3386
    %v3447 = vpack.c.b16 %v3389, %v3388
    %v3448 = vpack.c.b16 %v3391, %v3390
    %v3449 = vpack.c.b16 %v3393, %v3392
    %v3450 = vpack.c.b16 %v3395, %v3394
    %v3451 = vpack.c.b16 %v3397, %v3396
    %v3452 = vpack.c.b16 %v3399, %v3398
    %v3453 = vpack.c.b16 %v3401, %v3400
    %v3454 = vpack.c.b16 %v3403, %v3402
    %v3455 = vpack.c.b16 %v3405, %v3404
    %v3456 = vpack.c.b16 %v3407, %v3406
    %v3457 = vpack.c.b16 %v3409, %v3408
    %v3458 = vpack.c.b16 %v3411, %v3410
    %v3459 = vpack.c.b16 %v3413, %v3412
    %v3460 = vpack.c.b16 %v3415, %v3414
    %v3461 = vpack.c.b16 %v3417, %v3416
    %v3462 = vpack.c.b16 %v3419, %v3418
    %v3463 = vpack.c.b16 %v3421, %v3420
    %v3464 = vpack.c.b16 %v3423, %v3422
    %v3465 = vpack.c.b16 %v3425, %v3424
    %v3466 = vpack.c.b16 %v3427, %v3426
    %v3467 = vpack.c.b16 %v3429, %v3428
    %v3468 = vpack.c.b16 %v3431, %v3430
    %v3469 = vpack.c.b16 %v3433, %v3432
    %v3470 = vpack.c.b16 %v3435, %v3434
    %v3471 = vpack.c.b16 %v3437, %v3436
    %v3472 = vpack.c.b16 %v3439, %v3438
    %v3473 = vpack.c.b16 %v3441, %v3440
    %3506 = vmatprep.subr.bf16.mxu0 0
    %3507 = vmatpush1.bf16.msra.mxu0 %v3442
    %3508 = vmatprep.subr.bf16.mxu0 0
    %3509 = vmatpush1.bf16.msra.mxu0 %v3443
    %3510 = vmatprep.subr.bf16.mxu0 0
    %3511 = vmatpush1.bf16.msra.mxu0 %v3444
    %3512 = vmatprep.subr.bf16.mxu0 0
    %3513 = vmatpush1.bf16.msra.mxu0 %v3445
    %3514 = vmatprep.subr.bf16.mxu0 0
    %3515 = vmatpush1.bf16.msra.mxu0 %v3446
    %3516 = vmatprep.subr.bf16.mxu0 0
    %3517 = vmatpush1.bf16.msra.mxu0 %v3447
    %3518 = vmatprep.subr.bf16.mxu0 0
    %3519 = vmatpush1.bf16.msra.mxu0 %v3448
    %3520 = vmatprep.subr.bf16.mxu0 0
    %3521 = vmatpush1.bf16.msra.mxu0 %v3449
    %3522 = vmatprep.subr.bf16.mxu0 0
    %3523 = vmatpush1.bf16.msra.mxu0 %v3450
    %3524 = vmatprep.subr.bf16.mxu0 0
    %3525 = vmatpush1.bf16.msra.mxu0 %v3451
    %3526 = vmatprep.subr.bf16.mxu0 0
    %3527 = vmatpush1.bf16.msra.mxu0 %v3452
    %3528 = vmatprep.subr.bf16.mxu0 0
    %3529 = vmatpush1.bf16.msra.mxu0 %v3453
    %3530 = vmatprep.subr.bf16.mxu0 0
    %3531 = vmatpush1.bf16.msra.mxu0 %v3454
    %3532 = vmatprep.subr.bf16.mxu0 0
    %3533 = vmatpush1.bf16.msra.mxu0 %v3455
    %3534 = vmatprep.subr.bf16.mxu0 0
    %3535 = vmatpush1.bf16.msra.mxu0 %v3456
    %3536 = vmatprep.subr.bf16.mxu0 0
    %3537 = vmatpush1.bf16.msra.mxu0 %v3457
    %3538 = vmatprep.mubr.bf16.mxu0 %v2909
    %3539 = vmatmul.mubr.bf16.gmra.mrb[0].mxu0 %v2908
    %v3540 = vpop.f32.mrb[0].mxu0
    %v3541 = vadd.f32 %v3313, %v3540
    %v3542 = vpop.f32.mrb[0].mxu0
    %v3543 = vpop.f32.mrb[0].mxu0
    %v3544 = vpop.f32.mrb[0].mxu0
    %3545 = vdwg.mxu0
    %3546 = vmatprep.subr.bf16.mxu0 0
    %3547 = vmatpush1.bf16.msra.mxu0 %v3458
    %3548 = vmatprep.subr.bf16.mxu0 0
    %3549 = vmatpush1.bf16.msra.mxu0 %v3459
    %3550 = vmatprep.subr.bf16.mxu0 0
    %3551 = vmatpush1.bf16.msra.mxu0 %v3460
    %3552 = vmatprep.subr.bf16.mxu0 0
    %3553 = vmatpush1.bf16.msra.mxu0 %v3461
    %3554 = vmatprep.subr.bf16.mxu0 0
    %3555 = vmatpush1.bf16.msra.mxu0 %v3462
    %3556 = vmatprep.subr.bf16.mxu0 0
    %3557 = vmatpush1.bf16.msra.mxu0 %v3463
    %3558 = vmatprep.subr.bf16.mxu0 0
    %3559 = vmatpush1.bf16.msra.mxu0 %v3464
    %3560 = vmatprep.subr.bf16.mxu0 0
    %3561 = vmatpush1.bf16.msra.mxu0 %v3465
    %3562 = vmatprep.subr.bf16.mxu0 0
    %3563 = vmatpush1.bf16.msra.mxu0 %v3466
    %3564 = vmatprep.subr.bf16.mxu0 0
    %3565 = vmatpush1.bf16.msra.mxu0 %v3467
    %3566 = vmatprep.subr.bf16.mxu0 0
    %3567 = vmatpush1.bf16.msra.mxu0 %v3468
    %3568 = vmatprep.subr.bf16.mxu0 0
    %3569 = vmatpush1.bf16.msra.mxu0 %v3469
    %3570 = vmatprep.subr.bf16.mxu0 0
    %3571 = vmatpush1.bf16.msra.mxu0 %v3470
    %3572 = vmatprep.subr.bf16.mxu0 0
    %3573 = vmatpush1.bf16.msra.mxu0 %v3471
    %3574 = vmatprep.subr.bf16.mxu0 0
    %3575 = vmatpush1.bf16.msra.mxu0 %v3472
    %3576 = vmatprep.subr.bf16.mxu0 0
    %3577 = vmatpush1.bf16.msra.mxu0 %v3473
    %3578 = vmatprep.mubr.bf16.mxu0 %v2911
    %3579 = vmatmul.mubr.bf16.gmra.mrb[0].mxu0 %v2910
    %v3580 = vpop.f32.mrb[0].mxu0
    %v3581 = vadd.f32 %v3541, %v3580
    %v3582 = vpop.f32.mrb[0].mxu0
    %v3583 = vpop.f32.mrb[0].mxu0
    %v3584 = vpop.f32.mrb[0].mxu0
    %3585 = vdwg.mxu0
    %3586 = vst [vmem:[%s16] sm:$0xff] %v3244
    %3587 = vst [vmem:[%s17] sm:$0xff] %v3581
    %v3588 = vld [vmem:[%s2] sm:$0xff]
    %v3589 = vmul.f32 %v3581, 0.5
    %v3590 = vmul.f32 %v3589, 1.442695
    %v3591 = vpow.pop %v3590
    %v3592 = vmul.f32 %v3588, %v3591
    %v3593 = vadd.f32 %v3244, %v3592
    %v3594 = vpack.c.bf16 %v3593, %v3593
    %v3595 = vld [vmem:[#allocation12] sm:$0xff]
    %v3596 = vld [vmem:[#allocation12 + $0x8] sm:$0xff]
    %v3597 = vld [vmem:[#allocation12 + $0x10] sm:$0xff]
    %v3598 = vld [vmem:[#allocation12 + $0x18] sm:$0xff]
    %v3599 = vld [vmem:[#allocation12 + $0x20] sm:$0xff]
    %v3600 = vld [vmem:[#allocation12 + $0x28] sm:$0xff]
    %v3601 = vld [vmem:[#allocation12 + $0x30] sm:$0xff]
    %v3602 = vld [vmem:[#allocation12 + $0x38] sm:$0xff]
    %v3603 = vld [vmem:[#allocation12 + $0x40] sm:$0xff]
    %v3604 = vld [vmem:[#allocation12 + $0x48] sm:$0xff]
    %v3605 = vld [vmem:[#allocation12 + $0x50] sm:$0xff]
    %v3606 = vld [vmem:[#allocation12 + $0x58] sm:$0xff]
    %v3607 = vld [vmem:[#allocation12 + $0x60] sm:$0xff]
    %v3608 = vld [vmem:[#allocation12 + $0x68] sm:$0xff]
    %v3609 = vld [vmem:[#allocation12 + $0x70] sm:$0xff]
    %v3610 = vld [vmem:[#allocation12 + $0x78] sm:$0xff]
    %v3611 = vld [vmem:[#allocation12 + $0x80] sm:$0xff]
    %v3612 = vld [vmem:[#allocation12 + $0x88] sm:$0xff]
    %v3613 = vld [vmem:[#allocation12 + $0x90] sm:$0xff]
    %v3614 = vld [vmem:[#allocation12 + $0x98] sm:$0xff]
    %v3615 = vld [vmem:[#allocation12 + $0xa0] sm:$0xff]
    %v3616 = vld [vmem:[#allocation12 + $0xa8] sm:$0xff]
    %v3617 = vld [vmem:[#allocation12 + $0xb0] sm:$0xff]
    %v3618 = vld [vmem:[#allocation12 + $0xb8] sm:$0xff]
    %v3619 = vld [vmem:[#allocation12 + $0xc0] sm:$0xff]
    %v3620 = vld [vmem:[#allocation12 + $0xc8] sm:$0xff]
    %v3621 = vld [vmem:[#allocation12 + $0xd0] sm:$0xff]
    %v3622 = vld [vmem:[#allocation12 + $0xd8] sm:$0xff]
    %v3623 = vld [vmem:[#allocation12 + $0xe0] sm:$0xff]
    %v3624 = vld [vmem:[#allocation12 + $0xe8] sm:$0xff]
    %v3625 = vld [vmem:[#allocation12 + $0xf0] sm:$0xff]
    %v3626 = vld [vmem:[#allocation12 + $0xf8] sm:$0xff]
    %v3627 = vld [vmem:[#allocation13] sm:$0xff]
    %v3628 = vld [vmem:[#allocation13 + $0x8] sm:$0xff]
    %v3629 = vld [vmem:[#allocation13 + $0x10] sm:$0xff]
    %v3630 = vld [vmem:[#allocation13 + $0x18] sm:$0xff]
    %v3631 = vld [vmem:[#allocation13 + $0x20] sm:$0xff]
    %v3632 = vld [vmem:[#allocation13 + $0x28] sm:$0xff]
    %v3633 = vld [vmem:[#allocation13 + $0x30] sm:$0xff]
    %v3634 = vld [vmem:[#allocation13 + $0x38] sm:$0xff]
    %v3635 = vld [vmem:[#allocation13 + $0x40] sm:$0xff]
    %v3636 = vld [vmem:[#allocation13 + $0x48] sm:$0xff]
    %v3637 = vld [vmem:[#allocation13 + $0x50] sm:$0xff]
    %v3638 = vld [vmem:[#allocation13 + $0x58] sm:$0xff]
    %v3639 = vld [vmem:[#allocation13 + $0x60] sm:$0xff]
    %v3640 = vld [vmem:[#allocation13 + $0x68] sm:$0xff]
    %v3641 = vld [vmem:[#allocation13 + $0x70] sm:$0xff]
    %v3642 = vld [vmem:[#allocation13 + $0x78] sm:$0xff]
    %v3643 = vld [vmem:[#allocation13 + $0x80] sm:$0xff]
    %v3644 = vld [vmem:[#allocation13 + $0x88] sm:$0xff]
    %v3645 = vld [vmem:[#allocation13 + $0x90] sm:$0xff]
    %v3646 = vld [vmem:[#allocation13 + $0x98] sm:$0xff]
    %v3647 = vld [vmem:[#allocation13 + $0xa0] sm:$0xff]
    %v3648 = vld [vmem:[#allocation13 + $0xa8] sm:$0xff]
    %v3649 = vld [vmem:[#allocation13 + $0xb0] sm:$0xff]
    %v3650 = vld [vmem:[#allocation13 + $0xb8] sm:$0xff]
    %v3651 = vld [vmem:[#allocation13 + $0xc0] sm:$0xff]
    %v3652 = vld [vmem:[#allocation13 + $0xc8] sm:$0xff]
    %v3653 = vld [vmem:[#allocation13 + $0xd0] sm:$0xff]
    %v3654 = vld [vmem:[#allocation13 + $0xd8] sm:$0xff]
    %v3655 = vld [vmem:[#allocation13 + $0xe0] sm:$0xff]
    %v3656 = vld [vmem:[#allocation13 + $0xe8] sm:$0xff]
    %v3657 = vld [vmem:[#allocation13 + $0xf0] sm:$0xff]
    %v3658 = vld [vmem:[#allocation13 + $0xf8] sm:$0xff]
    %v3691 = vunpack.c.l.b16 %v3627
    %v3692 = vunpack.c.h.b16 %v3627
    %v3693 = vunpack.c.l.b16 %v3628
    %v3694 = vunpack.c.h.b16 %v3628
    %v3695 = vunpack.c.l.b16 %v3629
    %v3696 = vunpack.c.h.b16 %v3629
    %v3697 = vunpack.c.l.b16 %v3630
    %v3698 = vunpack.c.h.b16 %v3630
    %v3699 = vunpack.c.l.b16 %v3631
    %v3700 = vunpack.c.h.b16 %v3631
    %v3701 = vunpack.c.l.b16 %v3632
    %v3702 = vunpack.c.h.b16 %v3632
    %v3703 = vunpack.c.l.b16 %v3633
    %v3704 = vunpack.c.h.b16 %v3633
    %v3705 = vunpack.c.l.b16 %v3634
    %v3706 = vunpack.c.h.b16 %v3634
    %v3707 = vunpack.c.l.b16 %v3635
    %v3708 = vunpack.c.h.b16 %v3635
    %v3709 = vunpack.c.l.b16 %v3636
    %v3710 = vunpack.c.h.b16 %v3636
    %v3711 = vunpack.c.l.b16 %v3637
    %v3712 = vunpack.c.h.b16 %v3637
    %v3713 = vunpack.c.l.b16 %v3638
    %v3714 = vunpack.c.h.b16 %v3638
    %v3715 = vunpack.c.l.b16 %v3639
    %v3716 = vunpack.c.h.b16 %v3639
    %v3717 = vunpack.c.l.b16 %v3640
    %v3718 = vunpack.c.h.b16 %v3640
    %v3719 = vunpack.c.l.b16 %v3641
    %v3720 = vunpack.c.h.b16 %v3641
    %v3721 = vunpack.c.l.b16 %v3642
    %v3722 = vunpack.c.h.b16 %v3642
    %v3723 = vunpack.c.l.b16 %v3643
    %v3724 = vunpack.c.h.b16 %v3643
    %v3725 = vunpack.c.l.b16 %v3644
    %v3726 = vunpack.c.h.b16 %v3644
    %v3727 = vunpack.c.l.b16 %v3645
    %v3728 = vunpack.c.h.b16 %v3645
    %v3729 = vunpack.c.l.b16 %v3646
    %v3730 = vunpack.c.h.b16 %v3646
    %v3731 = vunpack.c.l.b16 %v3647
    %v3732 = vunpack.c.h.b16 %v3647
    %v3733 = vunpack.c.l.b16 %v3648
    %v3734 = vunpack.c.h.b16 %v3648
    %v3735 = vunpack.c.l.b16 %v3649
    %v3736 = vunpack.c.h.b16 %v3649
    %v3737 = vunpack.c.l.b16 %v3650
    %v3738 = vunpack.c.h.b16 %v3650
    %v3739 = vunpack.c.l.b16 %v3651
    %v3740 = vunpack.c.h.b16 %v3651
    %v3741 = vunpack.c.l.b16 %v3652
    %v3742 = vunpack.c.h.b16 %v3652
    %v3743 = vunpack.c.l.b16 %v3653
    %v3744 = vunpack.c.h.b16 %v3653
    %v3745 = vunpack.c.l.b16 %v3654
    %v3746 = vunpack.c.h.b16 %v3654
    %v3747 = vunpack.c.l.b16 %v3655
    %v3748 = vunpack.c.h.b16 %v3655
    %v3749 = vunpack.c.l.b16 %v3656
    %v3750 = vunpack.c.h.b16 %v3656
    %v3751 = vunpack.c.l.b16 %v3657
    %v3752 = vunpack.c.h.b16 %v3657
    %v3753 = vunpack.c.l.b16 %v3658
    %v3754 = vunpack.c.h.b16 %v3658
    %v3755 = vpack.c.b16 %v3695, %v3691
    %v3756 = vpack.c.b16 %v3696, %v3692
    %v3757 = vpack.c.b16 %v3697, %v3693
    %v3758 = vpack.c.b16 %v3698, %v3694
    %v3759 = vpack.c.b16 %v3703, %v3699
    %v3760 = vpack.c.b16 %v3704, %v3700
    %v3761 = vpack.c.b16 %v3705, %v3701
    %v3762 = vpack.c.b16 %v3706, %v3702
    %v3763 = vpack.c.b16 %v3711, %v3707
    %v3764 = vpack.c.b16 %v3712, %v3708
    %v3765 = vpack.c.b16 %v3713, %v3709
    %v3766 = vpack.c.b16 %v3714, %v3710
    %v3767 = vpack.c.b16 %v3719, %v3715
    %v3768 = vpack.c.b16 %v3720, %v3716
    %v3769 = vpack.c.b16 %v3721, %v3717
    %v3770 = vpack.c.b16 %v3722, %v3718
    %v3771 = vpack.c.b16 %v3727, %v3723
    %v3772 = vpack.c.b16 %v3728, %v3724
    %v3773 = vpack.c.b16 %v3729, %v3725
    %v3774 = vpack.c.b16 %v3730, %v3726
    %v3775 = vpack.c.b16 %v3735, %v3731
    %v3776 = vpack.c.b16 %v3736, %v3732
    %v3777 = vpack.c.b16 %v3737, %v3733
    %v3778 = vpack.c.b16 %v3738, %v3734
    %v3779 = vpack.c.b16 %v3743, %v3739
    %v3780 = vpack.c.b16 %v3744, %v3740
    %v3781 = vpack.c.b16 %v3745, %v3741
    %v3782 = vpack.c.b16 %v3746, %v3742
    %v3783 = vpack.c.b16 %v3751, %v3747
    %v3784 = vpack.c.b16 %v3752, %v3748
    %v3785 = vpack.c.b16 %v3753, %v3749
    %v3786 = vpack.c.b16 %v3754, %v3750
    %3819 = vmatprep.subr.bf16.mxu0 %v3756
    %3820 = vmatpush1.bf16.msra.mxu0 %v3755
    %3821 = vmatprep.subr.bf16.mxu0 %v3760
    %3822 = vmatpush1.bf16.msra.mxu0 %v3759
    %3823 = vmatprep.subr.bf16.mxu0 %v3764
    %3824 = vmatpush1.bf16.msra.mxu0 %v3763
    %3825 = vmatprep.subr.bf16.mxu0 %v3768
    %3826 = vmatpush1.bf16.msra.mxu0 %v3767
    %3827 = vmatprep.subr.bf16.mxu0 %v3772
    %3828 = vmatpush1.bf16.msra.mxu0 %v3771
    %3829 = vmatprep.subr.bf16.mxu0 %v3776
    %3830 = vmatpush1.bf16.msra.mxu0 %v3775
    %3831 = vmatprep.subr.bf16.mxu0 %v3780
    %3832 = vmatpush1.bf16.msra.mxu0 %v3779
    %3833 = vmatprep.subr.bf16.mxu0 %v3784
    %3834 = vmatpush1.bf16.msra.mxu0 %v3783
    %3835 = vmatprep.subr.bf16.mxu0 0
    %3836 = vmatpush1.bf16.msra.mxu0 0
    %3837 = vmatprep.subr.bf16.mxu0 0
    %3838 = vmatpush1.bf16.msra.mxu0 0
    %3839 = vmatprep.subr.bf16.mxu0 0
    %3840 = vmatpush1.bf16.msra.mxu0 0
    %3841 = vmatprep.subr.bf16.mxu0 0
    %3842 = vmatpush1.bf16.msra.mxu0 0
    %3843 = vmatprep.subr.bf16.mxu0 0
    %3844 = vmatpush1.bf16.msra.mxu0 0
    %3845 = vmatprep.subr.bf16.mxu0 0
    %3846 = vmatpush1.bf16.msra.mxu0 0
    %3847 = vmatprep.subr.bf16.mxu0 0
    %3848 = vmatpush1.bf16.msra.mxu0 0
    %3849 = vmatprep.subr.bf16.mxu0 0
    %3850 = vmatpush1.bf16.msra.mxu0 0
    %3851 = vmatprep.mubr.bf16.mxu0 0
    %3852 = vmatmul.mubr.bf16.gmra.mrb[0].mxu0 %v204
    %v3853 = vpop.f32.mrb[0].mxu0
    %v3854 = vadd.f32 0.0, %v3853
    %v3855 = vpop.f32.mrb[0].mxu0
    %v3856 = vadd.f32 0.0, %v3855
    %v3857 = vpop.f32.mrb[0].mxu0
    %v3858 = vpop.f32.mrb[0].mxu0
    %3859 = vdwg.mxu0
    %3860 = vmatprep.subr.bf16.mxu0 %v3758
    %3861 = vmatpush1.bf16.msra.mxu0 %v3757
    %3862 = vmatprep.subr.bf16.mxu0 %v3762
    %3863 = vmatpush1.bf16.msra.mxu0 %v3761
    %3864 = vmatprep.subr.bf16.mxu0 %v3766
    %3865 = vmatpush1.bf16.msra.mxu0 %v3765
    %3866 = vmatprep.subr.bf16.mxu0 %v3770
    %3867 = vmatpush1.bf16.msra.mxu0 %v3769
    %3868 = vmatprep.subr.bf16.mxu0 %v3774
    %3869 = vmatpush1.bf16.msra.mxu0 %v3773
    %3870 = vmatprep.subr.bf16.mxu0 %v3778
    %3871 = vmatpush1.bf16.msra.mxu0 %v3777
    %3872 = vmatprep.subr.bf16.mxu0 %v3782
    %3873 = vmatpush1.bf16.msra.mxu0 %v3781
    %3874 = vmatprep.subr.bf16.mxu0 %v3786
    %3875 = vmatpush1.bf16.msra.mxu0 %v3785
    %3876 = vmatprep.subr.bf16.mxu0 0
    %3877 = vmatpush1.bf16.msra.mxu0 0
    %3878 = vmatprep.subr.bf16.mxu0 0
    %3879 = vmatpush1.bf16.msra.mxu0 0
    %3880 = vmatprep.subr.bf16.mxu0 0
    %3881 = vmatpush1.bf16.msra.mxu0 0
    %3882 = vmatprep.subr.bf16.mxu0 0
    %3883 = vmatpush1.bf16.msra.mxu0 0
    %3884 = vmatprep.subr.bf16.mxu0 0
    %3885 = vmatpush1.bf16.msra.mxu0 0
    %3886 = vmatprep.subr.bf16.mxu0 0
    %3887 = vmatpush1.bf16.msra.mxu0 0
    %3888 = vmatprep.subr.bf16.mxu0 0
    %3889 = vmatpush1.bf16.msra.mxu0 0
    %3890 = vmatprep.subr.bf16.mxu0 0
    %3891 = vmatpush1.bf16.msra.mxu0 0
    %3892 = vmatprep.mubr.bf16.mxu0 0
    %3893 = vmatmul.mubr.bf16.gmra.mrb[0].mxu0 %v204
    %v3894 = vpop.f32.mrb[0].mxu0
    %v3895 = vadd.f32 0.0, %v3894
    %v3896 = vpop.f32.mrb[0].mxu0
    %v3897 = vadd.f32 0.0, %v3896
    %v3898 = vpop.f32.mrb[0].mxu0
    %v3899 = vpop.f32.mrb[0].mxu0
    %3900 = vdwg.mxu0
    %v3933 = vunpack.c.l.b16 %v3595
    %v3934 = vunpack.c.h.b16 %v3595
    %v3935 = vunpack.c.l.b16 %v3596
    %v3936 = vunpack.c.h.b16 %v3596
    %v3937 = vunpack.c.l.b16 %v3597
    %v3938 = vunpack.c.h.b16 %v3597
    %v3939 = vunpack.c.l.b16 %v3598
    %v3940 = vunpack.c.h.b16 %v3598
    %v3941 = vunpack.c.l.b16 %v3599
    %v3942 = vunpack.c.h.b16 %v3599
    %v3943 = vunpack.c.l.b16 %v3600
    %v3944 = vunpack.c.h.b16 %v3600
    %v3945 = vunpack.c.l.b16 %v3601
    %v3946 = vunpack.c.h.b16 %v3601
    %v3947 = vunpack.c.l.b16 %v3602
    %v3948 = vunpack.c.h.b16 %v3602
    %v3949 = vunpack.c.l.b16 %v3603
    %v3950 = vunpack.c.h.b16 %v3603
    %v3951 = vunpack.c.l.b16 %v3604
    %v3952 = vunpack.c.h.b16 %v3604
    %v3953 = vunpack.c.l.b16 %v3605
    %v3954 = vunpack.c.h.b16 %v3605
    %v3955 = vunpack.c.l.b16 %v3606
    %v3956 = vunpack.c.h.b16 %v3606
    %v3957 = vunpack.c.l.b16 %v3607
    %v3958 = vunpack.c.h.b16 %v3607
    %v3959 = vunpack.c.l.b16 %v3608
    %v3960 = vunpack.c.h.b16 %v3608
    %v3961 = vunpack.c.l.b16 %v3609
    %v3962 = vunpack.c.h.b16 %v3609
    %v3963 = vunpack.c.l.b16 %v3610
    %v3964 = vunpack.c.h.b16 %v3610
    %v3965 = vunpack.c.l.b16 %v3611
    %v3966 = vunpack.c.h.b16 %v3611
    %v3967 = vunpack.c.l.b16 %v3612
    %v3968 = vunpack.c.h.b16 %v3612
    %v3969 = vunpack.c.l.b16 %v3613
    %v3970 = vunpack.c.h.b16 %v3613
    %v3971 = vunpack.c.l.b16 %v3614
    %v3972 = vunpack.c.h.b16 %v3614
    %v3973 = vunpack.c.l.b16 %v3615
    %v3974 = vunpack.c.h.b16 %v3615
    %v3975 = vunpack.c.l.b16 %v3616
    %v3976 = vunpack.c.h.b16 %v3616
    %v3977 = vunpack.c.l.b16 %v3617
    %v3978 = vunpack.c.h.b16 %v3617
    %v3979 = vunpack.c.l.b16 %v3618
    %v3980 = vunpack.c.h.b16 %v3618
    %v3981 = vunpack.c.l.b16 %v3619
    %v3982 = vunpack.c.h.b16 %v3619
    %v3983 = vunpack.c.l.b16 %v3620
    %v3984 = vunpack.c.h.b16 %v3620
    %v3985 = vunpack.c.l.b16 %v3621
    %v3986 = vunpack.c.h.b16 %v3621
    %v3987 = vunpack.c.l.b16 %v3622
    %v3988 = vunpack.c.h.b16 %v3622
    %v3989 = vunpack.c.l.b16 %v3623
    %v3990 = vunpack.c.h.b16 %v3623
    %v3991 = vunpack.c.l.b16 %v3624
    %v3992 = vunpack.c.h.b16 %v3624
    %v3993 = vunpack.c.l.b16 %v3625
    %v3994 = vunpack.c.h.b16 %v3625
    %v3995 = vunpack.c.l.b16 %v3626
    %v3996 = vunpack.c.h.b16 %v3626
    %v3997 = vpack.c.b16 %v3937, %v3933
    %v3998 = vpack.c.b16 %v3938, %v3934
    %v3999 = vpack.c.b16 %v3939, %v3935
    %v4000 = vpack.c.b16 %v3940, %v3936
    %v4001 = vpack.c.b16 %v3945, %v3941
    %v4002 = vpack.c.b16 %v3946, %v3942
    %v4003 = vpack.c.b16 %v3947, %v3943
    %v4004 = vpack.c.b16 %v3948, %v3944
    %v4005 = vpack.c.b16 %v3953, %v3949
    %v4006 = vpack.c.b16 %v3954, %v3950
    %v4007 = vpack.c.b16 %v3955, %v3951
    %v4008 = vpack.c.b16 %v3956, %v3952
    %v4009 = vpack.c.b16 %v3961, %v3957
    %v4010 = vpack.c.b16 %v3962, %v3958
    %v4011 = vpack.c.b16 %v3963, %v3959
    %v4012 = vpack.c.b16 %v3964, %v3960
    %v4013 = vpack.c.b16 %v3969, %v3965
    %v4014 = vpack.c.b16 %v3970, %v3966
    %v4015 = vpack.c.b16 %v3971, %v3967
    %v4016 = vpack.c.b16 %v3972, %v3968
    %v4017 = vpack.c.b16 %v3977, %v3973
    %v4018 = vpack.c.b16 %v3978, %v3974
    %v4019 = vpack.c.b16 %v3979, %v3975
    %v4020 = vpack.c.b16 %v3980, %v3976
    %v4021 = vpack.c.b16 %v3985, %v3981
    %v4022 = vpack.c.b16 %v3986, %v3982
    %v4023 = vpack.c.b16 %v3987, %v3983
    %v4024 = vpack.c.b16 %v3988, %v3984
    %v4025 = vpack.c.b16 %v3993, %v3989
    %v4026 = vpack.c.b16 %v3994, %v3990
    %v4027 = vpack.c.b16 %v3995, %v3991
    %v4028 = vpack.c.b16 %v3996, %v3992
    %4061 = vmatprep.subr.bf16.mxu0 %v3998
    %4062 = vmatpush1.bf16.msra.mxu0 %v3997
    %4063 = vmatprep.subr.bf16.mxu0 %v4002
    %4064 = vmatpush1.bf16.msra.mxu0 %v4001
    %4065 = vmatprep.subr.bf16.mxu0 %v4006
    %4066 = vmatpush1.bf16.msra.mxu0 %v4005
    %4067 = vmatprep.subr.bf16.mxu0 %v4010
    %4068 = vmatpush1.bf16.msra.mxu0 %v4009
    %4069 = vmatprep.subr.bf16.mxu0 %v4014
    %4070 = vmatpush1.bf16.msra.mxu0 %v4013
    %4071 = vmatprep.subr.bf16.mxu0 %v4018
    %4072 = vmatpush1.bf16.msra.mxu0 %v4017
    %4073 = vmatprep.subr.bf16.mxu0 %v4022
    %4074 = vmatpush1.bf16.msra.mxu0 %v4021
    %4075 = vmatprep.subr.bf16.mxu0 %v4026
    %4076 = vmatpush1.bf16.msra.mxu0 %v4025
    %4077 = vmatprep.subr.bf16.mxu0 0
    %4078 = vmatpush1.bf16.msra.mxu0 0
    %4079 = vmatprep.subr.bf16.mxu0 0
    %4080 = vmatpush1.bf16.msra.mxu0 0
    %4081 = vmatprep.subr.bf16.mxu0 0
    %4082 = vmatpush1.bf16.msra.mxu0 0
    %4083 = vmatprep.subr.bf16.mxu0 0
    %4084 = vmatpush1.bf16.msra.mxu0 0
    %4085 = vmatprep.subr.bf16.mxu0 0
    %4086 = vmatpush1.bf16.msra.mxu0 0
    %4087 = vmatprep.subr.bf16.mxu0 0
    %4088 = vmatpush1.bf16.msra.mxu0 0
    %4089 = vmatprep.subr.bf16.mxu0 0
    %4090 = vmatpush1.bf16.msra.mxu0 0
    %4091 = vmatprep.subr.bf16.mxu0 0
    %4092 = vmatpush1.bf16.msra.mxu0 0
    %4093 = vmatprep.mubr.bf16.mxu0 0
    %4094 = vmatmul.mubr.bf16.gmra.mrb[0].mxu0 %v3594
    %v4095 = vpop.f32.mrb[0].mxu0
    %v4096 = vadd.f32 %v3854, %v4095
    %v4097 = vpop.f32.mrb[0].mxu0
    %v4098 = vadd.f32 %v3856, %v4097
    %v4099 = vpop.f32.mrb[0].mxu0
    %v4100 = vpop.f32.mrb[0].mxu0
    %4101 = vdwg.mxu0
    %4102 = vmatprep.subr.bf16.mxu0 %v4000
    %4103 = vmatpush1.bf16.msra.mxu0 %v3999
    %4104 = vmatprep.subr.bf16.mxu0 %v4004
    %4105 = vmatpush1.bf16.msra.mxu0 %v4003
    %4106 = vmatprep.subr.bf16.mxu0 %v4008
    %4107 = vmatpush1.bf16.msra.mxu0 %v4007
    %4108 = vmatprep.subr.bf16.mxu0 %v4012
    %4109 = vmatpush1.bf16.msra.mxu0 %v4011
    %4110 = vmatprep.subr.bf16.mxu0 %v4016
    %4111 = vmatpush1.bf16.msra.mxu0 %v4015
    %4112 = vmatprep.subr.bf16.mxu0 %v4020
    %4113 = vmatpush1.bf16.msra.mxu0 %v4019
    %4114 = vmatprep.subr.bf16.mxu0 %v4024
    %4115 = vmatpush1.bf16.msra.mxu0 %v4023
    %4116 = vmatprep.subr.bf16.mxu0 %v4028
    %4117 = vmatpush1.bf16.msra.mxu0 %v4027
    %4118 = vmatprep.subr.bf16.mxu0 0
    %4119 = vmatpush1.bf16.msra.mxu0 0
    %4120 = vmatprep.subr.bf16.mxu0 0
    %4121 = vmatpush1.bf16.msra.mxu0 0
    %4122 = vmatprep.subr.bf16.mxu0 0
    %4123 = vmatpush1.bf16.msra.mxu0 0
    %4124 = vmatprep.subr.bf16.mxu0 0
    %4125 = vmatpush1.bf16.msra.mxu0 0
    %4126 = vmatprep.subr.bf16.mxu0 0
    %4127 = vmatpush1.bf16.msra.mxu0 0
    %4128 = vmatprep.subr.bf16.mxu0 0
    %4129 = vmatpush1.bf16.msra.mxu0 0
    %4130 = vmatprep.subr.bf16.mxu0 0
    %4131 = vmatpush1.bf16.msra.mxu0 0
    %4132 = vmatprep.subr.bf16.mxu0 0
    %4133 = vmatpush1.bf16.msra.mxu0 0
    %4134 = vmatprep.mubr.bf16.mxu0 0
    %4135 = vmatmul.mubr.bf16.gmra.mrb[0].mxu0 %v3594
    %v4136 = vpop.f32.mrb[0].mxu0
    %v4137 = vadd.f32 %v3895, %v4136
    %v4138 = vpop.f32.mrb[0].mxu0
    %v4139 = vadd.f32 %v3897, %v4138
    %v4140 = vpop.f32.mrb[0].mxu0
    %v4141 = vpop.f32.mrb[0].mxu0
    %4142 = vdwg.mxu0
    %s4143 = scalar_lea.vmem %s14, 5
    %v4144 = vld [vmem:[%s4143] ss:$8 sm:$0xf]
    %v4146 = vlaneseq
    %v4147 = vshrl.u32 %v4146, 7
    %v4148 = vsub.s32 0, %v4147
    %v4149 = vrot.slane %v4144, %v4148
    %v4150 = vlaneseq
    %v4151 = vshrl.u32 %v4150, 7
    %v4152 = vsub.s32 1, %v4151
    %v4153 = vrot.slane %v4144, %v4152
    %v4154 = vlaneseq
    %v4155 = vshrl.u32 %v4154, 7
    %v4156 = vsub.s32 2, %v4155
    %v4157 = vrot.slane %v4144, %v4156
    %v4158 = vlaneseq
    %v4159 = vshrl.u32 %v4158, 7
    %v4160 = vsub.s32 3, %v4159
    %v4161 = vrot.slane %v4144, %v4160
    %v4166 = vadd.f32 %v4096, %v4149
    %v4167 = vadd.f32 %v4098, %v4153
    %v4168 = vadd.f32 %v4137, %v4157
    %v4169 = vadd.f32 %v4139, %v4161
    %v4170 = vmax.f32 %v4166, 0.0
    %v4171 = vmax.f32 %v4167, 0.0
    %v4172 = vmax.f32 %v4168, 0.0
    %v4173 = vmax.f32 %v4169, 0.0
    %v4174 = vpack.c.bf16 %v4170, %v4170
    %v4175 = vpack.c.bf16 %v4171, %v4171
    %v4176 = vpack.c.bf16 %v4172, %v4172
    %v4177 = vpack.c.bf16 %v4173, %v4173
    %v4178 = vld [vmem:[#allocation15] sm:$0xff]
    %v4179 = vld [vmem:[#allocation15 + $0x8] sm:$0xff]
    %v4180 = vld [vmem:[#allocation15 + $0x10] sm:$0xff]
    %v4181 = vld [vmem:[#allocation15 + $0x18] sm:$0xff]
    %v4182 = vld [vmem:[#allocation15 + $0x20] sm:$0xff]
    %v4183 = vld [vmem:[#allocation15 + $0x28] sm:$0xff]
    %v4184 = vld [vmem:[#allocation15 + $0x30] sm:$0xff]
    %v4185 = vld [vmem:[#allocation15 + $0x38] sm:$0xff]
    %v4186 = vld [vmem:[#allocation15 + $0x40] sm:$0xff]
    %v4187 = vld [vmem:[#allocation15 + $0x48] sm:$0xff]
    %v4188 = vld [vmem:[#allocation15 + $0x50] sm:$0xff]
    %v4189 = vld [vmem:[#allocation15 + $0x58] sm:$0xff]
    %v4190 = vld [vmem:[#allocation15 + $0x60] sm:$0xff]
    %v4191 = vld [vmem:[#allocation15 + $0x68] sm:$0xff]
    %v4192 = vld [vmem:[#allocation15 + $0x70] sm:$0xff]
    %v4193 = vld [vmem:[#allocation15 + $0x78] sm:$0xff]
    %v4194 = vld [vmem:[#allocation15 + $0x80] sm:$0xff]
    %v4195 = vld [vmem:[#allocation15 + $0x88] sm:$0xff]
    %v4196 = vld [vmem:[#allocation15 + $0x90] sm:$0xff]
    %v4197 = vld [vmem:[#allocation15 + $0x98] sm:$0xff]
    %v4198 = vld [vmem:[#allocation15 + $0xa0] sm:$0xff]
    %v4199 = vld [vmem:[#allocation15 + $0xa8] sm:$0xff]
    %v4200 = vld [vmem:[#allocation15 + $0xb0] sm:$0xff]
    %v4201 = vld [vmem:[#allocation15 + $0xb8] sm:$0xff]
    %v4202 = vld [vmem:[#allocation15 + $0xc0] sm:$0xff]
    %v4203 = vld [vmem:[#allocation15 + $0xc8] sm:$0xff]
    %v4204 = vld [vmem:[#allocation15 + $0xd0] sm:$0xff]
    %v4205 = vld [vmem:[#allocation15 + $0xd8] sm:$0xff]
    %v4206 = vld [vmem:[#allocation15 + $0xe0] sm:$0xff]
    %v4207 = vld [vmem:[#allocation15 + $0xe8] sm:$0xff]
    %v4208 = vld [vmem:[#allocation15 + $0xf0] sm:$0xff]
    %v4209 = vld [vmem:[#allocation15 + $0xf8] sm:$0xff]
    %v4210 = vld [vmem:[#allocation15 + $0x100] sm:$0xff]
    %v4211 = vld [vmem:[#allocation15 + $0x108] sm:$0xff]
    %v4212 = vld [vmem:[#allocation15 + $0x110] sm:$0xff]
    %v4213 = vld [vmem:[#allocation15 + $0x118] sm:$0xff]
    %v4214 = vld [vmem:[#allocation15 + $0x120] sm:$0xff]
    %v4215 = vld [vmem:[#allocation15 + $0x128] sm:$0xff]
    %v4216 = vld [vmem:[#allocation15 + $0x130] sm:$0xff]
    %v4217 = vld [vmem:[#allocation15 + $0x138] sm:$0xff]
    %v4218 = vld [vmem:[#allocation15 + $0x140] sm:$0xff]
    %v4219 = vld [vmem:[#allocation15 + $0x148] sm:$0xff]
    %v4220 = vld [vmem:[#allocation15 + $0x150] sm:$0xff]
    %v4221 = vld [vmem:[#allocation15 + $0x158] sm:$0xff]
    %v4222 = vld [vmem:[#allocation15 + $0x160] sm:$0xff]
    %v4223 = vld [vmem:[#allocation15 + $0x168] sm:$0xff]
    %v4224 = vld [vmem:[#allocation15 + $0x170] sm:$0xff]
    %v4225 = vld [vmem:[#allocation15 + $0x178] sm:$0xff]
    %v4226 = vld [vmem:[#allocation15 + $0x180] sm:$0xff]
    %v4227 = vld [vmem:[#allocation15 + $0x188] sm:$0xff]
    %v4228 = vld [vmem:[#allocation15 + $0x190] sm:$0xff]
    %v4229 = vld [vmem:[#allocation15 + $0x198] sm:$0xff]
    %v4230 = vld [vmem:[#allocation15 + $0x1a0] sm:$0xff]
    %v4231 = vld [vmem:[#allocation15 + $0x1a8] sm:$0xff]
    %v4232 = vld [vmem:[#allocation15 + $0x1b0] sm:$0xff]
    %v4233 = vld [vmem:[#allocation15 + $0x1b8] sm:$0xff]
    %v4234 = vld [vmem:[#allocation15 + $0x1c0] sm:$0xff]
    %v4235 = vld [vmem:[#allocation15 + $0x1c8] sm:$0xff]
    %v4236 = vld [vmem:[#allocation15 + $0x1d0] sm:$0xff]
    %v4237 = vld [vmem:[#allocation15 + $0x1d8] sm:$0xff]
    %v4238 = vld [vmem:[#allocation15 + $0x1e0] sm:$0xff]
    %v4239 = vld [vmem:[#allocation15 + $0x1e8] sm:$0xff]
    %v4240 = vld [vmem:[#allocation15 + $0x1f0] sm:$0xff]
    %v4241 = vld [vmem:[#allocation15 + $0x1f8] sm:$0xff]
    %v4242 = vld [vmem:[#allocation15 + $0x200] sm:$0xff]
    %v4243 = vld [vmem:[#allocation15 + $0x208] sm:$0xff]
    %v4244 = vld [vmem:[#allocation15 + $0x210] sm:$0xff]
    %v4245 = vld [vmem:[#allocation15 + $0x218] sm:$0xff]
    %v4246 = vld [vmem:[#allocation15 + $0x220] sm:$0xff]
    %v4247 = vld [vmem:[#allocation15 + $0x228] sm:$0xff]
    %v4248 = vld [vmem:[#allocation15 + $0x230] sm:$0xff]
    %v4249 = vld [vmem:[#allocation15 + $0x238] sm:$0xff]
    %v4250 = vld [vmem:[#allocation15 + $0x240] sm:$0xff]
    %v4251 = vld [vmem:[#allocation15 + $0x248] sm:$0xff]
    %v4252 = vld [vmem:[#allocation15 + $0x250] sm:$0xff]
    %v4253 = vld [vmem:[#allocation15 + $0x258] sm:$0xff]
    %v4254 = vld [vmem:[#allocation15 + $0x260] sm:$0xff]
    %v4255 = vld [vmem:[#allocation15 + $0x268] sm:$0xff]
    %v4256 = vld [vmem:[#allocation15 + $0x270] sm:$0xff]
    %v4257 = vld [vmem:[#allocation15 + $0x278] sm:$0xff]
    %v4258 = vld [vmem:[#allocation15 + $0x280] sm:$0xff]
    %v4259 = vld [vmem:[#allocation15 + $0x288] sm:$0xff]
    %v4260 = vld [vmem:[#allocation15 + $0x290] sm:$0xff]
    %v4261 = vld [vmem:[#allocation15 + $0x298] sm:$0xff]
    %v4262 = vld [vmem:[#allocation15 + $0x2a0] sm:$0xff]
    %v4263 = vld [vmem:[#allocation15 + $0x2a8] sm:$0xff]
    %v4264 = vld [vmem:[#allocation15 + $0x2b0] sm:$0xff]
    %v4265 = vld [vmem:[#allocation15 + $0x2b8] sm:$0xff]
    %v4266 = vld [vmem:[#allocation15 + $0x2c0] sm:$0xff]
    %v4267 = vld [vmem:[#allocation15 + $0x2c8] sm:$0xff]
    %v4268 = vld [vmem:[#allocation15 + $0x2d0] sm:$0xff]
    %v4269 = vld [vmem:[#allocation15 + $0x2d8] sm:$0xff]
    %v4270 = vld [vmem:[#allocation15 + $0x2e0] sm:$0xff]
    %v4271 = vld [vmem:[#allocation15 + $0x2e8] sm:$0xff]
    %v4272 = vld [vmem:[#allocation15 + $0x2f0] sm:$0xff]
    %v4273 = vld [vmem:[#allocation15 + $0x2f8] sm:$0xff]
    %v4274 = vld [vmem:[#allocation15 + $0x300] sm:$0xff]
    %v4275 = vld [vmem:[#allocation15 + $0x308] sm:$0xff]
    %v4276 = vld [vmem:[#allocation15 + $0x310] sm:$0xff]
    %v4277 = vld [vmem:[#allocation15 + $0x318] sm:$0xff]
    %v4278 = vld [vmem:[#allocation15 + $0x320] sm:$0xff]
    %v4279 = vld [vmem:[#allocation15 + $0x328] sm:$0xff]
    %v4280 = vld [vmem:[#allocation15 + $0x330] sm:$0xff]
    %v4281 = vld [vmem:[#allocation15 + $0x338] sm:$0xff]
    %v4282 = vld [vmem:[#allocation15 + $0x340] sm:$0xff]
    %v4283 = vld [vmem:[#allocation15 + $0x348] sm:$0xff]
    %v4284 = vld [vmem:[#allocation15 + $0x350] sm:$0xff]
    %v4285 = vld [vmem:[#allocation15 + $0x358] sm:$0xff]
    %v4286 = vld [vmem:[#allocation15 + $0x360] sm:$0xff]
    %v4287 = vld [vmem:[#allocation15 + $0x368] sm:$0xff]
    %v4288 = vld [vmem:[#allocation15 + $0x370] sm:$0xff]
    %v4289 = vld [vmem:[#allocation15 + $0x378] sm:$0xff]
    %v4290 = vld [vmem:[#allocation15 + $0x380] sm:$0xff]
    %v4291 = vld [vmem:[#allocation15 + $0x388] sm:$0xff]
    %v4292 = vld [vmem:[#allocation15 + $0x390] sm:$0xff]
    %v4293 = vld [vmem:[#allocation15 + $0x398] sm:$0xff]
    %v4294 = vld [vmem:[#allocation15 + $0x3a0] sm:$0xff]
    %v4295 = vld [vmem:[#allocation15 + $0x3a8] sm:$0xff]
    %v4296 = vld [vmem:[#allocation15 + $0x3b0] sm:$0xff]
    %v4297 = vld [vmem:[#allocation15 + $0x3b8] sm:$0xff]
    %v4298 = vld [vmem:[#allocation15 + $0x3c0] sm:$0xff]
    %v4299 = vld [vmem:[#allocation15 + $0x3c8] sm:$0xff]
    %v4300 = vld [vmem:[#allocation15 + $0x3d0] sm:$0xff]
    %v4301 = vld [vmem:[#allocation15 + $0x3d8] sm:$0xff]
    %v4302 = vld [vmem:[#allocation15 + $0x3e0] sm:$0xff]
    %v4303 = vld [vmem:[#allocation15 + $0x3e8] sm:$0xff]
    %v4304 = vld [vmem:[#allocation15 + $0x3f0] sm:$0xff]
    %v4305 = vld [vmem:[#allocation15 + $0x3f8] sm:$0xff]
    %s4306 = scalar_lea.vmem %s14, 6
    %v4307 = vld [vmem:[%s4306] ss:$8 sm:$0xf]
    %v4309 = vlaneseq
    %v4310 = vshrl.u32 %v4309, 7
    %v4311 = vsub.s32 0, %v4310
    %v4312 = vrot.slane %v4307, %v4311
    %v4313 = vlaneseq
    %v4314 = vshrl.u32 %v4313, 7
    %v4315 = vsub.s32 1, %v4314
    %v4316 = vrot.slane %v4307, %v4315
    %v4317 = vlaneseq
    %v4318 = vshrl.u32 %v4317, 7
    %v4319 = vsub.s32 2, %v4318
    %v4320 = vrot.slane %v4307, %v4319
    %v4321 = vlaneseq
    %v4322 = vshrl.u32 %v4321, 7
    %v4323 = vsub.s32 3, %v4322
    %v4324 = vrot.slane %v4307, %v4323
    %v4457 = vunpack.c.l.b16 %v4178
    %v4458 = vunpack.c.h.b16 %v4178
    %v4459 = vunpack.c.l.b16 %v4179
    %v4460 = vunpack.c.h.b16 %v4179
    %v4461 = vunpack.c.l.b16 %v4180
    %v4462 = vunpack.c.h.b16 %v4180
    %v4463 = vunpack.c.l.b16 %v4181
    %v4464 = vunpack.c.h.b16 %v4181
    %v4465 = vunpack.c.l.b16 %v4182
    %v4466 = vunpack.c.h.b16 %v4182
    %v4467 = vunpack.c.l.b16 %v4183
    %v4468 = vunpack.c.h.b16 %v4183
    %v4469 = vunpack.c.l.b16 %v4184
    %v4470 = vunpack.c.h.b16 %v4184
    %v4471 = vunpack.c.l.b16 %v4185
    %v4472 = vunpack.c.h.b16 %v4185
    %v4473 = vunpack.c.l.b16 %v4186
    %v4474 = vunpack.c.h.b16 %v4186
    %v4475 = vunpack.c.l.b16 %v4187
    %v4476 = vunpack.c.h.b16 %v4187
    %v4477 = vunpack.c.l.b16 %v4188
    %v4478 = vunpack.c.h.b16 %v4188
    %v4479 = vunpack.c.l.b16 %v4189
    %v4480 = vunpack.c.h.b16 %v4189
    %v4481 = vunpack.c.l.b16 %v4190
    %v4482 = vunpack.c.h.b16 %v4190
    %v4483 = vunpack.c.l.b16 %v4191
    %v4484 = vunpack.c.h.b16 %v4191
    %v4485 = vunpack.c.l.b16 %v4192
    %v4486 = vunpack.c.h.b16 %v4192
    %v4487 = vunpack.c.l.b16 %v4193
    %v4488 = vunpack.c.h.b16 %v4193
    %v4489 = vunpack.c.l.b16 %v4194
    %v4490 = vunpack.c.h.b16 %v4194
    %v4491 = vunpack.c.l.b16 %v4195
    %v4492 = vunpack.c.h.b16 %v4195
    %v4493 = vunpack.c.l.b16 %v4196
    %v4494 = vunpack.c.h.b16 %v4196
    %v4495 = vunpack.c.l.b16 %v4197
    %v4496 = vunpack.c.h.b16 %v4197
    %v4497 = vunpack.c.l.b16 %v4198
    %v4498 = vunpack.c.h.b16 %v4198
    %v4499 = vunpack.c.l.b16 %v4199
    %v4500 = vunpack.c.h.b16 %v4199
    %v4501 = vunpack.c.l.b16 %v4200
    %v4502 = vunpack.c.h.b16 %v4200
    %v4503 = vunpack.c.l.b16 %v4201
    %v4504 = vunpack.c.h.b16 %v4201
    %v4505 = vunpack.c.l.b16 %v4202
    %v4506 = vunpack.c.h.b16 %v4202
    %v4507 = vunpack.c.l.b16 %v4203
    %v4508 = vunpack.c.h.b16 %v4203
    %v4509 = vunpack.c.l.b16 %v4204
    %v4510 = vunpack.c.h.b16 %v4204
    %v4511 = vunpack.c.l.b16 %v4205
    %v4512 = vunpack.c.h.b16 %v4205
    %v4513 = vunpack.c.l.b16 %v4206
    %v4514 = vunpack.c.h.b16 %v4206
    %v4515 = vunpack.c.l.b16 %v4207
    %v4516 = vunpack.c.h.b16 %v4207
    %v4517 = vunpack.c.l.b16 %v4208
    %v4518 = vunpack.c.h.b16 %v4208
    %v4519 = vunpack.c.l.b16 %v4209
    %v4520 = vunpack.c.h.b16 %v4209
    %v4521 = vunpack.c.l.b16 %v4210
    %v4522 = vunpack.c.h.b16 %v4210
    %v4523 = vunpack.c.l.b16 %v4211
    %v4524 = vunpack.c.h.b16 %v4211
    %v4525 = vunpack.c.l.b16 %v4212
    %v4526 = vunpack.c.h.b16 %v4212
    %v4527 = vunpack.c.l.b16 %v4213
    %v4528 = vunpack.c.h.b16 %v4213
    %v4529 = vunpack.c.l.b16 %v4214
    %v4530 = vunpack.c.h.b16 %v4214
    %v4531 = vunpack.c.l.b16 %v4215
    %v4532 = vunpack.c.h.b16 %v4215
    %v4533 = vunpack.c.l.b16 %v4216
    %v4534 = vunpack.c.h.b16 %v4216
    %v4535 = vunpack.c.l.b16 %v4217
    %v4536 = vunpack.c.h.b16 %v4217
    %v4537 = vunpack.c.l.b16 %v4218
    %v4538 = vunpack.c.h.b16 %v4218
    %v4539 = vunpack.c.l.b16 %v4219
    %v4540 = vunpack.c.h.b16 %v4219
    %v4541 = vunpack.c.l.b16 %v4220
    %v4542 = vunpack.c.h.b16 %v4220
    %v4543 = vunpack.c.l.b16 %v4221
    %v4544 = vunpack.c.h.b16 %v4221
    %v4545 = vunpack.c.l.b16 %v4222
    %v4546 = vunpack.c.h.b16 %v4222
    %v4547 = vunpack.c.l.b16 %v4223
    %v4548 = vunpack.c.h.b16 %v4223
    %v4549 = vunpack.c.l.b16 %v4224
    %v4550 = vunpack.c.h.b16 %v4224
    %v4551 = vunpack.c.l.b16 %v4225
    %v4552 = vunpack.c.h.b16 %v4225
    %v4553 = vunpack.c.l.b16 %v4226
    %v4554 = vunpack.c.h.b16 %v4226
    %v4555 = vunpack.c.l.b16 %v4227
    %v4556 = vunpack.c.h.b16 %v4227
    %v4557 = vunpack.c.l.b16 %v4228
    %v4558 = vunpack.c.h.b16 %v4228
    %v4559 = vunpack.c.l.b16 %v4229
    %v4560 = vunpack.c.h.b16 %v4229
    %v4561 = vunpack.c.l.b16 %v4230
    %v4562 = vunpack.c.h.b16 %v4230
    %v4563 = vunpack.c.l.b16 %v4231
    %v4564 = vunpack.c.h.b16 %v4231
    %v4565 = vunpack.c.l.b16 %v4232
    %v4566 = vunpack.c.h.b16 %v4232
    %v4567 = vunpack.c.l.b16 %v4233
    %v4568 = vunpack.c.h.b16 %v4233
    %v4569 = vunpack.c.l.b16 %v4234
    %v4570 = vunpack.c.h.b16 %v4234
    %v4571 = vunpack.c.l.b16 %v4235
    %v4572 = vunpack.c.h.b16 %v4235
    %v4573 = vunpack.c.l.b16 %v4236
    %v4574 = vunpack.c.h.b16 %v4236
    %v4575 = vunpack.c.l.b16 %v4237
    %v4576 = vunpack.c.h.b16 %v4237
    %v4577 = vunpack.c.l.b16 %v4238
    %v4578 = vunpack.c.h.b16 %v4238
    %v4579 = vunpack.c.l.b16 %v4239
    %v4580 = vunpack.c.h.b16 %v4239
    %v4581 = vunpack.c.l.b16 %v4240
    %v4582 = vunpack.c.h.b16 %v4240
    %v4583 = vunpack.c.l.b16 %v4241
    %v4584 = vunpack.c.h.b16 %v4241
    %v4585 = vunpack.c.l.b16 %v4242
    %v4586 = vunpack.c.h.b16 %v4242
    %v4587 = vunpack.c.l.b16 %v4243
    %v4588 = vunpack.c.h.b16 %v4243
    %v4589 = vunpack.c.l.b16 %v4244
    %v4590 = vunpack.c.h.b16 %v4244
    %v4591 = vunpack.c.l.b16 %v4245
    %v4592 = vunpack.c.h.b16 %v4245
    %v4593 = vunpack.c.l.b16 %v4246
    %v4594 = vunpack.c.h.b16 %v4246
    %v4595 = vunpack.c.l.b16 %v4247
    %v4596 = vunpack.c.h.b16 %v4247
    %v4597 = vunpack.c.l.b16 %v4248
    %v4598 = vunpack.c.h.b16 %v4248
    %v4599 = vunpack.c.l.b16 %v4249
    %v4600 = vunpack.c.h.b16 %v4249
    %v4601 = vunpack.c.l.b16 %v4250
    %v4602 = vunpack.c.h.b16 %v4250
    %v4603 = vunpack.c.l.b16 %v4251
    %v4604 = vunpack.c.h.b16 %v4251
    %v4605 = vunpack.c.l.b16 %v4252
    %v4606 = vunpack.c.h.b16 %v4252
    %v4607 = vunpack.c.l.b16 %v4253
    %v4608 = vunpack.c.h.b16 %v4253
    %v4609 = vunpack.c.l.b16 %v4254
    %v4610 = vunpack.c.h.b16 %v4254
    %v4611 = vunpack.c.l.b16 %v4255
    %v4612 = vunpack.c.h.b16 %v4255
    %v4613 = vunpack.c.l.b16 %v4256
    %v4614 = vunpack.c.h.b16 %v4256
    %v4615 = vunpack.c.l.b16 %v4257
    %v4616 = vunpack.c.h.b16 %v4257
    %v4617 = vunpack.c.l.b16 %v4258
    %v4618 = vunpack.c.h.b16 %v4258
    %v4619 = vunpack.c.l.b16 %v4259
    %v4620 = vunpack.c.h.b16 %v4259
    %v4621 = vunpack.c.l.b16 %v4260
    %v4622 = vunpack.c.h.b16 %v4260
    %v4623 = vunpack.c.l.b16 %v4261
    %v4624 = vunpack.c.h.b16 %v4261
    %v4625 = vunpack.c.l.b16 %v4262
    %v4626 = vunpack.c.h.b16 %v4262
    %v4627 = vunpack.c.l.b16 %v4263
    %v4628 = vunpack.c.h.b16 %v4263
    %v4629 = vunpack.c.l.b16 %v4264
    %v4630 = vunpack.c.h.b16 %v4264
    %v4631 = vunpack.c.l.b16 %v4265
    %v4632 = vunpack.c.h.b16 %v4265
    %v4633 = vunpack.c.l.b16 %v4266
    %v4634 = vunpack.c.h.b16 %v4266
    %v4635 = vunpack.c.l.b16 %v4267
    %v4636 = vunpack.c.h.b16 %v4267
    %v4637 = vunpack.c.l.b16 %v4268
    %v4638 = vunpack.c.h.b16 %v4268
    %v4639 = vunpack.c.l.b16 %v4269
    %v4640 = vunpack.c.h.b16 %v4269
    %v4641 = vunpack.c.l.b16 %v4270
    %v4642 = vunpack.c.h.b16 %v4270
    %v4643 = vunpack.c.l.b16 %v4271
    %v4644 = vunpack.c.h.b16 %v4271
    %v4645 = vunpack.c.l.b16 %v4272
    %v4646 = vunpack.c.h.b16 %v4272
    %v4647 = vunpack.c.l.b16 %v4273
    %v4648 = vunpack.c.h.b16 %v4273
    %v4649 = vunpack.c.l.b16 %v4274
    %v4650 = vunpack.c.h.b16 %v4274
    %v4651 = vunpack.c.l.b16 %v4275
    %v4652 = vunpack.c.h.b16 %v4275
    %v4653 = vunpack.c.l.b16 %v4276
    %v4654 = vunpack.c.h.b16 %v4276
    %v4655 = vunpack.c.l.b16 %v4277
    %v4656 = vunpack.c.h.b16 %v4277
    %v4657 = vunpack.c.l.b16 %v4278
    %v4658 = vunpack.c.h.b16 %v4278
    %v4659 = vunpack.c.l.b16 %v4279
    %v4660 = vunpack.c.h.b16 %v4279
    %v4661 = vunpack.c.l.b16 %v4280
    %v4662 = vunpack.c.h.b16 %v4280
    %v4663 = vunpack.c.l.b16 %v4281
    %v4664 = vunpack.c.h.b16 %v4281
    %v4665 = vunpack.c.l.b16 %v4282
    %v4666 = vunpack.c.h.b16 %v4282
    %v4667 = vunpack.c.l.b16 %v4283
    %v4668 = vunpack.c.h.b16 %v4283
    %v4669 = vunpack.c.l.b16 %v4284
    %v4670 = vunpack.c.h.b16 %v4284
    %v4671 = vunpack.c.l.b16 %v4285
    %v4672 = vunpack.c.h.b16 %v4285
    %v4673 = vunpack.c.l.b16 %v4286
    %v4674 = vunpack.c.h.b16 %v4286
    %v4675 = vunpack.c.l.b16 %v4287
    %v4676 = vunpack.c.h.b16 %v4287
    %v4677 = vunpack.c.l.b16 %v4288
    %v4678 = vunpack.c.h.b16 %v4288
    %v4679 = vunpack.c.l.b16 %v4289
    %v4680 = vunpack.c.h.b16 %v4289
    %v4681 = vunpack.c.l.b16 %v4290
    %v4682 = vunpack.c.h.b16 %v4290
    %v4683 = vunpack.c.l.b16 %v4291
    %v4684 = vunpack.c.h.b16 %v4291
    %v4685 = vunpack.c.l.b16 %v4292
    %v4686 = vunpack.c.h.b16 %v4292
    %v4687 = vunpack.c.l.b16 %v4293
    %v4688 = vunpack.c.h.b16 %v4293
    %v4689 = vunpack.c.l.b16 %v4294
    %v4690 = vunpack.c.h.b16 %v4294
    %v4691 = vunpack.c.l.b16 %v4295
    %v4692 = vunpack.c.h.b16 %v4295
    %v4693 = vunpack.c.l.b16 %v4296
    %v4694 = vunpack.c.h.b16 %v4296
    %v4695 = vunpack.c.l.b16 %v4297
    %v4696 = vunpack.c.h.b16 %v4297
    %v4697 = vunpack.c.l.b16 %v4298
    %v4698 = vunpack.c.h.b16 %v4298
    %v4699 = vunpack.c.l.b16 %v4299
    %v4700 = vunpack.c.h.b16 %v4299
    %v4701 = vunpack.c.l.b16 %v4300
    %v4702 = vunpack.c.h.b16 %v4300
    %v4703 = vunpack.c.l.b16 %v4301
    %v4704 = vunpack.c.h.b16 %v4301
    %v4705 = vunpack.c.l.b16 %v4302
    %v4706 = vunpack.c.h.b16 %v4302
    %v4707 = vunpack.c.l.b16 %v4303
    %v4708 = vunpack.c.h.b16 %v4303
    %v4709 = vunpack.c.l.b16 %v4304
    %v4710 = vunpack.c.h.b16 %v4304
    %v4711 = vunpack.c.l.b16 %v4305
    %v4712 = vunpack.c.h.b16 %v4305
    %v4713 = vpack.c.b16 %v4461, %v4457
    %v4714 = vpack.c.b16 %v4462, %v4458
    %v4715 = vpack.c.b16 %v4463, %v4459
    %v4716 = vpack.c.b16 %v4464, %v4460
    %v4717 = vpack.c.b16 %v4469, %v4465
    %v4718 = vpack.c.b16 %v4470, %v4466
    %v4719 = vpack.c.b16 %v4471, %v4467
    %v4720 = vpack.c.b16 %v4472, %v4468
    %v4721 = vpack.c.b16 %v4477, %v4473
    %v4722 = vpack.c.b16 %v4478, %v4474
    %v4723 = vpack.c.b16 %v4479, %v4475
    %v4724 = vpack.c.b16 %v4480, %v4476
    %v4725 = vpack.c.b16 %v4485, %v4481
    %v4726 = vpack.c.b16 %v4486, %v4482
    %v4727 = vpack.c.b16 %v4487, %v4483
    %v4728 = vpack.c.b16 %v4488, %v4484
    %v4729 = vpack.c.b16 %v4493, %v4489
    %v4730 = vpack.c.b16 %v4494, %v4490
    %v4731 = vpack.c.b16 %v4495, %v4491
    %v4732 = vpack.c.b16 %v4496, %v4492
    %v4733 = vpack.c.b16 %v4501, %v4497
    %v4734 = vpack.c.b16 %v4502, %v4498
    %v4735 = vpack.c.b16 %v4503, %v4499
    %v4736 = vpack.c.b16 %v4504, %v4500
    %v4737 = vpack.c.b16 %v4509, %v4505
    %v4738 = vpack.c.b16 %v4510, %v4506
    %v4739 = vpack.c.b16 %v4511, %v4507
    %v4740 = vpack.c.b16 %v4512, %v4508
    %v4741 = vpack.c.b16 %v4517, %v4513
    %v4742 = vpack.c.b16 %v4518, %v4514
    %v4743 = vpack.c.b16 %v4519, %v4515
    %v4744 = vpack.c.b16 %v4520, %v4516
    %v4745 = vpack.c.b16 %v4525, %v4521
    %v4746 = vpack.c.b16 %v4526, %v4522
    %v4747 = vpack.c.b16 %v4527, %v4523
    %v4748 = vpack.c.b16 %v4528, %v4524
    %v4749 = vpack.c.b16 %v4533, %v4529
    %v4750 = vpack.c.b16 %v4534, %v4530
    %v4751 = vpack.c.b16 %v4535, %v4531
    %v4752 = vpack.c.b16 %v4536, %v4532
    %v4753 = vpack.c.b16 %v4541, %v4537
    %v4754 = vpack.c.b16 %v4542, %v4538
    %v4755 = vpack.c.b16 %v4543, %v4539
    %v4756 = vpack.c.b16 %v4544, %v4540
    %v4757 = vpack.c.b16 %v4549, %v4545
    %v4758 = vpack.c.b16 %v4550, %v4546
    %v4759 = vpack.c.b16 %v4551, %v4547
    %v4760 = vpack.c.b16 %v4552, %v4548
    %v4761 = vpack.c.b16 %v4557, %v4553
    %v4762 = vpack.c.b16 %v4558, %v4554
    %v4763 = vpack.c.b16 %v4559, %v4555
    %v4764 = vpack.c.b16 %v4560, %v4556
    %v4765 = vpack.c.b16 %v4565, %v4561
    %v4766 = vpack.c.b16 %v4566, %v4562
    %v4767 = vpack.c.b16 %v4567, %v4563
    %v4768 = vpack.c.b16 %v4568, %v4564
    %v4769 = vpack.c.b16 %v4573, %v4569
    %v4770 = vpack.c.b16 %v4574, %v4570
    %v4771 = vpack.c.b16 %v4575, %v4571
    %v4772 = vpack.c.b16 %v4576, %v4572
    %v4773 = vpack.c.b16 %v4581, %v4577
    %v4774 = vpack.c.b16 %v4582, %v4578
    %v4775 = vpack.c.b16 %v4583, %v4579
    %v4776 = vpack.c.b16 %v4584, %v4580
    %v4777 = vpack.c.b16 %v4589, %v4585
    %v4778 = vpack.c.b16 %v4590, %v4586
    %v4779 = vpack.c.b16 %v4591, %v4587
    %v4780 = vpack.c.b16 %v4592, %v4588
    %v4781 = vpack.c.b16 %v4597, %v4593
    %v4782 = vpack.c.b16 %v4598, %v4594
    %v4783 = vpack.c.b16 %v4599, %v4595
    %v4784 = vpack.c.b16 %v4600, %v4596
    %v4785 = vpack.c.b16 %v4605, %v4601
    %v4786 = vpack.c.b16 %v4606, %v4602
    %v4787 = vpack.c.b16 %v4607, %v4603
    %v4788 = vpack.c.b16 %v4608, %v4604
    %v4789 = vpack.c.b16 %v4613, %v4609
    %v4790 = vpack.c.b16 %v4614, %v4610
    %v4791 = vpack.c.b16 %v4615, %v4611
    %v4792 = vpack.c.b16 %v4616, %v4612
    %v4793 = vpack.c.b16 %v4621, %v4617
    %v4794 = vpack.c.b16 %v4622, %v4618
    %v4795 = vpack.c.b16 %v4623, %v4619
    %v4796 = vpack.c.b16 %v4624, %v4620
    %v4797 = vpack.c.b16 %v4629, %v4625
    %v4798 = vpack.c.b16 %v4630, %v4626
    %v4799 = vpack.c.b16 %v4631, %v4627
    %v4800 = vpack.c.b16 %v4632, %v4628
    %v4801 = vpack.c.b16 %v4637, %v4633
    %v4802 = vpack.c.b16 %v4638, %v4634
    %v4803 = vpack.c.b16 %v4639, %v4635
    %v4804 = vpack.c.b16 %v4640, %v4636
    %v4805 = vpack.c.b16 %v4645, %v4641
    %v4806 = vpack.c.b16 %v4646, %v4642
    %v4807 = vpack.c.b16 %v4647, %v4643
    %v4808 = vpack.c.b16 %v4648, %v4644
    %v4809 = vpack.c.b16 %v4653, %v4649
    %v4810 = vpack.c.b16 %v4654, %v4650
    %v4811 = vpack.c.b16 %v4655, %v4651
    %v4812 = vpack.c.b16 %v4656, %v4652
    %v4813 = vpack.c.b16 %v4661, %v4657
    %v4814 = vpack.c.b16 %v4662, %v4658
    %v4815 = vpack.c.b16 %v4663, %v4659
    %v4816 = vpack.c.b16 %v4664, %v4660
    %v4817 = vpack.c.b16 %v4669, %v4665
    %v4818 = vpack.c.b16 %v4670, %v4666
    %v4819 = vpack.c.b16 %v4671, %v4667
    %v4820 = vpack.c.b16 %v4672, %v4668
    %v4821 = vpack.c.b16 %v4677, %v4673
    %v4822 = vpack.c.b16 %v4678, %v4674
    %v4823 = vpack.c.b16 %v4679, %v4675
    %v4824 = vpack.c.b16 %v4680, %v4676
    %v4825 = vpack.c.b16 %v4685, %v4681
    %v4826 = vpack.c.b16 %v4686, %v4682
    %v4827 = vpack.c.b16 %v4687, %v4683
    %v4828 = vpack.c.b16 %v4688, %v4684
    %v4829 = vpack.c.b16 %v4693, %v4689
    %v4830 = vpack.c.b16 %v4694, %v4690
    %v4831 = vpack.c.b16 %v4695, %v4691
    %v4832 = vpack.c.b16 %v4696, %v4692
    %v4833 = vpack.c.b16 %v4701, %v4697
    %v4834 = vpack.c.b16 %v4702, %v4698
    %v4835 = vpack.c.b16 %v4703, %v4699
    %v4836 = vpack.c.b16 %v4704, %v4700
    %v4837 = vpack.c.b16 %v4709, %v4705
    %v4838 = vpack.c.b16 %v4710, %v4706
    %v4839 = vpack.c.b16 %v4711, %v4707
    %v4840 = vpack.c.b16 %v4712, %v4708
    %4969 = vmatprep.subr.bf16.mxu0 %v4714
    %4970 = vmatpush1.bf16.msra.mxu0 %v4713
    %4971 = vmatprep.subr.bf16.mxu0 %v4718
    %4972 = vmatpush1.bf16.msra.mxu0 %v4717
    %4973 = vmatprep.subr.bf16.mxu0 %v4722
    %4974 = vmatpush1.bf16.msra.mxu0 %v4721
    %4975 = vmatprep.subr.bf16.mxu0 %v4726
    %4976 = vmatpush1.bf16.msra.mxu0 %v4725
    %4977 = vmatprep.subr.bf16.mxu0 %v4730
    %4978 = vmatpush1.bf16.msra.mxu0 %v4729
    %4979 = vmatprep.subr.bf16.mxu0 %v4734
    %4980 = vmatpush1.bf16.msra.mxu0 %v4733
    %4981 = vmatprep.subr.bf16.mxu0 %v4738
    %4982 = vmatpush1.bf16.msra.mxu0 %v4737
    %4983 = vmatprep.subr.bf16.mxu0 %v4742
    %4984 = vmatpush1.bf16.msra.mxu0 %v4741
    %4985 = vmatprep.subr.bf16.mxu0 %v4746
    %4986 = vmatpush1.bf16.msra.mxu0 %v4745
    %4987 = vmatprep.subr.bf16.mxu0 %v4750
    %4988 = vmatpush1.bf16.msra.mxu0 %v4749
    %4989 = vmatprep.subr.bf16.mxu0 %v4754
    %4990 = vmatpush1.bf16.msra.mxu0 %v4753
    %4991 = vmatprep.subr.bf16.mxu0 %v4758
    %4992 = vmatpush1.bf16.msra.mxu0 %v4757
    %4993 = vmatprep.subr.bf16.mxu0 %v4762
    %4994 = vmatpush1.bf16.msra.mxu0 %v4761
    %4995 = vmatprep.subr.bf16.mxu0 %v4766
    %4996 = vmatpush1.bf16.msra.mxu0 %v4765
    %4997 = vmatprep.subr.bf16.mxu0 %v4770
    %4998 = vmatpush1.bf16.msra.mxu0 %v4769
    %4999 = vmatprep.subr.bf16.mxu0 %v4774
    %5000 = vmatpush1.bf16.msra.mxu0 %v4773
    %5001 = vmatprep.mubr.bf16.mxu0 %v4175
    %5002 = vmatmul.mubr.bf16.gmra.mrb[0].mxu0 %v4174
    %v5003 = vpop.f32.mrb[0].mxu0
    %v5004 = vadd.f32 %v4312, %v5003
    %v5005 = vpop.f32.mrb[0].mxu0
    %v5006 = vadd.f32 %v4316, %v5005
    %v5007 = vpop.f32.mrb[0].mxu0
    %v5008 = vpop.f32.mrb[0].mxu0
    %5009 = vdwg.mxu0
    %5010 = vmatprep.subr.bf16.mxu0 %v4778
    %5011 = vmatpush1.bf16.msra.mxu0 %v4777
    %5012 = vmatprep.subr.bf16.mxu0 %v4782
    %5013 = vmatpush1.bf16.msra.mxu0 %v4781
    %5014 = vmatprep.subr.bf16.mxu0 %v4786
    %5015 = vmatpush1.bf16.msra.mxu0 %v4785
    %5016 = vmatprep.subr.bf16.mxu0 %v4790
    %5017 = vmatpush1.bf16.msra.mxu0 %v4789
    %5018 = vmatprep.subr.bf16.mxu0 %v4794
    %5019 = vmatpush1.bf16.msra.mxu0 %v4793
    %5020 = vmatprep.subr.bf16.mxu0 %v4798
    %5021 = vmatpush1.bf16.msra.mxu0 %v4797
    %5022 = vmatprep.subr.bf16.mxu0 %v4802
    %5023 = vmatpush1.bf16.msra.mxu0 %v4801
    %5024 = vmatprep.subr.bf16.mxu0 %v4806
    %5025 = vmatpush1.bf16.msra.mxu0 %v4805
    %5026 = vmatprep.subr.bf16.mxu0 %v4810
    %5027 = vmatpush1.bf16.msra.mxu0 %v4809
    %5028 = vmatprep.subr.bf16.mxu0 %v4814
    %5029 = vmatpush1.bf16.msra.mxu0 %v4813
    %5030 = vmatprep.subr.bf16.mxu0 %v4818
    %5031 = vmatpush1.bf16.msra.mxu0 %v4817
    %5032 = vmatprep.subr.bf16.mxu0 %v4822
    %5033 = vmatpush1.bf16.msra.mxu0 %v4821
    %5034 = vmatprep.subr.bf16.mxu0 %v4826
    %5035 = vmatpush1.bf16.msra.mxu0 %v4825
    %5036 = vmatprep.subr.bf16.mxu0 %v4830
    %5037 = vmatpush1.bf16.msra.mxu0 %v4829
    %5038 = vmatprep.subr.bf16.mxu0 %v4834
    %5039 = vmatpush1.bf16.msra.mxu0 %v4833
    %5040 = vmatprep.subr.bf16.mxu0 %v4838
    %5041 = vmatpush1.bf16.msra.mxu0 %v4837
    %5042 = vmatprep.mubr.bf16.mxu0 %v4177
    %5043 = vmatmul.mubr.bf16.gmra.mrb[0].mxu0 %v4176
    %v5044 = vpop.f32.mrb[0].mxu0
    %v5045 = vadd.f32 %v5004, %v5044
    %v5046 = vpop.f32.mrb[0].mxu0
    %v5047 = vadd.f32 %v5006, %v5046
    %v5048 = vpop.f32.mrb[0].mxu0
    %v5049 = vpop.f32.mrb[0].mxu0
    %5050 = vdwg.mxu0
    %5051 = vmatprep.subr.bf16.mxu0 %v4716
    %5052 = vmatpush1.bf16.msra.mxu0 %v4715
    %5053 = vmatprep.subr.bf16.mxu0 %v4720
    %5054 = vmatpush1.bf16.msra.mxu0 %v4719
    %5055 = vmatprep.subr.bf16.mxu0 %v4724
    %5056 = vmatpush1.bf16.msra.mxu0 %v4723
    %5057 = vmatprep.subr.bf16.mxu0 %v4728
    %5058 = vmatpush1.bf16.msra.mxu0 %v4727
    %5059 = vmatprep.subr.bf16.mxu0 %v4732
    %5060 = vmatpush1.bf16.msra.mxu0 %v4731
    %5061 = vmatprep.subr.bf16.mxu0 %v4736
    %5062 = vmatpush1.bf16.msra.mxu0 %v4735
    %5063 = vmatprep.subr.bf16.mxu0 %v4740
    %5064 = vmatpush1.bf16.msra.mxu0 %v4739
    %5065 = vmatprep.subr.bf16.mxu0 %v4744
    %5066 = vmatpush1.bf16.msra.mxu0 %v4743
    %5067 = vmatprep.subr.bf16.mxu0 %v4748
    %5068 = vmatpush1.bf16.msra.mxu0 %v4747
    %5069 = vmatprep.subr.bf16.mxu0 %v4752
    %5070 = vmatpush1.bf16.msra.mxu0 %v4751
    %5071 = vmatprep.subr.bf16.mxu0 %v4756
    %5072 = vmatpush1.bf16.msra.mxu0 %v4755
    %5073 = vmatprep.subr.bf16.mxu0 %v4760
    %5074 = vmatpush1.bf16.msra.mxu0 %v4759
    %5075 = vmatprep.subr.bf16.mxu0 %v4764
    %5076 = vmatpush1.bf16.msra.mxu0 %v4763
    %5077 = vmatprep.subr.bf16.mxu0 %v4768
    %5078 = vmatpush1.bf16.msra.mxu0 %v4767
    %5079 = vmatprep.subr.bf16.mxu0 %v4772
    %5080 = vmatpush1.bf16.msra.mxu0 %v4771
    %5081 = vmatprep.subr.bf16.mxu0 %v4776
    %5082 = vmatpush1.bf16.msra.mxu0 %v4775
    %5083 = vmatprep.mubr.bf16.mxu0 %v4175
    %5084 = vmatmul.mubr.bf16.gmra.mrb[0].mxu0 %v4174
    %v5085 = vpop.f32.mrb[0].mxu0
    %v5086 = vadd.f32 %v4320, %v5085
    %v5087 = vpop.f32.mrb[0].mxu0
    %v5088 = vadd.f32 %v4324, %v5087
    %v5089 = vpop.f32.mrb[0].mxu0
    %v5090 = vpop.f32.mrb[0].mxu0
    %5091 = vdwg.mxu0
    %5092 = vmatprep.subr.bf16.mxu0 %v4780
    %5093 = vmatpush1.bf16.msra.mxu0 %v4779
    %5094 = vmatprep.subr.bf16.mxu0 %v4784
    %5095 = vmatpush1.bf16.msra.mxu0 %v4783
    %5096 = vmatprep.subr.bf16.mxu0 %v4788
    %5097 = vmatpush1.bf16.msra.mxu0 %v4787
    %5098 = vmatprep.subr.bf16.mxu0 %v4792
    %5099 = vmatpush1.bf16.msra.mxu0 %v4791
    %5100 = vmatprep.subr.bf16.mxu0 %v4796
    %5101 = vmatpush1.bf16.msra.mxu0 %v4795
    %5102 = vmatprep.subr.bf16.mxu0 %v4800
    %5103 = vmatpush1.bf16.msra.mxu0 %v4799
    %5104 = vmatprep.subr.bf16.mxu0 %v4804
    %5105 = vmatpush1.bf16.msra.mxu0 %v4803
    %5106 = vmatprep.subr.bf16.mxu0 %v4808
    %5107 = vmatpush1.bf16.msra.mxu0 %v4807
    %5108 = vmatprep.subr.bf16.mxu0 %v4812
    %5109 = vmatpush1.bf16.msra.mxu0 %v4811
    %5110 = vmatprep.subr.bf16.mxu0 %v4816
    %5111 = vmatpush1.bf16.msra.mxu0 %v4815
    %5112 = vmatprep.subr.bf16.mxu0 %v4820
    %5113 = vmatpush1.bf16.msra.mxu0 %v4819
    %5114 = vmatprep.subr.bf16.mxu0 %v4824
    %5115 = vmatpush1.bf16.msra.mxu0 %v4823
    %5116 = vmatprep.subr.bf16.mxu0 %v4828
    %5117 = vmatpush1.bf16.msra.mxu0 %v4827
    %5118 = vmatprep.subr.bf16.mxu0 %v4832
    %5119 = vmatpush1.bf16.msra.mxu0 %v4831
    %5120 = vmatprep.subr.bf16.mxu0 %v4836
    %5121 = vmatpush1.bf16.msra.mxu0 %v4835
    %5122 = vmatprep.subr.bf16.mxu0 %v4840
    %5123 = vmatpush1.bf16.msra.mxu0 %v4839
    %5124 = vmatprep.mubr.bf16.mxu0 %v4177
    %5125 = vmatmul.mubr.bf16.gmra.mrb[0].mxu0 %v4176
    %v5126 = vpop.f32.mrb[0].mxu0
    %v5127 = vadd.f32 %v5086, %v5126
    %v5128 = vpop.f32.mrb[0].mxu0
    %v5129 = vadd.f32 %v5088, %v5128
    %v5130 = vpop.f32.mrb[0].mxu0
    %v5131 = vpop.f32.mrb[0].mxu0
    %5132 = vdwg.mxu0
    %v5133 = vmax.f32 %v5045, 0.0
    %v5134 = vmax.f32 %v5047, 0.0
    %v5135 = vmax.f32 %v5127, 0.0
    %v5136 = vmax.f32 %v5129, 0.0
    %v5137 = vpack.c.bf16 %v5133, %v5133
    %v5138 = vpack.c.bf16 %v5134, %v5134
    %v5139 = vpack.c.bf16 %v5135, %v5135
    %v5140 = vpack.c.bf16 %v5136, %v5136
    %v5141 = vld [vmem:[#allocation16] sm:$0xff]
    %v5142 = vld [vmem:[#allocation16 + $0x8] sm:$0xff]
    %v5143 = vld [vmem:[#allocation16 + $0x10] sm:$0xff]
    %v5144 = vld [vmem:[#allocation16 + $0x18] sm:$0xff]
    %v5145 = vld [vmem:[#allocation16 + $0x20] sm:$0xff]
    %v5146 = vld [vmem:[#allocation16 + $0x28] sm:$0xff]
    %v5147 = vld [vmem:[#allocation16 + $0x30] sm:$0xff]
    %v5148 = vld [vmem:[#allocation16 + $0x38] sm:$0xff]
    %v5149 = vld [vmem:[#allocation16 + $0x40] sm:$0xff]
    %v5150 = vld [vmem:[#allocation16 + $0x48] sm:$0xff]
    %v5151 = vld [vmem:[#allocation16 + $0x50] sm:$0xff]
    %v5152 = vld [vmem:[#allocation16 + $0x58] sm:$0xff]
    %v5153 = vld [vmem:[#allocation16 + $0x60] sm:$0xff]
    %v5154 = vld [vmem:[#allocation16 + $0x68] sm:$0xff]
    %v5155 = vld [vmem:[#allocation16 + $0x70] sm:$0xff]
    %v5156 = vld [vmem:[#allocation16 + $0x78] sm:$0xff]
    %v5157 = vld [vmem:[#allocation16 + $0x80] sm:$0xff]
    %v5158 = vld [vmem:[#allocation16 + $0x88] sm:$0xff]
    %v5159 = vld [vmem:[#allocation16 + $0x90] sm:$0xff]
    %v5160 = vld [vmem:[#allocation16 + $0x98] sm:$0xff]
    %v5161 = vld [vmem:[#allocation16 + $0xa0] sm:$0xff]
    %v5162 = vld [vmem:[#allocation16 + $0xa8] sm:$0xff]
    %v5163 = vld [vmem:[#allocation16 + $0xb0] sm:$0xff]
    %v5164 = vld [vmem:[#allocation16 + $0xb8] sm:$0xff]
    %v5165 = vld [vmem:[#allocation16 + $0xc0] sm:$0xff]
    %v5166 = vld [vmem:[#allocation16 + $0xc8] sm:$0xff]
    %v5167 = vld [vmem:[#allocation16 + $0xd0] sm:$0xff]
    %v5168 = vld [vmem:[#allocation16 + $0xd8] sm:$0xff]
    %v5169 = vld [vmem:[#allocation16 + $0xe0] sm:$0xff]
    %v5170 = vld [vmem:[#allocation16 + $0xe8] sm:$0xff]
    %v5171 = vld [vmem:[#allocation16 + $0xf0] sm:$0xff]
    %v5172 = vld [vmem:[#allocation16 + $0xf8] sm:$0xff]
    %v5173 = vld [vmem:[#allocation16 + $0x100] sm:$0xff]
    %v5174 = vld [vmem:[#allocation16 + $0x108] sm:$0xff]
    %v5175 = vld [vmem:[#allocation16 + $0x110] sm:$0xff]
    %v5176 = vld [vmem:[#allocation16 + $0x118] sm:$0xff]
    %v5177 = vld [vmem:[#allocation16 + $0x120] sm:$0xff]
    %v5178 = vld [vmem:[#allocation16 + $0x128] sm:$0xff]
    %v5179 = vld [vmem:[#allocation16 + $0x130] sm:$0xff]
    %v5180 = vld [vmem:[#allocation16 + $0x138] sm:$0xff]
    %v5181 = vld [vmem:[#allocation16 + $0x140] sm:$0xff]
    %v5182 = vld [vmem:[#allocation16 + $0x148] sm:$0xff]
    %v5183 = vld [vmem:[#allocation16 + $0x150] sm:$0xff]
    %v5184 = vld [vmem:[#allocation16 + $0x158] sm:$0xff]
    %v5185 = vld [vmem:[#allocation16 + $0x160] sm:$0xff]
    %v5186 = vld [vmem:[#allocation16 + $0x168] sm:$0xff]
    %v5187 = vld [vmem:[#allocation16 + $0x170] sm:$0xff]
    %v5188 = vld [vmem:[#allocation16 + $0x178] sm:$0xff]
    %v5189 = vld [vmem:[#allocation16 + $0x180] sm:$0xff]
    %v5190 = vld [vmem:[#allocation16 + $0x188] sm:$0xff]
    %v5191 = vld [vmem:[#allocation16 + $0x190] sm:$0xff]
    %v5192 = vld [vmem:[#allocation16 + $0x198] sm:$0xff]
    %v5193 = vld [vmem:[#allocation16 + $0x1a0] sm:$0xff]
    %v5194 = vld [vmem:[#allocation16 + $0x1a8] sm:$0xff]
    %v5195 = vld [vmem:[#allocation16 + $0x1b0] sm:$0xff]
    %v5196 = vld [vmem:[#allocation16 + $0x1b8] sm:$0xff]
    %v5197 = vld [vmem:[#allocation16 + $0x1c0] sm:$0xff]
    %v5198 = vld [vmem:[#allocation16 + $0x1c8] sm:$0xff]
    %v5199 = vld [vmem:[#allocation16 + $0x1d0] sm:$0xff]
    %v5200 = vld [vmem:[#allocation16 + $0x1d8] sm:$0xff]
    %v5201 = vld [vmem:[#allocation16 + $0x1e0] sm:$0xff]
    %v5202 = vld [vmem:[#allocation16 + $0x1e8] sm:$0xff]
    %v5203 = vld [vmem:[#allocation16 + $0x1f0] sm:$0xff]
    %v5204 = vld [vmem:[#allocation16 + $0x1f8] sm:$0xff]
    %v5205 = vld [vmem:[#allocation16 + $0x200] sm:$0xff]
    %v5206 = vld [vmem:[#allocation16 + $0x208] sm:$0xff]
    %v5207 = vld [vmem:[#allocation16 + $0x210] sm:$0xff]
    %v5208 = vld [vmem:[#allocation16 + $0x218] sm:$0xff]
    %v5209 = vld [vmem:[#allocation16 + $0x220] sm:$0xff]
    %v5210 = vld [vmem:[#allocation16 + $0x228] sm:$0xff]
    %v5211 = vld [vmem:[#allocation16 + $0x230] sm:$0xff]
    %v5212 = vld [vmem:[#allocation16 + $0x238] sm:$0xff]
    %v5213 = vld [vmem:[#allocation16 + $0x240] sm:$0xff]
    %v5214 = vld [vmem:[#allocation16 + $0x248] sm:$0xff]
    %v5215 = vld [vmem:[#allocation16 + $0x250] sm:$0xff]
    %v5216 = vld [vmem:[#allocation16 + $0x258] sm:$0xff]
    %v5217 = vld [vmem:[#allocation16 + $0x260] sm:$0xff]
    %v5218 = vld [vmem:[#allocation16 + $0x268] sm:$0xff]
    %v5219 = vld [vmem:[#allocation16 + $0x270] sm:$0xff]
    %v5220 = vld [vmem:[#allocation16 + $0x278] sm:$0xff]
    %v5221 = vld [vmem:[#allocation16 + $0x280] sm:$0xff]
    %v5222 = vld [vmem:[#allocation16 + $0x288] sm:$0xff]
    %v5223 = vld [vmem:[#allocation16 + $0x290] sm:$0xff]
    %v5224 = vld [vmem:[#allocation16 + $0x298] sm:$0xff]
    %v5225 = vld [vmem:[#allocation16 + $0x2a0] sm:$0xff]
    %v5226 = vld [vmem:[#allocation16 + $0x2a8] sm:$0xff]
    %v5227 = vld [vmem:[#allocation16 + $0x2b0] sm:$0xff]
    %v5228 = vld [vmem:[#allocation16 + $0x2b8] sm:$0xff]
    %v5229 = vld [vmem:[#allocation16 + $0x2c0] sm:$0xff]
    %v5230 = vld [vmem:[#allocation16 + $0x2c8] sm:$0xff]
    %v5231 = vld [vmem:[#allocation16 + $0x2d0] sm:$0xff]
    %v5232 = vld [vmem:[#allocation16 + $0x2d8] sm:$0xff]
    %v5233 = vld [vmem:[#allocation16 + $0x2e0] sm:$0xff]
    %v5234 = vld [vmem:[#allocation16 + $0x2e8] sm:$0xff]
    %v5235 = vld [vmem:[#allocation16 + $0x2f0] sm:$0xff]
    %v5236 = vld [vmem:[#allocation16 + $0x2f8] sm:$0xff]
    %v5237 = vld [vmem:[#allocation16 + $0x300] sm:$0xff]
    %v5238 = vld [vmem:[#allocation16 + $0x308] sm:$0xff]
    %v5239 = vld [vmem:[#allocation16 + $0x310] sm:$0xff]
    %v5240 = vld [vmem:[#allocation16 + $0x318] sm:$0xff]
    %v5241 = vld [vmem:[#allocation16 + $0x320] sm:$0xff]
    %v5242 = vld [vmem:[#allocation16 + $0x328] sm:$0xff]
    %v5243 = vld [vmem:[#allocation16 + $0x330] sm:$0xff]
    %v5244 = vld [vmem:[#allocation16 + $0x338] sm:$0xff]
    %v5245 = vld [vmem:[#allocation16 + $0x340] sm:$0xff]
    %v5246 = vld [vmem:[#allocation16 + $0x348] sm:$0xff]
    %v5247 = vld [vmem:[#allocation16 + $0x350] sm:$0xff]
    %v5248 = vld [vmem:[#allocation16 + $0x358] sm:$0xff]
    %v5249 = vld [vmem:[#allocation16 + $0x360] sm:$0xff]
    %v5250 = vld [vmem:[#allocation16 + $0x368] sm:$0xff]
    %v5251 = vld [vmem:[#allocation16 + $0x370] sm:$0xff]
    %v5252 = vld [vmem:[#allocation16 + $0x378] sm:$0xff]
    %v5253 = vld [vmem:[#allocation16 + $0x380] sm:$0xff]
    %v5254 = vld [vmem:[#allocation16 + $0x388] sm:$0xff]
    %v5255 = vld [vmem:[#allocation16 + $0x390] sm:$0xff]
    %v5256 = vld [vmem:[#allocation16 + $0x398] sm:$0xff]
    %v5257 = vld [vmem:[#allocation16 + $0x3a0] sm:$0xff]
    %v5258 = vld [vmem:[#allocation16 + $0x3a8] sm:$0xff]
    %v5259 = vld [vmem:[#allocation16 + $0x3b0] sm:$0xff]
    %v5260 = vld [vmem:[#allocation16 + $0x3b8] sm:$0xff]
    %v5261 = vld [vmem:[#allocation16 + $0x3c0] sm:$0xff]
    %v5262 = vld [vmem:[#allocation16 + $0x3c8] sm:$0xff]
    %v5263 = vld [vmem:[#allocation16 + $0x3d0] sm:$0xff]
    %v5264 = vld [vmem:[#allocation16 + $0x3d8] sm:$0xff]
    %v5265 = vld [vmem:[#allocation16 + $0x3e0] sm:$0xff]
    %v5266 = vld [vmem:[#allocation16 + $0x3e8] sm:$0xff]
    %v5267 = vld [vmem:[#allocation16 + $0x3f0] sm:$0xff]
    %v5268 = vld [vmem:[#allocation16 + $0x3f8] sm:$0xff]
    %s5269 = scalar_lea.vmem %s14, 7
    %v5270 = vld [vmem:[%s5269] ss:$8 sm:$0xf]
    %v5272 = vlaneseq
    %v5273 = vshrl.u32 %v5272, 7
    %v5274 = vsub.s32 0, %v5273
    %v5275 = vrot.slane %v5270, %v5274
    %v5276 = vlaneseq
    %v5277 = vshrl.u32 %v5276, 7
    %v5278 = vsub.s32 1, %v5277
    %v5279 = vrot.slane %v5270, %v5278
    %v5280 = vlaneseq
    %v5281 = vshrl.u32 %v5280, 7
    %v5282 = vsub.s32 2, %v5281
    %v5283 = vrot.slane %v5270, %v5282
    %v5284 = vlaneseq
    %v5285 = vshrl.u32 %v5284, 7
    %v5286 = vsub.s32 3, %v5285
    %v5287 = vrot.slane %v5270, %v5286
    %v5420 = vunpack.c.l.b16 %v5141
    %v5421 = vunpack.c.h.b16 %v5141
    %v5422 = vunpack.c.l.b16 %v5142
    %v5423 = vunpack.c.h.b16 %v5142
    %v5424 = vunpack.c.l.b16 %v5143
    %v5425 = vunpack.c.h.b16 %v5143
    %v5426 = vunpack.c.l.b16 %v5144
    %v5427 = vunpack.c.h.b16 %v5144
    %v5428 = vunpack.c.l.b16 %v5145
    %v5429 = vunpack.c.h.b16 %v5145
    %v5430 = vunpack.c.l.b16 %v5146
    %v5431 = vunpack.c.h.b16 %v5146
    %v5432 = vunpack.c.l.b16 %v5147
    %v5433 = vunpack.c.h.b16 %v5147
    %v5434 = vunpack.c.l.b16 %v5148
    %v5435 = vunpack.c.h.b16 %v5148
    %v5436 = vunpack.c.l.b16 %v5149
    %v5437 = vunpack.c.h.b16 %v5149
    %v5438 = vunpack.c.l.b16 %v5150
    %v5439 = vunpack.c.h.b16 %v5150
    %v5440 = vunpack.c.l.b16 %v5151
    %v5441 = vunpack.c.h.b16 %v5151
    %v5442 = vunpack.c.l.b16 %v5152
    %v5443 = vunpack.c.h.b16 %v5152
    %v5444 = vunpack.c.l.b16 %v5153
    %v5445 = vunpack.c.h.b16 %v5153
    %v5446 = vunpack.c.l.b16 %v5154
    %v5447 = vunpack.c.h.b16 %v5154
    %v5448 = vunpack.c.l.b16 %v5155
    %v5449 = vunpack.c.h.b16 %v5155
    %v5450 = vunpack.c.l.b16 %v5156
    %v5451 = vunpack.c.h.b16 %v5156
    %v5452 = vunpack.c.l.b16 %v5157
    %v5453 = vunpack.c.h.b16 %v5157
    %v5454 = vunpack.c.l.b16 %v5158
    %v5455 = vunpack.c.h.b16 %v5158
    %v5456 = vunpack.c.l.b16 %v5159
    %v5457 = vunpack.c.h.b16 %v5159
    %v5458 = vunpack.c.l.b16 %v5160
    %v5459 = vunpack.c.h.b16 %v5160
    %v5460 = vunpack.c.l.b16 %v5161
    %v5461 = vunpack.c.h.b16 %v5161
    %v5462 = vunpack.c.l.b16 %v5162
    %v5463 = vunpack.c.h.b16 %v5162
    %v5464 = vunpack.c.l.b16 %v5163
    %v5465 = vunpack.c.h.b16 %v5163
    %v5466 = vunpack.c.l.b16 %v5164
    %v5467 = vunpack.c.h.b16 %v5164
    %v5468 = vunpack.c.l.b16 %v5165
    %v5469 = vunpack.c.h.b16 %v5165
    %v5470 = vunpack.c.l.b16 %v5166
    %v5471 = vunpack.c.h.b16 %v5166
    %v5472 = vunpack.c.l.b16 %v5167
    %v5473 = vunpack.c.h.b16 %v5167
    %v5474 = vunpack.c.l.b16 %v5168
    %v5475 = vunpack.c.h.b16 %v5168
    %v5476 = vunpack.c.l.b16 %v5169
    %v5477 = vunpack.c.h.b16 %v5169
    %v5478 = vunpack.c.l.b16 %v5170
    %v5479 = vunpack.c.h.b16 %v5170
    %v5480 = vunpack.c.l.b16 %v5171
    %v5481 = vunpack.c.h.b16 %v5171
    %v5482 = vunpack.c.l.b16 %v5172
    %v5483 = vunpack.c.h.b16 %v5172
    %v5484 = vunpack.c.l.b16 %v5173
    %v5485 = vunpack.c.h.b16 %v5173
    %v5486 = vunpack.c.l.b16 %v5174
    %v5487 = vunpack.c.h.b16 %v5174
    %v5488 = vunpack.c.l.b16 %v5175
    %v5489 = vunpack.c.h.b16 %v5175
    %v5490 = vunpack.c.l.b16 %v5176
    %v5491 = vunpack.c.h.b16 %v5176
    %v5492 = vunpack.c.l.b16 %v5177
    %v5493 = vunpack.c.h.b16 %v5177
    %v5494 = vunpack.c.l.b16 %v5178
    %v5495 = vunpack.c.h.b16 %v5178
    %v5496 = vunpack.c.l.b16 %v5179
    %v5497 = vunpack.c.h.b16 %v5179
    %v5498 = vunpack.c.l.b16 %v5180
    %v5499 = vunpack.c.h.b16 %v5180
    %v5500 = vunpack.c.l.b16 %v5181
    %v5501 = vunpack.c.h.b16 %v5181
    %v5502 = vunpack.c.l.b16 %v5182
    %v5503 = vunpack.c.h.b16 %v5182
    %v5504 = vunpack.c.l.b16 %v5183
    %v5505 = vunpack.c.h.b16 %v5183
    %v5506 = vunpack.c.l.b16 %v5184
    %v5507 = vunpack.c.h.b16 %v5184
    %v5508 = vunpack.c.l.b16 %v5185
    %v5509 = vunpack.c.h.b16 %v5185
    %v5510 = vunpack.c.l.b16 %v5186
    %v5511 = vunpack.c.h.b16 %v5186
    %v5512 = vunpack.c.l.b16 %v5187
    %v5513 = vunpack.c.h.b16 %v5187
    %v5514 = vunpack.c.l.b16 %v5188
    %v5515 = vunpack.c.h.b16 %v5188
    %v5516 = vunpack.c.l.b16 %v5189
    %v5517 = vunpack.c.h.b16 %v5189
    %v5518 = vunpack.c.l.b16 %v5190
    %v5519 = vunpack.c.h.b16 %v5190
    %v5520 = vunpack.c.l.b16 %v5191
    %v5521 = vunpack.c.h.b16 %v5191
    %v5522 = vunpack.c.l.b16 %v5192
    %v5523 = vunpack.c.h.b16 %v5192
    %v5524 = vunpack.c.l.b16 %v5193
    %v5525 = vunpack.c.h.b16 %v5193
    %v5526 = vunpack.c.l.b16 %v5194
    %v5527 = vunpack.c.h.b16 %v5194
    %v5528 = vunpack.c.l.b16 %v5195
    %v5529 = vunpack.c.h.b16 %v5195
    %v5530 = vunpack.c.l.b16 %v5196
    %v5531 = vunpack.c.h.b16 %v5196
    %v5532 = vunpack.c.l.b16 %v5197
    %v5533 = vunpack.c.h.b16 %v5197
    %v5534 = vunpack.c.l.b16 %v5198
    %v5535 = vunpack.c.h.b16 %v5198
    %v5536 = vunpack.c.l.b16 %v5199
    %v5537 = vunpack.c.h.b16 %v5199
    %v5538 = vunpack.c.l.b16 %v5200
    %v5539 = vunpack.c.h.b16 %v5200
    %v5540 = vunpack.c.l.b16 %v5201
    %v5541 = vunpack.c.h.b16 %v5201
    %v5542 = vunpack.c.l.b16 %v5202
    %v5543 = vunpack.c.h.b16 %v5202
    %v5544 = vunpack.c.l.b16 %v5203
    %v5545 = vunpack.c.h.b16 %v5203
    %v5546 = vunpack.c.l.b16 %v5204
    %v5547 = vunpack.c.h.b16 %v5204
    %v5548 = vunpack.c.l.b16 %v5205
    %v5549 = vunpack.c.h.b16 %v5205
    %v5550 = vunpack.c.l.b16 %v5206
    %v5551 = vunpack.c.h.b16 %v5206
    %v5552 = vunpack.c.l.b16 %v5207
    %v5553 = vunpack.c.h.b16 %v5207
    %v5554 = vunpack.c.l.b16 %v5208
    %v5555 = vunpack.c.h.b16 %v5208
    %v5556 = vunpack.c.l.b16 %v5209
    %v5557 = vunpack.c.h.b16 %v5209
    %v5558 = vunpack.c.l.b16 %v5210
    %v5559 = vunpack.c.h.b16 %v5210
    %v5560 = vunpack.c.l.b16 %v5211
    %v5561 = vunpack.c.h.b16 %v5211
    %v5562 = vunpack.c.l.b16 %v5212
    %v5563 = vunpack.c.h.b16 %v5212
    %v5564 = vunpack.c.l.b16 %v5213
    %v5565 = vunpack.c.h.b16 %v5213
    %v5566 = vunpack.c.l.b16 %v5214
    %v5567 = vunpack.c.h.b16 %v5214
    %v5568 = vunpack.c.l.b16 %v5215
    %v5569 = vunpack.c.h.b16 %v5215
    %v5570 = vunpack.c.l.b16 %v5216
    %v5571 = vunpack.c.h.b16 %v5216
    %v5572 = vunpack.c.l.b16 %v5217
    %v5573 = vunpack.c.h.b16 %v5217
    %v5574 = vunpack.c.l.b16 %v5218
    %v5575 = vunpack.c.h.b16 %v5218
    %v5576 = vunpack.c.l.b16 %v5219
    %v5577 = vunpack.c.h.b16 %v5219
    %v5578 = vunpack.c.l.b16 %v5220
    %v5579 = vunpack.c.h.b16 %v5220
    %v5580 = vunpack.c.l.b16 %v5221
    %v5581 = vunpack.c.h.b16 %v5221
    %v5582 = vunpack.c.l.b16 %v5222
    %v5583 = vunpack.c.h.b16 %v5222
    %v5584 = vunpack.c.l.b16 %v5223
    %v5585 = vunpack.c.h.b16 %v5223
    %v5586 = vunpack.c.l.b16 %v5224
    %v5587 = vunpack.c.h.b16 %v5224
    %v5588 = vunpack.c.l.b16 %v5225
    %v5589 = vunpack.c.h.b16 %v5225
    %v5590 = vunpack.c.l.b16 %v5226
    %v5591 = vunpack.c.h.b16 %v5226
    %v5592 = vunpack.c.l.b16 %v5227
    %v5593 = vunpack.c.h.b16 %v5227
    %v5594 = vunpack.c.l.b16 %v5228
    %v5595 = vunpack.c.h.b16 %v5228
    %v5596 = vunpack.c.l.b16 %v5229
    %v5597 = vunpack.c.h.b16 %v5229
    %v5598 = vunpack.c.l.b16 %v5230
    %v5599 = vunpack.c.h.b16 %v5230
    %v5600 = vunpack.c.l.b16 %v5231
    %v5601 = vunpack.c.h.b16 %v5231
    %v5602 = vunpack.c.l.b16 %v5232
    %v5603 = vunpack.c.h.b16 %v5232
    %v5604 = vunpack.c.l.b16 %v5233
    %v5605 = vunpack.c.h.b16 %v5233
    %v5606 = vunpack.c.l.b16 %v5234
    %v5607 = vunpack.c.h.b16 %v5234
    %v5608 = vunpack.c.l.b16 %v5235
    %v5609 = vunpack.c.h.b16 %v5235
    %v5610 = vunpack.c.l.b16 %v5236
    %v5611 = vunpack.c.h.b16 %v5236
    %v5612 = vunpack.c.l.b16 %v5237
    %v5613 = vunpack.c.h.b16 %v5237
    %v5614 = vunpack.c.l.b16 %v5238
    %v5615 = vunpack.c.h.b16 %v5238
    %v5616 = vunpack.c.l.b16 %v5239
    %v5617 = vunpack.c.h.b16 %v5239
    %v5618 = vunpack.c.l.b16 %v5240
    %v5619 = vunpack.c.h.b16 %v5240
    %v5620 = vunpack.c.l.b16 %v5241
    %v5621 = vunpack.c.h.b16 %v5241
    %v5622 = vunpack.c.l.b16 %v5242
    %v5623 = vunpack.c.h.b16 %v5242
    %v5624 = vunpack.c.l.b16 %v5243
    %v5625 = vunpack.c.h.b16 %v5243
    %v5626 = vunpack.c.l.b16 %v5244
    %v5627 = vunpack.c.h.b16 %v5244
    %v5628 = vunpack.c.l.b16 %v5245
    %v5629 = vunpack.c.h.b16 %v5245
    %v5630 = vunpack.c.l.b16 %v5246
    %v5631 = vunpack.c.h.b16 %v5246
    %v5632 = vunpack.c.l.b16 %v5247
    %v5633 = vunpack.c.h.b16 %v5247
    %v5634 = vunpack.c.l.b16 %v5248
    %v5635 = vunpack.c.h.b16 %v5248
    %v5636 = vunpack.c.l.b16 %v5249
    %v5637 = vunpack.c.h.b16 %v5249
    %v5638 = vunpack.c.l.b16 %v5250
    %v5639 = vunpack.c.h.b16 %v5250
    %v5640 = vunpack.c.l.b16 %v5251
    %v5641 = vunpack.c.h.b16 %v5251
    %v5642 = vunpack.c.l.b16 %v5252
    %v5643 = vunpack.c.h.b16 %v5252
    %v5644 = vunpack.c.l.b16 %v5253
    %v5645 = vunpack.c.h.b16 %v5253
    %v5646 = vunpack.c.l.b16 %v5254
    %v5647 = vunpack.c.h.b16 %v5254
    %v5648 = vunpack.c.l.b16 %v5255
    %v5649 = vunpack.c.h.b16 %v5255
    %v5650 = vunpack.c.l.b16 %v5256
    %v5651 = vunpack.c.h.b16 %v5256
    %v5652 = vunpack.c.l.b16 %v5257
    %v5653 = vunpack.c.h.b16 %v5257
    %v5654 = vunpack.c.l.b16 %v5258
    %v5655 = vunpack.c.h.b16 %v5258
    %v5656 = vunpack.c.l.b16 %v5259
    %v5657 = vunpack.c.h.b16 %v5259
    %v5658 = vunpack.c.l.b16 %v5260
    %v5659 = vunpack.c.h.b16 %v5260
    %v5660 = vunpack.c.l.b16 %v5261
    %v5661 = vunpack.c.h.b16 %v5261
    %v5662 = vunpack.c.l.b16 %v5262
    %v5663 = vunpack.c.h.b16 %v5262
    %v5664 = vunpack.c.l.b16 %v5263
    %v5665 = vunpack.c.h.b16 %v5263
    %v5666 = vunpack.c.l.b16 %v5264
    %v5667 = vunpack.c.h.b16 %v5264
    %v5668 = vunpack.c.l.b16 %v5265
    %v5669 = vunpack.c.h.b16 %v5265
    %v5670 = vunpack.c.l.b16 %v5266
    %v5671 = vunpack.c.h.b16 %v5266
    %v5672 = vunpack.c.l.b16 %v5267
    %v5673 = vunpack.c.h.b16 %v5267
    %v5674 = vunpack.c.l.b16 %v5268
    %v5675 = vunpack.c.h.b16 %v5268
    %v5676 = vpack.c.b16 %v5424, %v5420
    %v5677 = vpack.c.b16 %v5425, %v5421
    %v5678 = vpack.c.b16 %v5426, %v5422
    %v5679 = vpack.c.b16 %v5427, %v5423
    %v5680 = vpack.c.b16 %v5432, %v5428
    %v5681 = vpack.c.b16 %v5433, %v5429
    %v5682 = vpack.c.b16 %v5434, %v5430
    %v5683 = vpack.c.b16 %v5435, %v5431
    %v5684 = vpack.c.b16 %v5440, %v5436
    %v5685 = vpack.c.b16 %v5441, %v5437
    %v5686 = vpack.c.b16 %v5442, %v5438
    %v5687 = vpack.c.b16 %v5443, %v5439
    %v5688 = vpack.c.b16 %v5448, %v5444
    %v5689 = vpack.c.b16 %v5449, %v5445
    %v5690 = vpack.c.b16 %v5450, %v5446
    %v5691 = vpack.c.b16 %v5451, %v5447
    %v5692 = vpack.c.b16 %v5456, %v5452
    %v5693 = vpack.c.b16 %v5457, %v5453
    %v5694 = vpack.c.b16 %v5458, %v5454
    %v5695 = vpack.c.b16 %v5459, %v5455
    %v5696 = vpack.c.b16 %v5464, %v5460
    %v5697 = vpack.c.b16 %v5465, %v5461
    %v5698 = vpack.c.b16 %v5466, %v5462
    %v5699 = vpack.c.b16 %v5467, %v5463
    %v5700 = vpack.c.b16 %v5472, %v5468
    %v5701 = vpack.c.b16 %v5473, %v5469
    %v5702 = vpack.c.b16 %v5474, %v5470
    %v5703 = vpack.c.b16 %v5475, %v5471
    %v5704 = vpack.c.b16 %v5480, %v5476
    %v5705 = vpack.c.b16 %v5481, %v5477
    %v5706 = vpack.c.b16 %v5482, %v5478
    %v5707 = vpack.c.b16 %v5483, %v5479
    %v5708 = vpack.c.b16 %v5488, %v5484
    %v5709 = vpack.c.b16 %v5489, %v5485
    %v5710 = vpack.c.b16 %v5490, %v5486
    %v5711 = vpack.c.b16 %v5491, %v5487
    %v5712 = vpack.c.b16 %v5496, %v5492
    %v5713 = vpack.c.b16 %v5497, %v5493
    %v5714 = vpack.c.b16 %v5498, %v5494
    %v5715 = vpack.c.b16 %v5499, %v5495
    %v5716 = vpack.c.b16 %v5504, %v5500
    %v5717 = vpack.c.b16 %v5505, %v5501
    %v5718 = vpack.c.b16 %v5506, %v5502
    %v5719 = vpack.c.b16 %v5507, %v5503
    %v5720 = vpack.c.b16 %v5512, %v5508
    %v5721 = vpack.c.b16 %v5513, %v5509
    %v5722 = vpack.c.b16 %v5514, %v5510
    %v5723 = vpack.c.b16 %v5515, %v5511
    %v5724 = vpack.c.b16 %v5520, %v5516
    %v5725 = vpack.c.b16 %v5521, %v5517
    %v5726 = vpack.c.b16 %v5522, %v5518
    %v5727 = vpack.c.b16 %v5523, %v5519
    %v5728 = vpack.c.b16 %v5528, %v5524
    %v5729 = vpack.c.b16 %v5529, %v5525
    %v5730 = vpack.c.b16 %v5530, %v5526
    %v5731 = vpack.c.b16 %v5531, %v5527
    %v5732 = vpack.c.b16 %v5536, %v5532
    %v5733 = vpack.c.b16 %v5537, %v5533
    %v5734 = vpack.c.b16 %v5538, %v5534
    %v5735 = vpack.c.b16 %v5539, %v5535
    %v5736 = vpack.c.b16 %v5544, %v5540
    %v5737 = vpack.c.b16 %v5545, %v5541
    %v5738 = vpack.c.b16 %v5546, %v5542
    %v5739 = vpack.c.b16 %v5547, %v5543
    %v5740 = vpack.c.b16 %v5552, %v5548
    %v5741 = vpack.c.b16 %v5553, %v5549
    %v5742 = vpack.c.b16 %v5554, %v5550
    %v5743 = vpack.c.b16 %v5555, %v5551
    %v5744 = vpack.c.b16 %v5560, %v5556
    %v5745 = vpack.c.b16 %v5561, %v5557
    %v5746 = vpack.c.b16 %v5562, %v5558
    %v5747 = vpack.c.b16 %v5563, %v5559
    %v5748 = vpack.c.b16 %v5568, %v5564
    %v5749 = vpack.c.b16 %v5569, %v5565
    %v5750 = vpack.c.b16 %v5570, %v5566
    %v5751 = vpack.c.b16 %v5571, %v5567
    %v5752 = vpack.c.b16 %v5576, %v5572
    %v5753 = vpack.c.b16 %v5577, %v5573
    %v5754 = vpack.c.b16 %v5578, %v5574
    %v5755 = vpack.c.b16 %v5579, %v5575
    %v5756 = vpack.c.b16 %v5584, %v5580
    %v5757 = vpack.c.b16 %v5585, %v5581
    %v5758 = vpack.c.b16 %v5586, %v5582
    %v5759 = vpack.c.b16 %v5587, %v5583
    %v5760 = vpack.c.b16 %v5592, %v5588
    %v5761 = vpack.c.b16 %v5593, %v5589
    %v5762 = vpack.c.b16 %v5594, %v5590
    %v5763 = vpack.c.b16 %v5595, %v5591
    %v5764 = vpack.c.b16 %v5600, %v5596
    %v5765 = vpack.c.b16 %v5601, %v5597
    %v5766 = vpack.c.b16 %v5602, %v5598
    %v5767 = vpack.c.b16 %v5603, %v5599
    %v5768 = vpack.c.b16 %v5608, %v5604
    %v5769 = vpack.c.b16 %v5609, %v5605
    %v5770 = vpack.c.b16 %v5610, %v5606
    %v5771 = vpack.c.b16 %v5611, %v5607
    %v5772 = vpack.c.b16 %v5616, %v5612
    %v5773 = vpack.c.b16 %v5617, %v5613
    %v5774 = vpack.c.b16 %v5618, %v5614
    %v5775 = vpack.c.b16 %v5619, %v5615
    %v5776 = vpack.c.b16 %v5624, %v5620
    %v5777 = vpack.c.b16 %v5625, %v5621
    %v5778 = vpack.c.b16 %v5626, %v5622
    %v5779 = vpack.c.b16 %v5627, %v5623
    %v5780 = vpack.c.b16 %v5632, %v5628
    %v5781 = vpack.c.b16 %v5633, %v5629
    %v5782 = vpack.c.b16 %v5634, %v5630
    %v5783 = vpack.c.b16 %v5635, %v5631
    %v5784 = vpack.c.b16 %v5640, %v5636
    %v5785 = vpack.c.b16 %v5641, %v5637
    %v5786 = vpack.c.b16 %v5642, %v5638
    %v5787 = vpack.c.b16 %v5643, %v5639
    %v5788 = vpack.c.b16 %v5648, %v5644
    %v5789 = vpack.c.b16 %v5649, %v5645
    %v5790 = vpack.c.b16 %v5650, %v5646
    %v5791 = vpack.c.b16 %v5651, %v5647
    %v5792 = vpack.c.b16 %v5656, %v5652
    %v5793 = vpack.c.b16 %v5657, %v5653
    %v5794 = vpack.c.b16 %v5658, %v5654
    %v5795 = vpack.c.b16 %v5659, %v5655
    %v5796 = vpack.c.b16 %v5664, %v5660
    %v5797 = vpack.c.b16 %v5665, %v5661
    %v5798 = vpack.c.b16 %v5666, %v5662
    %v5799 = vpack.c.b16 %v5667, %v5663
    %v5800 = vpack.c.b16 %v5672, %v5668
    %v5801 = vpack.c.b16 %v5673, %v5669
    %v5802 = vpack.c.b16 %v5674, %v5670
    %v5803 = vpack.c.b16 %v5675, %v5671
    %5932 = vmatprep.subr.bf16.mxu0 %v5677
    %5933 = vmatpush1.bf16.msra.mxu0 %v5676
    %5934 = vmatprep.subr.bf16.mxu0 %v5681
    %5935 = vmatpush1.bf16.msra.mxu0 %v5680
    %5936 = vmatprep.subr.bf16.mxu0 %v5685
    %5937 = vmatpush1.bf16.msra.mxu0 %v5684
    %5938 = vmatprep.subr.bf16.mxu0 %v5689
    %5939 = vmatpush1.bf16.msra.mxu0 %v5688
    %5940 = vmatprep.subr.bf16.mxu0 %v5693
    %5941 = vmatpush1.bf16.msra.mxu0 %v5692
    %5942 = vmatprep.subr.bf16.mxu0 %v5697
    %5943 = vmatpush1.bf16.msra.mxu0 %v5696
    %5944 = vmatprep.subr.bf16.mxu0 %v5701
    %5945 = vmatpush1.bf16.msra.mxu0 %v5700
    %5946 = vmatprep.subr.bf16.mxu0 %v5705
    %5947 = vmatpush1.bf16.msra.mxu0 %v5704
    %5948 = vmatprep.subr.bf16.mxu0 %v5709
    %5949 = vmatpush1.bf16.msra.mxu0 %v5708
    %5950 = vmatprep.subr.bf16.mxu0 %v5713
    %5951 = vmatpush1.bf16.msra.mxu0 %v5712
    %5952 = vmatprep.subr.bf16.mxu0 %v5717
    %5953 = vmatpush1.bf16.msra.mxu0 %v5716
    %5954 = vmatprep.subr.bf16.mxu0 %v5721
    %5955 = vmatpush1.bf16.msra.mxu0 %v5720
    %5956 = vmatprep.subr.bf16.mxu0 %v5725
    %5957 = vmatpush1.bf16.msra.mxu0 %v5724
    %5958 = vmatprep.subr.bf16.mxu0 %v5729
    %5959 = vmatpush1.bf16.msra.mxu0 %v5728
    %5960 = vmatprep.subr.bf16.mxu0 %v5733
    %5961 = vmatpush1.bf16.msra.mxu0 %v5732
    %5962 = vmatprep.subr.bf16.mxu0 %v5737
    %5963 = vmatpush1.bf16.msra.mxu0 %v5736
    %5964 = vmatprep.mubr.bf16.mxu0 %v5138
    %5965 = vmatmul.mubr.bf16.gmra.mrb[0].mxu0 %v5137
    %v5966 = vpop.f32.mrb[0].mxu0
    %v5967 = vadd.f32 %v5275, %v5966
    %v5968 = vpop.f32.mrb[0].mxu0
    %v5969 = vadd.f32 %v5279, %v5968
    %v5970 = vpop.f32.mrb[0].mxu0
    %v5971 = vpop.f32.mrb[0].mxu0
    %5972 = vdwg.mxu0
    %5973 = vmatprep.subr.bf16.mxu0 %v5741
    %5974 = vmatpush1.bf16.msra.mxu0 %v5740
    %5975 = vmatprep.subr.bf16.mxu0 %v5745
    %5976 = vmatpush1.bf16.msra.mxu0 %v5744
    %5977 = vmatprep.subr.bf16.mxu0 %v5749
    %5978 = vmatpush1.bf16.msra.mxu0 %v5748
    %5979 = vmatprep.subr.bf16.mxu0 %v5753
    %5980 = vmatpush1.bf16.msra.mxu0 %v5752
    %5981 = vmatprep.subr.bf16.mxu0 %v5757
    %5982 = vmatpush1.bf16.msra.mxu0 %v5756
    %5983 = vmatprep.subr.bf16.mxu0 %v5761
    %5984 = vmatpush1.bf16.msra.mxu0 %v5760
    %5985 = vmatprep.subr.bf16.mxu0 %v5765
    %5986 = vmatpush1.bf16.msra.mxu0 %v5764
    %5987 = vmatprep.subr.bf16.mxu0 %v5769
    %5988 = vmatpush1.bf16.msra.mxu0 %v5768
    %5989 = vmatprep.subr.bf16.mxu0 %v5773
    %5990 = vmatpush1.bf16.msra.mxu0 %v5772
    %5991 = vmatprep.subr.bf16.mxu0 %v5777
    %5992 = vmatpush1.bf16.msra.mxu0 %v5776
    %5993 = vmatprep.subr.bf16.mxu0 %v5781
    %5994 = vmatpush1.bf16.msra.mxu0 %v5780
    %5995 = vmatprep.subr.bf16.mxu0 %v5785
    %5996 = vmatpush1.bf16.msra.mxu0 %v5784
    %5997 = vmatprep.subr.bf16.mxu0 %v5789
    %5998 = vmatpush1.bf16.msra.mxu0 %v5788
    %5999 = vmatprep.subr.bf16.mxu0 %v5793
    %6000 = vmatpush1.bf16.msra.mxu0 %v5792
    %6001 = vmatprep.subr.bf16.mxu0 %v5797
    %6002 = vmatpush1.bf16.msra.mxu0 %v5796
    %6003 = vmatprep.subr.bf16.mxu0 %v5801
    %6004 = vmatpush1.bf16.msra.mxu0 %v5800
    %6005 = vmatprep.mubr.bf16.mxu0 %v5140
    %6006 = vmatmul.mubr.bf16.gmra.mrb[0].mxu0 %v5139
    %v6007 = vpop.f32.mrb[0].mxu0
    %v6008 = vadd.f32 %v5967, %v6007
    %v6009 = vpop.f32.mrb[0].mxu0
    %v6010 = vadd.f32 %v5969, %v6009
    %v6011 = vpop.f32.mrb[0].mxu0
    %v6012 = vpop.f32.mrb[0].mxu0
    %6013 = vdwg.mxu0
    %6014 = vmatprep.subr.bf16.mxu0 %v5679
    %6015 = vmatpush1.bf16.msra.mxu0 %v5678
    %6016 = vmatprep.subr.bf16.mxu0 %v5683
    %6017 = vmatpush1.bf16.msra.mxu0 %v5682
    %6018 = vmatprep.subr.bf16.mxu0 %v5687
    %6019 = vmatpush1.bf16.msra.mxu0 %v5686
    %6020 = vmatprep.subr.bf16.mxu0 %v5691
    %6021 = vmatpush1.bf16.msra.mxu0 %v5690
    %6022 = vmatprep.subr.bf16.mxu0 %v5695
    %6023 = vmatpush1.bf16.msra.mxu0 %v5694
    %6024 = vmatprep.subr.bf16.mxu0 %v5699
    %6025 = vmatpush1.bf16.msra.mxu0 %v5698
    %6026 = vmatprep.subr.bf16.mxu0 %v5703
    %6027 = vmatpush1.bf16.msra.mxu0 %v5702
    %6028 = vmatprep.subr.bf16.mxu0 %v5707
    %6029 = vmatpush1.bf16.msra.mxu0 %v5706
    %6030 = vmatprep.subr.bf16.mxu0 %v5711
    %6031 = vmatpush1.bf16.msra.mxu0 %v5710
    %6032 = vmatprep.subr.bf16.mxu0 %v5715
    %6033 = vmatpush1.bf16.msra.mxu0 %v5714
    %6034 = vmatprep.subr.bf16.mxu0 %v5719
    %6035 = vmatpush1.bf16.msra.mxu0 %v5718
    %6036 = vmatprep.subr.bf16.mxu0 %v5723
    %6037 = vmatpush1.bf16.msra.mxu0 %v5722
    %6038 = vmatprep.subr.bf16.mxu0 %v5727
    %6039 = vmatpush1.bf16.msra.mxu0 %v5726
    %6040 = vmatprep.subr.bf16.mxu0 %v5731
    %6041 = vmatpush1.bf16.msra.mxu0 %v5730
    %6042 = vmatprep.subr.bf16.mxu0 %v5735
    %6043 = vmatpush1.bf16.msra.mxu0 %v5734
    %6044 = vmatprep.subr.bf16.mxu0 %v5739
    %6045 = vmatpush1.bf16.msra.mxu0 %v5738
    %6046 = vmatprep.mubr.bf16.mxu0 %v5138
    %6047 = vmatmul.mubr.bf16.gmra.mrb[0].mxu0 %v5137
    %v6048 = vpop.f32.mrb[0].mxu0
    %v6049 = vadd.f32 %v5283, %v6048
    %v6050 = vpop.f32.mrb[0].mxu0
    %v6051 = vadd.f32 %v5287, %v6050
    %v6052 = vpop.f32.mrb[0].mxu0
    %v6053 = vpop.f32.mrb[0].mxu0
    %6054 = vdwg.mxu0
    %6055 = vmatprep.subr.bf16.mxu0 %v5743
    %6056 = vmatpush1.bf16.msra.mxu0 %v5742
    %6057 = vmatprep.subr.bf16.mxu0 %v5747
    %6058 = vmatpush1.bf16.msra.mxu0 %v5746
    %6059 = vmatprep.subr.bf16.mxu0 %v5751
    %6060 = vmatpush1.bf16.msra.mxu0 %v5750
    %6061 = vmatprep.subr.bf16.mxu0 %v5755
    %6062 = vmatpush1.bf16.msra.mxu0 %v5754
    %6063 = vmatprep.subr.bf16.mxu0 %v5759
    %6064 = vmatpush1.bf16.msra.mxu0 %v5758
    %6065 = vmatprep.subr.bf16.mxu0 %v5763
    %6066 = vmatpush1.bf16.msra.mxu0 %v5762
    %6067 = vmatprep.subr.bf16.mxu0 %v5767
    %6068 = vmatpush1.bf16.msra.mxu0 %v5766
    %6069 = vmatprep.subr.bf16.mxu0 %v5771
    %6070 = vmatpush1.bf16.msra.mxu0 %v5770
    %6071 = vmatprep.subr.bf16.mxu0 %v5775
    %6072 = vmatpush1.bf16.msra.mxu0 %v5774
    %6073 = vmatprep.subr.bf16.mxu0 %v5779
    %6074 = vmatpush1.bf16.msra.mxu0 %v5778
    %6075 = vmatprep.subr.bf16.mxu0 %v5783
    %6076 = vmatpush1.bf16.msra.mxu0 %v5782
    %6077 = vmatprep.subr.bf16.mxu0 %v5787
    %6078 = vmatpush1.bf16.msra.mxu0 %v5786
    %6079 = vmatprep.subr.bf16.mxu0 %v5791
    %6080 = vmatpush1.bf16.msra.mxu0 %v5790
    %6081 = vmatprep.subr.bf16.mxu0 %v5795
    %6082 = vmatpush1.bf16.msra.mxu0 %v5794
    %6083 = vmatprep.subr.bf16.mxu0 %v5799
    %6084 = vmatpush1.bf16.msra.mxu0 %v5798
    %6085 = vmatprep.subr.bf16.mxu0 %v5803
    %6086 = vmatpush1.bf16.msra.mxu0 %v5802
    %6087 = vmatprep.mubr.bf16.mxu0 %v5140
    %6088 = vmatmul.mubr.bf16.gmra.mrb[0].mxu0 %v5139
    %v6089 = vpop.f32.mrb[0].mxu0
    %v6090 = vadd.f32 %v6049, %v6089
    %v6091 = vpop.f32.mrb[0].mxu0
    %v6092 = vadd.f32 %v6051, %v6091
    %v6093 = vpop.f32.mrb[0].mxu0
    %v6094 = vpop.f32.mrb[0].mxu0
    %6095 = vdwg.mxu0
    %v6096 = vmax.f32 %v6008, 0.0
    %v6097 = vmax.f32 %v6010, 0.0
    %v6098 = vmax.f32 %v6090, 0.0
    %v6099 = vmax.f32 %v6092, 0.0
    %v6100 = vpack.c.bf16 %v6096, %v6096
    %v6101 = vpack.c.bf16 %v6097, %v6097
    %v6102 = vpack.c.bf16 %v6098, %v6098
    %v6103 = vpack.c.bf16 %v6099, %v6099
    %v6104 = vld [vmem:[#allocation18] sm:$0xff]
    %v6105 = vld [vmem:[#allocation18 + $0x8] sm:$0xff]
    %v6106 = vld [vmem:[#allocation18 + $0x10] sm:$0xff]
    %v6107 = vld [vmem:[#allocation18 + $0x18] sm:$0xff]
    %v6108 = vld [vmem:[#allocation18 + $0x20] sm:$0xff]
    %v6109 = vld [vmem:[#allocation18 + $0x28] sm:$0xff]
    %v6110 = vld [vmem:[#allocation18 + $0x30] sm:$0xff]
    %v6111 = vld [vmem:[#allocation18 + $0x38] sm:$0xff]
    %v6112 = vld [vmem:[#allocation18 + $0x40] sm:$0xff]
    %v6113 = vld [vmem:[#allocation18 + $0x48] sm:$0xff]
    %v6114 = vld [vmem:[#allocation18 + $0x50] sm:$0xff]
    %v6115 = vld [vmem:[#allocation18 + $0x58] sm:$0xff]
    %v6116 = vld [vmem:[#allocation18 + $0x60] sm:$0xff]
    %v6117 = vld [vmem:[#allocation18 + $0x68] sm:$0xff]
    %v6118 = vld [vmem:[#allocation18 + $0x70] sm:$0xff]
    %v6119 = vld [vmem:[#allocation18 + $0x78] sm:$0xff]
    %v6120 = vld [vmem:[#allocation18 + $0x80] sm:$0xff]
    %v6121 = vld [vmem:[#allocation18 + $0x88] sm:$0xff]
    %v6122 = vld [vmem:[#allocation18 + $0x90] sm:$0xff]
    %v6123 = vld [vmem:[#allocation18 + $0x98] sm:$0xff]
    %v6124 = vld [vmem:[#allocation18 + $0xa0] sm:$0xff]
    %v6125 = vld [vmem:[#allocation18 + $0xa8] sm:$0xff]
    %v6126 = vld [vmem:[#allocation18 + $0xb0] sm:$0xff]
    %v6127 = vld [vmem:[#allocation18 + $0xb8] sm:$0xff]
    %v6128 = vld [vmem:[#allocation18 + $0xc0] sm:$0xff]
    %v6129 = vld [vmem:[#allocation18 + $0xc8] sm:$0xff]
    %v6130 = vld [vmem:[#allocation18 + $0xd0] sm:$0xff]
    %v6131 = vld [vmem:[#allocation18 + $0xd8] sm:$0xff]
    %v6132 = vld [vmem:[#allocation18 + $0xe0] sm:$0xff]
    %v6133 = vld [vmem:[#allocation18 + $0xe8] sm:$0xff]
    %v6134 = vld [vmem:[#allocation18 + $0xf0] sm:$0xff]
    %v6135 = vld [vmem:[#allocation18 + $0xf8] sm:$0xff]
    %v6136 = vld [vmem:[#allocation18 + $0x100] sm:$0xff]
    %v6137 = vld [vmem:[#allocation18 + $0x108] sm:$0xff]
    %v6138 = vld [vmem:[#allocation18 + $0x110] sm:$0xff]
    %v6139 = vld [vmem:[#allocation18 + $0x118] sm:$0xff]
    %v6140 = vld [vmem:[#allocation18 + $0x120] sm:$0xff]
    %v6141 = vld [vmem:[#allocation18 + $0x128] sm:$0xff]
    %v6142 = vld [vmem:[#allocation18 + $0x130] sm:$0xff]
    %v6143 = vld [vmem:[#allocation18 + $0x138] sm:$0xff]
    %v6144 = vld [vmem:[#allocation18 + $0x140] sm:$0xff]
    %v6145 = vld [vmem:[#allocation18 + $0x148] sm:$0xff]
    %v6146 = vld [vmem:[#allocation18 + $0x150] sm:$0xff]
    %v6147 = vld [vmem:[#allocation18 + $0x158] sm:$0xff]
    %v6148 = vld [vmem:[#allocation18 + $0x160] sm:$0xff]
    %v6149 = vld [vmem:[#allocation18 + $0x168] sm:$0xff]
    %v6150 = vld [vmem:[#allocation18 + $0x170] sm:$0xff]
    %v6151 = vld [vmem:[#allocation18 + $0x178] sm:$0xff]
    %v6152 = vld [vmem:[#allocation18 + $0x180] sm:$0xff]
    %v6153 = vld [vmem:[#allocation18 + $0x188] sm:$0xff]
    %v6154 = vld [vmem:[#allocation18 + $0x190] sm:$0xff]
    %v6155 = vld [vmem:[#allocation18 + $0x198] sm:$0xff]
    %v6156 = vld [vmem:[#allocation18 + $0x1a0] sm:$0xff]
    %v6157 = vld [vmem:[#allocation18 + $0x1a8] sm:$0xff]
    %v6158 = vld [vmem:[#allocation18 + $0x1b0] sm:$0xff]
    %v6159 = vld [vmem:[#allocation18 + $0x1b8] sm:$0xff]
    %v6160 = vld [vmem:[#allocation18 + $0x1c0] sm:$0xff]
    %v6161 = vld [vmem:[#allocation18 + $0x1c8] sm:$0xff]
    %v6162 = vld [vmem:[#allocation18 + $0x1d0] sm:$0xff]
    %v6163 = vld [vmem:[#allocation18 + $0x1d8] sm:$0xff]
    %v6164 = vld [vmem:[#allocation18 + $0x1e0] sm:$0xff]
    %v6165 = vld [vmem:[#allocation18 + $0x1e8] sm:$0xff]
    %v6166 = vld [vmem:[#allocation18 + $0x1f0] sm:$0xff]
    %v6167 = vld [vmem:[#allocation18 + $0x1f8] sm:$0xff]
    %s6168 = scalar_lea.vmem %s14, 32
    %v6169 = vld [vmem:[%s6168] ss:$8 sm:$0x3]
    %v6171 = vlaneseq
    %v6172 = vshrl.u32 %v6171, 7
    %v6173 = vsub.s32 0, %v6172
    %v6174 = vrot.slane %v6169, %v6173
    %v6175 = vlaneseq
    %v6176 = vshrl.u32 %v6175, 7
    %v6177 = vsub.s32 1, %v6176
    %v6178 = vrot.slane %v6169, %v6177
    %v6245 = vunpack.c.l.b16 %v6104
    %v6246 = vunpack.c.h.b16 %v6104
    %v6247 = vunpack.c.l.b16 %v6105
    %v6248 = vunpack.c.h.b16 %v6105
    %v6249 = vunpack.c.l.b16 %v6106
    %v6250 = vunpack.c.h.b16 %v6106
    %v6251 = vunpack.c.l.b16 %v6107
    %v6252 = vunpack.c.h.b16 %v6107
    %v6253 = vunpack.c.l.b16 %v6108
    %v6254 = vunpack.c.h.b16 %v6108
    %v6255 = vunpack.c.l.b16 %v6109
    %v6256 = vunpack.c.h.b16 %v6109
    %v6257 = vunpack.c.l.b16 %v6110
    %v6258 = vunpack.c.h.b16 %v6110
    %v6259 = vunpack.c.l.b16 %v6111
    %v6260 = vunpack.c.h.b16 %v6111
    %v6261 = vunpack.c.l.b16 %v6112
    %v6262 = vunpack.c.h.b16 %v6112
    %v6263 = vunpack.c.l.b16 %v6113
    %v6264 = vunpack.c.h.b16 %v6113
    %v6265 = vunpack.c.l.b16 %v6114
    %v6266 = vunpack.c.h.b16 %v6114
    %v6267 = vunpack.c.l.b16 %v6115
    %v6268 = vunpack.c.h.b16 %v6115
    %v6269 = vunpack.c.l.b16 %v6116
    %v6270 = vunpack.c.h.b16 %v6116
    %v6271 = vunpack.c.l.b16 %v6117
    %v6272 = vunpack.c.h.b16 %v6117
    %v6273 = vunpack.c.l.b16 %v6118
    %v6274 = vunpack.c.h.b16 %v6118
    %v6275 = vunpack.c.l.b16 %v6119
    %v6276 = vunpack.c.h.b16 %v6119
    %v6277 = vunpack.c.l.b16 %v6120
    %v6278 = vunpack.c.h.b16 %v6120
    %v6279 = vunpack.c.l.b16 %v6121
    %v6280 = vunpack.c.h.b16 %v6121
    %v6281 = vunpack.c.l.b16 %v6122
    %v6282 = vunpack.c.h.b16 %v6122
    %v6283 = vunpack.c.l.b16 %v6123
    %v6284 = vunpack.c.h.b16 %v6123
    %v6285 = vunpack.c.l.b16 %v6124
    %v6286 = vunpack.c.h.b16 %v6124
    %v6287 = vunpack.c.l.b16 %v6125
    %v6288 = vunpack.c.h.b16 %v6125
    %v6289 = vunpack.c.l.b16 %v6126
    %v6290 = vunpack.c.h.b16 %v6126
    %v6291 = vunpack.c.l.b16 %v6127
    %v6292 = vunpack.c.h.b16 %v6127
    %v6293 = vunpack.c.l.b16 %v6128
    %v6294 = vunpack.c.h.b16 %v6128
    %v6295 = vunpack.c.l.b16 %v6129
    %v6296 = vunpack.c.h.b16 %v6129
    %v6297 = vunpack.c.l.b16 %v6130
    %v6298 = vunpack.c.h.b16 %v6130
    %v6299 = vunpack.c.l.b16 %v6131
    %v6300 = vunpack.c.h.b16 %v6131
    %v6301 = vunpack.c.l.b16 %v6132
    %v6302 = vunpack.c.h.b16 %v6132
    %v6303 = vunpack.c.l.b16 %v6133
    %v6304 = vunpack.c.h.b16 %v6133
    %v6305 = vunpack.c.l.b16 %v6134
    %v6306 = vunpack.c.h.b16 %v6134
    %v6307 = vunpack.c.l.b16 %v6135
    %v6308 = vunpack.c.h.b16 %v6135
    %v6309 = vunpack.c.l.b16 %v6136
    %v6310 = vunpack.c.h.b16 %v6136
    %v6311 = vunpack.c.l.b16 %v6137
    %v6312 = vunpack.c.h.b16 %v6137
    %v6313 = vunpack.c.l.b16 %v6138
    %v6314 = vunpack.c.h.b16 %v6138
    %v6315 = vunpack.c.l.b16 %v6139
    %v6316 = vunpack.c.h.b16 %v6139
    %v6317 = vunpack.c.l.b16 %v6140
    %v6318 = vunpack.c.h.b16 %v6140
    %v6319 = vunpack.c.l.b16 %v6141
    %v6320 = vunpack.c.h.b16 %v6141
    %v6321 = vunpack.c.l.b16 %v6142
    %v6322 = vunpack.c.h.b16 %v6142
    %v6323 = vunpack.c.l.b16 %v6143
    %v6324 = vunpack.c.h.b16 %v6143
    %v6325 = vunpack.c.l.b16 %v6144
    %v6326 = vunpack.c.h.b16 %v6144
    %v6327 = vunpack.c.l.b16 %v6145
    %v6328 = vunpack.c.h.b16 %v6145
    %v6329 = vunpack.c.l.b16 %v6146
    %v6330 = vunpack.c.h.b16 %v6146
    %v6331 = vunpack.c.l.b16 %v6147
    %v6332 = vunpack.c.h.b16 %v6147
    %v6333 = vunpack.c.l.b16 %v6148
    %v6334 = vunpack.c.h.b16 %v6148
    %v6335 = vunpack.c.l.b16 %v6149
    %v6336 = vunpack.c.h.b16 %v6149
    %v6337 = vunpack.c.l.b16 %v6150
    %v6338 = vunpack.c.h.b16 %v6150
    %v6339 = vunpack.c.l.b16 %v6151
    %v6340 = vunpack.c.h.b16 %v6151
    %v6341 = vunpack.c.l.b16 %v6152
    %v6342 = vunpack.c.h.b16 %v6152
    %v6343 = vunpack.c.l.b16 %v6153
    %v6344 = vunpack.c.h.b16 %v6153
    %v6345 = vunpack.c.l.b16 %v6154
    %v6346 = vunpack.c.h.b16 %v6154
    %v6347 = vunpack.c.l.b16 %v6155
    %v6348 = vunpack.c.h.b16 %v6155
    %v6349 = vunpack.c.l.b16 %v6156
    %v6350 = vunpack.c.h.b16 %v6156
    %v6351 = vunpack.c.l.b16 %v6157
    %v6352 = vunpack.c.h.b16 %v6157
    %v6353 = vunpack.c.l.b16 %v6158
    %v6354 = vunpack.c.h.b16 %v6158
    %v6355 = vunpack.c.l.b16 %v6159
    %v6356 = vunpack.c.h.b16 %v6159
    %v6357 = vunpack.c.l.b16 %v6160
    %v6358 = vunpack.c.h.b16 %v6160
    %v6359 = vunpack.c.l.b16 %v6161
    %v6360 = vunpack.c.h.b16 %v6161
    %v6361 = vunpack.c.l.b16 %v6162
    %v6362 = vunpack.c.h.b16 %v6162
    %v6363 = vunpack.c.l.b16 %v6163
    %v6364 = vunpack.c.h.b16 %v6163
    %v6365 = vunpack.c.l.b16 %v6164
    %v6366 = vunpack.c.h.b16 %v6164
    %v6367 = vunpack.c.l.b16 %v6165
    %v6368 = vunpack.c.h.b16 %v6165
    %v6369 = vunpack.c.l.b16 %v6166
    %v6370 = vunpack.c.h.b16 %v6166
    %v6371 = vunpack.c.l.b16 %v6167
    %v6372 = vunpack.c.h.b16 %v6167
    %v6373 = vpack.c.b16 %v6247, %v6245
    %v6374 = vpack.c.b16 %v6248, %v6246
    %v6375 = vpack.c.b16 %v6251, %v6249
    %v6376 = vpack.c.b16 %v6252, %v6250
    %v6377 = vpack.c.b16 %v6255, %v6253
    %v6378 = vpack.c.b16 %v6256, %v6254
    %v6379 = vpack.c.b16 %v6259, %v6257
    %v6380 = vpack.c.b16 %v6260, %v6258
    %v6381 = vpack.c.b16 %v6263, %v6261
    %v6382 = vpack.c.b16 %v6264, %v6262
    %v6383 = vpack.c.b16 %v6267, %v6265
    %v6384 = vpack.c.b16 %v6268, %v6266
    %v6385 = vpack.c.b16 %v6271, %v6269
    %v6386 = vpack.c.b16 %v6272, %v6270
    %v6387 = vpack.c.b16 %v6275, %v6273
    %v6388 = vpack.c.b16 %v6276, %v6274
    %v6389 = vpack.c.b16 %v6279, %v6277
    %v6390 = vpack.c.b16 %v6280, %v6278
    %v6391 = vpack.c.b16 %v6283, %v6281
    %v6392 = vpack.c.b16 %v6284, %v6282
    %v6393 = vpack.c.b16 %v6287, %v6285
    %v6394 = vpack.c.b16 %v6288, %v6286
    %v6395 = vpack.c.b16 %v6291, %v6289
    %v6396 = vpack.c.b16 %v6292, %v6290
    %v6397 = vpack.c.b16 %v6295, %v6293
    %v6398 = vpack.c.b16 %v6296, %v6294
    %v6399 = vpack.c.b16 %v6299, %v6297
    %v6400 = vpack.c.b16 %v6300, %v6298
    %v6401 = vpack.c.b16 %v6303, %v6301
    %v6402 = vpack.c.b16 %v6304, %v6302
    %v6403 = vpack.c.b16 %v6307, %v6305
    %v6404 = vpack.c.b16 %v6308, %v6306
    %v6405 = vpack.c.b16 %v6311, %v6309
    %v6406 = vpack.c.b16 %v6312, %v6310
    %v6407 = vpack.c.b16 %v6315, %v6313
    %v6408 = vpack.c.b16 %v6316, %v6314
    %v6409 = vpack.c.b16 %v6319, %v6317
    %v6410 = vpack.c.b16 %v6320, %v6318
    %v6411 = vpack.c.b16 %v6323, %v6321
    %v6412 = vpack.c.b16 %v6324, %v6322
    %v6413 = vpack.c.b16 %v6327, %v6325
    %v6414 = vpack.c.b16 %v6328, %v6326
    %v6415 = vpack.c.b16 %v6331, %v6329
    %v6416 = vpack.c.b16 %v6332, %v6330
    %v6417 = vpack.c.b16 %v6335, %v6333
    %v6418 = vpack.c.b16 %v6336, %v6334
    %v6419 = vpack.c.b16 %v6339, %v6337
    %v6420 = vpack.c.b16 %v6340, %v6338
    %v6421 = vpack.c.b16 %v6343, %v6341
    %v6422 = vpack.c.b16 %v6344, %v6342
    %v6423 = vpack.c.b16 %v6347, %v6345
    %v6424 = vpack.c.b16 %v6348, %v6346
    %v6425 = vpack.c.b16 %v6351, %v6349
    %v6426 = vpack.c.b16 %v6352, %v6350
    %v6427 = vpack.c.b16 %v6355, %v6353
    %v6428 = vpack.c.b16 %v6356, %v6354
    %v6429 = vpack.c.b16 %v6359, %v6357
    %v6430 = vpack.c.b16 %v6360, %v6358
    %v6431 = vpack.c.b16 %v6363, %v6361
    %v6432 = vpack.c.b16 %v6364, %v6362
    %v6433 = vpack.c.b16 %v6367, %v6365
    %v6434 = vpack.c.b16 %v6368, %v6366
    %v6435 = vpack.c.b16 %v6371, %v6369
    %v6436 = vpack.c.b16 %v6372, %v6370
    %6501 = vmatprep.subr.bf16.mxu0 %v6374
    %6502 = vmatpush1.bf16.msra.mxu0 %v6373
    %6503 = vmatprep.subr.bf16.mxu0 %v6376
    %6504 = vmatpush1.bf16.msra.mxu0 %v6375
    %6505 = vmatprep.subr.bf16.mxu0 %v6378
    %6506 = vmatpush1.bf16.msra.mxu0 %v6377
    %6507 = vmatprep.subr.bf16.mxu0 %v6380
    %6508 = vmatpush1.bf16.msra.mxu0 %v6379
    %6509 = vmatprep.subr.bf16.mxu0 %v6382
    %6510 = vmatpush1.bf16.msra.mxu0 %v6381
    %6511 = vmatprep.subr.bf16.mxu0 %v6384
    %6512 = vmatpush1.bf16.msra.mxu0 %v6383
    %6513 = vmatprep.subr.bf16.mxu0 %v6386
    %6514 = vmatpush1.bf16.msra.mxu0 %v6385
    %6515 = vmatprep.subr.bf16.mxu0 %v6388
    %6516 = vmatpush1.bf16.msra.mxu0 %v6387
    %6517 = vmatprep.subr.bf16.mxu0 %v6390
    %6518 = vmatpush1.bf16.msra.mxu0 %v6389
    %6519 = vmatprep.subr.bf16.mxu0 %v6392
    %6520 = vmatpush1.bf16.msra.mxu0 %v6391
    %6521 = vmatprep.subr.bf16.mxu0 %v6394
    %6522 = vmatpush1.bf16.msra.mxu0 %v6393
    %6523 = vmatprep.subr.bf16.mxu0 %v6396
    %6524 = vmatpush1.bf16.msra.mxu0 %v6395
    %6525 = vmatprep.subr.bf16.mxu0 %v6398
    %6526 = vmatpush1.bf16.msra.mxu0 %v6397
    %6527 = vmatprep.subr.bf16.mxu0 %v6400
    %6528 = vmatpush1.bf16.msra.mxu0 %v6399
    %6529 = vmatprep.subr.bf16.mxu0 %v6402
    %6530 = vmatpush1.bf16.msra.mxu0 %v6401
    %6531 = vmatprep.subr.bf16.mxu0 %v6404
    %6532 = vmatpush1.bf16.msra.mxu0 %v6403
    %6533 = vmatprep.mubr.bf16.mxu0 %v6101
    %6534 = vmatmul.mubr.bf16.gmra.mrb[0].mxu0 %v6100
    %v6535 = vpop.f32.mrb[0].mxu0
    %v6536 = vadd.f32 %v6174, %v6535
    %v6537 = vpop.f32.mrb[0].mxu0
    %v6538 = vadd.f32 %v6178, %v6537
    %v6539 = vpop.f32.mrb[0].mxu0
    %v6540 = vpop.f32.mrb[0].mxu0
    %6541 = vdwg.mxu0
    %6542 = vmatprep.subr.bf16.mxu0 %v6406
    %6543 = vmatpush1.bf16.msra.mxu0 %v6405
    %6544 = vmatprep.subr.bf16.mxu0 %v6408
    %6545 = vmatpush1.bf16.msra.mxu0 %v6407
    %6546 = vmatprep.subr.bf16.mxu0 %v6410
    %6547 = vmatpush1.bf16.msra.mxu0 %v6409
    %6548 = vmatprep.subr.bf16.mxu0 %v6412
    %6549 = vmatpush1.bf16.msra.mxu0 %v6411
    %6550 = vmatprep.subr.bf16.mxu0 %v6414
    %6551 = vmatpush1.bf16.msra.mxu0 %v6413
    %6552 = vmatprep.subr.bf16.mxu0 %v6416
    %6553 = vmatpush1.bf16.msra.mxu0 %v6415
    %6554 = vmatprep.subr.bf16.mxu0 %v6418
    %6555 = vmatpush1.bf16.msra.mxu0 %v6417
    %6556 = vmatprep.subr.bf16.mxu0 %v6420
    %6557 = vmatpush1.bf16.msra.mxu0 %v6419
    %6558 = vmatprep.subr.bf16.mxu0 %v6422
    %6559 = vmatpush1.bf16.msra.mxu0 %v6421
    %6560 = vmatprep.subr.bf16.mxu0 %v6424
    %6561 = vmatpush1.bf16.msra.mxu0 %v6423
    %6562 = vmatprep.subr.bf16.mxu0 %v6426
    %6563 = vmatpush1.bf16.msra.mxu0 %v6425
    %6564 = vmatprep.subr.bf16.mxu0 %v6428
    %6565 = vmatpush1.bf16.msra.mxu0 %v6427
    %6566 = vmatprep.subr.bf16.mxu0 %v6430
    %6567 = vmatpush1.bf16.msra.mxu0 %v6429
    %6568 = vmatprep.subr.bf16.mxu0 %v6432
    %6569 = vmatpush1.bf16.msra.mxu0 %v6431
    %6570 = vmatprep.subr.bf16.mxu0 %v6434
    %6571 = vmatpush1.bf16.msra.mxu0 %v6433
    %6572 = vmatprep.subr.bf16.mxu0 %v6436
    %6573 = vmatpush1.bf16.msra.mxu0 %v6435
    %6574 = vmatprep.mubr.bf16.mxu0 %v6103
    %6575 = vmatmul.mubr.bf16.gmra.mrb[0].mxu0 %v6102
    %v6576 = vpop.f32.mrb[0].mxu0
    %v6577 = vadd.f32 %v6536, %v6576
    %v6578 = vpop.f32.mrb[0].mxu0
    %v6579 = vadd.f32 %v6538, %v6578
    %v6580 = vpop.f32.mrb[0].mxu0
    %v6581 = vpop.f32.mrb[0].mxu0
    %6582 = vdwg.mxu0
    %v6583 = vxor.u32 %v6577, 2147483648
    %v6584 = vxor.u32 %v6579, 2147483648
    %v6585 = vmul.f32 %v6583, 1.442695
    %v6586 = vpow.pop %v6585
    %v6587 = vmul.f32 %v6584, 1.442695
    %v6588 = vpow.pop %v6587
    %v6589 = vadd.f32 %v6586, 1.0
    %v6590 = vadd.f32 %v6588, 1.0
    %v6591 = vrcp.pop %v6589
    %v6592 = vmul.f32 1.0, %v6591
    %v6593 = vrcp.pop %v6590
    %v6594 = vmul.f32 1.0, %v6593
    %6595 = vst [vmem:[%s15] sm:$0xff] %v6592
    %6596 = vst [vmem:[%s15 + $0x8] sm:$0xff] %v6594
    // Predicated region
    $region106: #{cvae_forward.1} parent=1 // pred_check
      _
    $region107: #{cvae_forward.1} parent=1 // pred_check_branch
      %6598 = sbr.rel (0) target = $region109
    $region108: #{cvae_forward.1} parent=1 // pred_region
      _
    $region109: #{cvae_forward.1} parent=1 // pred_fallthru
      _
    // Predicated region
    $region110: #{cvae_forward.1} parent=1 // pred_check
      _
    $region111: #{cvae_forward.1} parent=1 // pred_check_branch
      %6600 = sbr.rel (0) target = $region113
    $region112: #{cvae_forward.1} parent=1 // pred_region
      _
    $region113: #{cvae_forward.1} parent=1 // pred_fallthru
      _
    // Predicated region
    $region114: #{cvae_forward.1} parent=1 // pred_check
      _
    $region115: #{cvae_forward.1} parent=1 // pred_check_branch
      %6602 = sbr.rel (0) target = $region117
    $region116: #{cvae_forward.1} parent=1 // pred_region
      _
    $region117: #{cvae_forward.1} parent=1 // pred_fallthru
      _
    // Predicated region
    $region118: #{cvae_forward.1} parent=1 // pred_check
      _
    $region119: #{cvae_forward.1} parent=1 // pred_check_branch
      %6604 = sbr.rel (0) target = $region121
    $region120: #{cvae_forward.1} parent=1 // pred_region
      _
    $region121: #{cvae_forward.1} parent=1 // pred_fallthru
      _
    // Predicated region
    $region122: #{cvae_forward.1} parent=1 // pred_check
      _
    $region123: #{cvae_forward.1} parent=1 // pred_check_branch
      %6606 = sbr.rel (0) target = $region125
    $region124: #{cvae_forward.1} parent=1 // pred_region
      _
    $region125: #{cvae_forward.1} parent=1 // pred_fallthru
      _
    // Predicated region
    $region126: #{cvae_forward.1} parent=1 // pred_check
      _
    $region127: #{cvae_forward.1} parent=1 // pred_check_branch
      %6608 = sbr.rel (0) target = $region129
    $region128: #{cvae_forward.1} parent=1 // pred_region
      _
    $region129: #{cvae_forward.1} parent=1 // pred_fallthru
      _
    %6609 = vsyncpa [#allocation3], 1
    %6610 = vsyncpa [#allocation5], 1
    %6611 = vsyncpa [#allocation8], 1
    %6612 = vsyncpa [#allocation11], 1
    %6613 = vsyncpa [#allocation14], 1
    %6614 = vsyncpa [#allocation17], 1

</llo_original>
